<compile_context>
chip_gen: v5e
topology: v5e:2x2
jax: 0.10.0
libtpu: 0.0.40
codegen_flags: <defaults>
</compile_context>

<pallas_src>
import jax
import jax.numpy as jnp
import numpy as np
from jax.experimental import pallas as pl
from jax.experimental.pallas import tpu as pltpu


# ----------------------------- Pallas kernels ------------------------------


def _conv1_kernel(x_ref, w_ref, b_ref, o_ref):
    """strided_conv_1 (4x4, stride 2, pad 1) for one image.

    x_ref : (1, Hs, Ws, 4*Cin) f32  space-to-depth of the zero-padded input
    w_ref : (2, 2, 4*Cin, C)   f32  per-tap weight matrices
    b_ref : (1, C)             f32
    o_ref : (1, Ho+2, Wo+2, C) bf16 conv1 output written into the interior,
                                    zero border == padding for conv2
    """
    kin = x_ref.shape[-1]
    _, hop, wop, c = o_ref.shape
    ho, wo = hop - 2, wop - 2
    m = ho * wo

    acc = jnp.zeros((m, c), jnp.float32)
    for a in range(2):
        for b in range(2):
            slab = x_ref[0, a:a + ho, b:b + wo, :].reshape(m, kin)
            acc = acc + jnp.dot(slab, w_ref[a, b],
                                preferred_element_type=jnp.float32)
    acc = acc + b_ref[...]                                  # bias once, f32

    o_ref[...] = jnp.zeros(o_ref.shape, o_ref.dtype)        # zero border
    o_ref[0, 1:1 + ho, 1:1 + wo, :] = acc.reshape(ho, wo, c).astype(o_ref.dtype)


def _residual_block_kernel(x_ref, w2_ref, b2_ref, w3_ref, b3_ref, w4_ref,
                           b4_ref, o_ref, xpad_ref):
    """Fused conv2 + ReLU + conv3 + add + ReLU + conv4(1x1->1ch) + broadcast
    add, for one image.

    x_ref   : (1, Hs, Ws, 4*C) bf16  space-to-depth of zero-padded conv1 out
    w2_ref  : (2, 2, 4*C, C)   bf16  strided_conv_2 per-tap matrices
    w3_ref  : (3, 3, C, C)     bf16  residual_conv_1 per-tap matrices
    w4_ref  : (1, C)           f32   residual_conv_2 (1x1, single channel)
    b*_ref  : f32 biases
    o_ref   : (1, Ho*Wo, C)    f32   lane-dense output slab
    xpad_ref: VMEM (Ho+2, Wo+2, C) bf16 scratch ("same" padding for conv3)
    """
    _, m, c = o_ref.shape
    hop, wop, _ = xpad_ref.shape
    ho, wo = hop - 2, wop - 2
    kin = x_ref.shape[-1]

    # ---- strided_conv_2: 4x4 / stride 2 == 2x2 / stride 1 over s2d layout --
    acc2 = jnp.zeros((m, c), jnp.float32)
    for a in range(2):
        for b in range(2):
            slab = x_ref[0, a:a + ho, b:b + wo, :].reshape(m, kin)
            acc2 = acc2 + jnp.dot(slab, w2_ref[a, b],
                                  preferred_element_type=jnp.float32)
    x2 = jnp.maximum(acc2 + b2_ref[...], 0.0)               # (m, c) f32, ReLU

    # ---- residual_conv_1 (3x3, pad 1) + residual + ReLU --------------------
    xpad_ref[...] = jnp.zeros(xpad_ref.shape, xpad_ref.dtype)
    xpad_ref[1:1 + ho, 1:1 + wo, :] = x2.reshape(ho, wo, c).astype(xpad_ref.dtype)
    acc3 = jnp.zeros((m, c), jnp.float32)
    for di in range(3):
        for dj in range(3):
            slab = xpad_ref[di:di + ho, dj:dj + wo, :].reshape(m, c)
            acc3 = acc3 + jnp.dot(slab, w3_ref[di, dj],
                                  preferred_element_type=jnp.float32)
    x3 = jnp.maximum(acc3 + b3_ref[...] + x2, 0.0)          # (m, c) f32

    # ---- residual_conv_2 (1x1, 1 output channel) + broadcast residual ------
    # VPU multiply + XLU lane reduction; avoids a degenerate N=1 MXU matmul.
    s = jnp.sum(x3 * w4_ref[...], axis=-1, keepdims=True) + b4_ref[...]  # (m,1)
    y = x3 + s
    o_ref[0] = y.astype(o_ref.dtype)


# --------------------------- layout helpers (XLA) ---------------------------


def _space_to_depth2(x_pad):
    """(N, H, W, C) with even H, W -> (N, H//2, W//2, 4*C).

    Phase order of the new channel axis is (p, q, c) with c fastest; this
    matches `_pack_stride2_weights`.  Pure layout plumbing: 1x data traffic.
    """
    n, h, w, c = x_pad.shape
    assert h % 2 == 0 and w % 2 == 0
    x = x_pad.reshape(n, h // 2, 2, w // 2, 2, c)
    x = jnp.transpose(x, (0, 1, 3, 2, 4, 5))
    return x.reshape(n, h // 2, w // 2, 4 * c)


def _pack_stride2_weights(w):
    """(Cout, Cin, 4, 4) -> (2, 2, 4*Cin, Cout).

    Tap (a, b) of the equivalent 2x2 stride-1 conv on the space-to-depth
    input; row index of each matrix is (p*2 + q)*Cin + ci.
    """
    cout, cin, kh, kw = w.shape
    assert kh == 4 and kw == 4
    w_r = w.reshape(cout, cin, 2, 2, 2, 2)          # (co, ci, a, p, b, q)
    w_r = jnp.transpose(w_r, (2, 4, 3, 5, 1, 0))    # (a, b, p, q, ci, co)
    return w_r.reshape(2, 2, 4 * cin, cout)


# ----------------------------- pallas_call wrappers -------------------------

_VMEM_LIMIT = 32 * 1024 * 1024  # explicit, safe on v5e / v6e / v7x


def _conv1_call(x_s2d, w1_taps, b1, ho, wo, c):
    n, hs, ws, kin = x_s2d.shape
    grid_spec = pltpu.PrefetchScalarGridSpec(
        num_scalar_prefetch=0,
        grid=(n,),
        in_specs=[
            pl.BlockSpec((1, hs, ws, kin), lambda i: (i, 0, 0, 0)),
            pl.BlockSpec((2, 2, kin, c), lambda i: (0, 0, 0, 0)),
            pl.BlockSpec((1, c), lambda i: (0, 0)),
        ],
        out_specs=pl.BlockSpec((1, ho + 2, wo + 2, c),
                               lambda i: (i, 0, 0, 0)),
    )
    return pl.pallas_call(
        _conv1_kernel,
        out_shape=jax.ShapeDtypeStruct((n, ho + 2, wo + 2, c), jnp.bfloat16),
        grid_spec=grid_spec,
        compiler_params=pltpu.CompilerParams(
            dimension_semantics=("parallel",),
            vmem_limit_bytes=_VMEM_LIMIT),
    )(x_s2d, w1_taps, b1.reshape(1, c))


def _residual_block_call(x_s2d, w2_taps, b2, w3_taps, b3, w4_row, b4, ho, wo, c):
    n, hs, ws, kin = x_s2d.shape
    m = ho * wo
    grid_spec = pltpu.PrefetchScalarGridSpec(
        num_scalar_prefetch=0,
        grid=(n,),
        in_specs=[
            pl.BlockSpec((1, hs, ws, kin), lambda i: (i, 0, 0, 0)),
            pl.BlockSpec((2, 2, kin, c), lambda i: (0, 0, 0, 0)),
            pl.BlockSpec((1, c), lambda i: (0, 0)),
            pl.BlockSpec((3, 3, c, c), lambda i: (0, 0, 0, 0)),
            pl.BlockSpec((1, c), lambda i: (0, 0)),
            pl.BlockSpec((1, c), lambda i: (0, 0)),
            pl.BlockSpec((1, 1), lambda i: (0, 0)),
        ],
        out_specs=pl.BlockSpec((1, m, c), lambda i: (i, 0, 0)),
        scratch_shapes=[pltpu.VMEM((ho + 2, wo + 2, c), jnp.bfloat16)],
    )
    return pl.pallas_call(
        _residual_block_kernel,
        out_shape=jax.ShapeDtypeStruct((n, m, c), jnp.float32),
        grid_spec=grid_spec,
        compiler_params=pltpu.CompilerParams(
            dimension_semantics=("parallel",),
            vmem_limit_bytes=_VMEM_LIMIT),
    )(x_s2d, w2_taps, b2.reshape(1, c), w3_taps, b3.reshape(1, c),
      w4_row, b4.reshape(1, 1))


# ------------------------------ forward pass --------------------------------


@jax.jit
def encoder_forward(x_nchw, params):
    (w1, b1), (w2, b2), (w3, b3), (w4, b4) = params
    c = w1.shape[0]                      # hidden_dim
    assert w4.shape[0] == 1              # output_dim == 1 (broadcast add)
    n, _, h, w = x_nchw.shape

    ho1, wo1 = (h + 2 - 4) // 2 + 1, (w + 2 - 4) // 2 + 1    # conv1 out
    ho2, wo2 = (ho1 + 2 - 4) // 2 + 1, (wo1 + 2 - 4) // 2 + 1  # conv2 out

    # ---- strided_conv_1 ----------------------------------------------------
    x = jnp.transpose(x_nchw, (0, 2, 3, 1))                  # NCHW -> NHWC
    x = jnp.pad(x, ((0, 0), (1, 1), (1, 1), (0, 0)))
    x_s2d = _space_to_depth2(x)                              # (N, ., ., 4*Cin) f32
    w1_taps = _pack_stride2_weights(w1)                      # tiny, stay f32
    x1p = _conv1_call(x_s2d, w1_taps, b1, ho1, wo1, c)       # bf16, zero-padded

    # ---- fused conv2 + ReLU + conv3 + add + ReLU + conv4 + broadcast add ---
    x1_s2d = _space_to_depth2(x1p)                           # bf16 (N, ., ., 4*C)
    w2_taps = _pack_stride2_weights(w2).astype(jnp.bfloat16)
    w3_taps = jnp.transpose(w3, (2, 3, 1, 0)).astype(jnp.bfloat16)  # (3,3,C,C)
    w4_row = w4.reshape(1, c)                                # f32 (1, C)
    y = _residual_block_call(x1_s2d, w2_taps, b2, w3_taps, b3, w4_row, b4,
                             ho2, wo2, c)                    # (N, Ho*Wo, C) f32
    y = y.reshape(n, ho2, wo2, c)
    return jnp.transpose(y, (0, 3, 1, 2))                    # NHWC -> NCHW


# ------------------------------ params / reference --------------------------


def init_params(key, input_dim, hidden_dim, output_dim, kernel_size=(4, 4, 3, 1)):
    k1, k2, k3, k4 = kernel_size
    shapes = [
        (hidden_dim, input_dim, k1, k1),   # strided_conv_1
        (hidden_dim, hidden_dim, k2, k2),  # strided_conv_2
        (hidden_dim, hidden_dim, k3, k3),  # residual_conv_1
        (output_dim, hidden_dim, k4, k4),  # residual_conv_2
    ]
    params = []
    for i, s in enumerate(shapes):
        wk, bk = jax.random.split(jax.random.fold_in(key, i))
        fan_in = s[1] * s[2] * s[3]
        bound = 1.0 / (fan_in ** 0.5)
        w = jax.random.uniform(wk, s, jnp.float32, -bound, bound)
        b = jax.random.uniform(bk, (s[0],), jnp.float32, -bound, bound)
        params.append((w, b))
    return params


def _ref_conv(x, w, b, stride, pad):
    out = jax.lax.conv_general_dilated(
        x, w, window_strides=(stride, stride),
        padding=[(pad, pad), (pad, pad)],
        dimension_numbers=("NCHW", "OIHW", "NCHW"))
    return out + b.reshape(1, -1, 1, 1)


def ref_forward(x, params, stride=2):
    (w1, b1), (w2, b2), (w3, b3), (w4, b4) = params
    x = _ref_conv(x, w1, b1, stride, 1)
    x = _ref_conv(x, w2, b2, stride, 1)
    x = jax.nn.relu(x)
    y = _ref_conv(x, w3, b3, 1, 1)
    y = y + x
    x = jax.nn.relu(y)
    y = _ref_conv(x, w4, b4, 1, 0)
    y = y + x
    return y


# --------------------------------- main --------------------------------------

if __name__ == "__main__":
    # Shapes from the PyTorch module globals: input_dim=1, hidden_dim=128,
    # output_dim=1; small batch/spatial for the benchmark.
    batch, input_dim, hidden_dim, output_dim, spatial = 2, 1, 128, 1, 16

    key = jax.random.PRNGKey(0)
    xk, pk = jax.random.split(key)
    x = jax.random.normal(xk, (batch, input_dim, spatial, spatial), jnp.float32)
    params = init_params(pk, input_dim, hidden_dim, output_dim)

    out = jax.block_until_ready(encoder_forward(x, params))

    ref = jax.block_until_ready(ref_forward(x, params))
    assert out.shape == ref.shape == (batch, hidden_dim, spatial // 4, spatial // 4)
    # bf16 MXU operands with f32 accumulation: well within tolerance.
    np.testing.assert_allclose(np.asarray(out), np.asarray(ref),
                               rtol=5e-2, atol=5e-2)

    print("KERNEL_OK")
</pallas_src>

<mosaic_0001>
module attributes {stable_mosaic.version = 11 : i64} {
  func.func @_conv1_kernel(%arg0: i32, %arg1: memref<1x9x9x4xf32, #tpu.memory_space<vmem>>, %arg2: memref<2x2x4x128xf32, #tpu.memory_space<vmem>>, %arg3: memref<1x128xf32, #tpu.memory_space<vmem>>, %arg4: memref<1x10x10x128xbf16, #tpu.memory_space<vmem>>) attributes {dimension_semantics = [#tpu.dimension_semantics<parallel>], iteration_bounds = array<i64: 2>, scalar_prefetch = 0 : i64, scratch_operands = 0 : i64, tpu.core_type = #tpu.core_type<tc>, window_params = [{transform_indices = @transform_0, window_bounds = array<i64: 1, 9, 9, 4>}, {pipeline_mode = #tpu.pipeline_mode<synchronous>, transform_indices = @transform_1, window_bounds = array<i64: 2, 2, 4, 128>}, {pipeline_mode = #tpu.pipeline_mode<synchronous>, transform_indices = @transform_2, window_bounds = array<i64: 1, 128>}, {transform_indices = @transform_3, window_bounds = array<i64: 1, 10, 10, 128>}]} {
    %cst = arith.constant 0.000000e+00 : f32
    %0 = vector.broadcast %cst : f32 to vector<64x128xf32>
    %c0 = arith.constant 0 : index
    %c0_0 = arith.constant 0 : index
    %c0_1 = arith.constant 0 : index
    %c0_2 = arith.constant 0 : index
    %1 = vector.load %arg1[%c0, %c0_0, %c0_1, %c0_2] : memref<1x9x9x4xf32, #tpu.memory_space<vmem>>, vector<1x8x8x4xf32>
    %2 = vector.shape_cast %1 : vector<1x8x8x4xf32> to vector<8x8x4xf32>
    %3 = vector.shape_cast %2 : vector<8x8x4xf32> to vector<64x4xf32>
    %c0_3 = arith.constant 0 : index
    %c0_4 = arith.constant 0 : index
    %c0_5 = arith.constant 0 : index
    %c0_6 = arith.constant 0 : index
    %4 = vector.load %arg2[%c0_3, %c0_4, %c0_5, %c0_6] : memref<2x2x4x128xf32, #tpu.memory_space<vmem>>, vector<1x1x4x128xf32>
    %5 = vector.shape_cast %4 : vector<1x1x4x128xf32> to vector<4x128xf32>
    %cst_7 = arith.constant dense<0.000000e+00> : vector<64x128xf32>
    %6 = tpu.matmul %3, %5, %cst_7 {dimension_numbers = #tpu.dot_dimension_numbers<[1], [0], [0], [1], [0, 0, 1, 1], [], []>} : vector<64x4xf32>, vector<4x128xf32>, vector<64x128xf32> -> vector<64x128xf32>
    %7 = arith.addf %0, %6 : vector<64x128xf32>
    %c0_8 = arith.constant 0 : index
    %c0_9 = arith.constant 0 : index
    %c1 = arith.constant 1 : index
    %c0_10 = arith.constant 0 : index
    %8 = vector.load %arg1[%c0_8, %c0_9, %c1, %c0_10] : memref<1x9x9x4xf32, #tpu.memory_space<vmem>>, vector<1x8x8x4xf32>
    %9 = vector.shape_cast %8 : vector<1x8x8x4xf32> to vector<8x8x4xf32>
    %10 = vector.shape_cast %9 : vector<8x8x4xf32> to vector<64x4xf32>
    %c0_11 = arith.constant 0 : index
    %c1_12 = arith.constant 1 : index
    %c0_13 = arith.constant 0 : index
    %c0_14 = arith.constant 0 : index
    %11 = vector.load %arg2[%c0_11, %c1_12, %c0_13, %c0_14] : memref<2x2x4x128xf32, #tpu.memory_space<vmem>>, vector<1x1x4x128xf32>
    %12 = vector.shape_cast %11 : vector<1x1x4x128xf32> to vector<4x128xf32>
    %cst_15 = arith.constant dense<0.000000e+00> : vector<64x128xf32>
    %13 = tpu.matmul %10, %12, %cst_15 {dimension_numbers = #tpu.dot_dimension_numbers<[1], [0], [0], [1], [0, 0, 1, 1], [], []>} : vector<64x4xf32>, vector<4x128xf32>, vector<64x128xf32> -> vector<64x128xf32>
    %14 = arith.addf %7, %13 : vector<64x128xf32>
    %c0_16 = arith.constant 0 : index
    %c1_17 = arith.constant 1 : index
    %c0_18 = arith.constant 0 : index
    %c0_19 = arith.constant 0 : index
    %15 = vector.load %arg1[%c0_16, %c1_17, %c0_18, %c0_19] : memref<1x9x9x4xf32, #tpu.memory_space<vmem>>, vector<1x8x8x4xf32>
    %16 = vector.shape_cast %15 : vector<1x8x8x4xf32> to vector<8x8x4xf32>
    %17 = vector.shape_cast %16 : vector<8x8x4xf32> to vector<64x4xf32>
    %c1_20 = arith.constant 1 : index
    %c0_21 = arith.constant 0 : index
    %c0_22 = arith.constant 0 : index
    %c0_23 = arith.constant 0 : index
    %18 = vector.load %arg2[%c1_20, %c0_21, %c0_22, %c0_23] : memref<2x2x4x128xf32, #tpu.memory_space<vmem>>, vector<1x1x4x128xf32>
    %19 = vector.shape_cast %18 : vector<1x1x4x128xf32> to vector<4x128xf32>
    %cst_24 = arith.constant dense<0.000000e+00> : vector<64x128xf32>
    %20 = tpu.matmul %17, %19, %cst_24 {dimension_numbers = #tpu.dot_dimension_numbers<[1], [0], [0], [1], [0, 0, 1, 1], [], []>} : vector<64x4xf32>, vector<4x128xf32>, vector<64x128xf32> -> vector<64x128xf32>
    %21 = arith.addf %14, %20 : vector<64x128xf32>
    %c0_25 = arith.constant 0 : index
    %c1_26 = arith.constant 1 : index
    %c1_27 = arith.constant 1 : index
    %c0_28 = arith.constant 0 : index
    %22 = vector.load %arg1[%c0_25, %c1_26, %c1_27, %c0_28] : memref<1x9x9x4xf32, #tpu.memory_space<vmem>>, vector<1x8x8x4xf32>
    %23 = vector.shape_cast %22 : vector<1x8x8x4xf32> to vector<8x8x4xf32>
    %24 = vector.shape_cast %23 : vector<8x8x4xf32> to vector<64x4xf32>
    %c1_29 = arith.constant 1 : index
    %c1_30 = arith.constant 1 : index
    %c0_31 = arith.constant 0 : index
    %c0_32 = arith.constant 0 : index
    %25 = vector.load %arg2[%c1_29, %c1_30, %c0_31, %c0_32] : memref<2x2x4x128xf32, #tpu.memory_space<vmem>>, vector<1x1x4x128xf32>
    %26 = vector.shape_cast %25 : vector<1x1x4x128xf32> to vector<4x128xf32>
    %cst_33 = arith.constant dense<0.000000e+00> : vector<64x128xf32>
    %27 = tpu.matmul %24, %26, %cst_33 {dimension_numbers = #tpu.dot_dimension_numbers<[1], [0], [0], [1], [0, 0, 1, 1], [], []>} : vector<64x4xf32>, vector<4x128xf32>, vector<64x128xf32> -> vector<64x128xf32>
    %28 = arith.addf %21, %27 : vector<64x128xf32>
    %c0_34 = arith.constant 0 : index
    %c0_35 = arith.constant 0 : index
    %29 = vector.load %arg3[%c0_34, %c0_35] : memref<1x128xf32, #tpu.memory_space<vmem>>, vector<1x128xf32>
    %30 = vector.broadcast %29 : vector<1x128xf32> to vector<64x128xf32>
    %31 = arith.addf %28, %30 : vector<64x128xf32>
    %cst_36 = arith.constant 0.000000e+00 : bf16
    %32 = vector.broadcast %cst_36 : bf16 to vector<1x10x10x128xbf16>
    %c0_37 = arith.constant 0 : index
    %c0_38 = arith.constant 0 : index
    %c0_39 = arith.constant 0 : index
    %c0_40 = arith.constant 0 : index
    %33 = vector.load %arg4[%c0_37, %c0_38, %c0_39, %c0_40] : memref<1x10x10x128xbf16, #tpu.memory_space<vmem>>, vector<1x10x10x128xbf16>
    tpu.vector_store %arg4[%c0_37, %c0_38, %c0_39, %c0_40], %32 {strides = array<i32>} : memref<1x10x10x128xbf16, #tpu.memory_space<vmem>>, vector<1x10x10x128xbf16>,
    %34 = vector.shape_cast %31 : vector<64x128xf32> to vector<8x8x128xf32>
    %35 = arith.truncf %34 : vector<8x8x128xf32> to vector<8x8x128xbf16>
    %c0_41 = arith.constant 0 : index
    %c1_42 = arith.constant 1 : index
    %c1_43 = arith.constant 1 : index
    %c0_44 = arith.constant 0 : index
    %36 = vector.load %arg4[%c0_41, %c1_42, %c1_43, %c0_44] : memref<1x10x10x128xbf16, #tpu.memory_space<vmem>>, vector<1x8x8x128xbf16>
    %37 = vector.shape_cast %36 : vector<1x8x8x128xbf16> to vector<8x8x128xbf16>
    %38 = vector.shape_cast %35 : vector<8x8x128xbf16> to vector<1x8x8x128xbf16>
    tpu.vector_store %arg4[%c0_41, %c1_42, %c1_43, %c0_44], %38 {strides = array<i32>} : memref<1x10x10x128xbf16, #tpu.memory_space<vmem>>, vector<1x8x8x128xbf16>,
    return
  }
  func.func @transform_0(%arg0: i32) -> (i32, i32, i32, i32) {
    %c0_i32 = arith.constant 0 : i32
    %c0_i32_0 = arith.constant 0 : i32
    %c0_i32_1 = arith.constant 0 : i32
    %c0_i32_2 = arith.constant 0 : i32
    return %arg0, %c0_i32, %c0_i32_0, %c0_i32_1 : i32, i32, i32, i32
  }
  func.func @transform_1(%arg0: i32) -> (i32, i32, i32, i32) {
    %c0_i32 = arith.constant 0 : i32
    %c0_i32_0 = arith.constant 0 : i32
    %c0_i32_1 = arith.constant 0 : i32
    %c0_i32_2 = arith.constant 0 : i32
    %c0_i32_3 = arith.constant 0 : i32
    return %c0_i32, %c0_i32_0, %c0_i32_1, %c0_i32_2 : i32, i32, i32, i32
  }
  func.func @transform_2(%arg0: i32) -> (i32, i32) {
    %c0_i32 = arith.constant 0 : i32
    %c0_i32_0 = arith.constant 0 : i32
    %c0_i32_1 = arith.constant 0 : i32
    return %c0_i32, %c0_i32_0 : i32, i32
  }
  func.func @transform_3(%arg0: i32) -> (i32, i32, i32, i32) {
    %c0_i32 = arith.constant 0 : i32
    %c0_i32_0 = arith.constant 0 : i32
    %c0_i32_1 = arith.constant 0 : i32
    %c0_i32_2 = arith.constant 0 : i32
    return %arg0, %c0_i32, %c0_i32_0, %c0_i32_1 : i32, i32, i32, i32
  }
}

module attributes {stable_mosaic.version = 11 : i64} {
  func.func @_residual_block_kernel(%arg0: i32, %arg1: memref<1x5x5x512xbf16, #tpu.memory_space<vmem>>, %arg2: memref<2x2x512x128xbf16, #tpu.memory_space<vmem>>, %arg3: memref<1x128xf32, #tpu.memory_space<vmem>>, %arg4: memref<3x3x128x128xbf16, #tpu.memory_space<vmem>>, %arg5: memref<1x128xf32, #tpu.memory_space<vmem>>, %arg6: memref<1x128xf32, #tpu.memory_space<vmem>>, %arg7: memref<1x1xf32, #tpu.memory_space<vmem>>, %arg8: memref<1x16x128xf32, #tpu.memory_space<vmem>>, %arg9: memref<6x6x128xbf16, #tpu.memory_space<vmem>>) attributes {dimension_semantics = [#tpu.dimension_semantics<parallel>], iteration_bounds = array<i64: 2>, scalar_prefetch = 0 : i64, scratch_operands = 1 : i64, tpu.core_type = #tpu.core_type<tc>, window_params = [{transform_indices = @transform_0, window_bounds = array<i64: 1, 5, 5, 512>}, {pipeline_mode = #tpu.pipeline_mode<synchronous>, transform_indices = @transform_1, window_bounds = array<i64: 2, 2, 512, 128>}, {pipeline_mode = #tpu.pipeline_mode<synchronous>, transform_indices = @transform_2, window_bounds = array<i64: 1, 128>}, {pipeline_mode = #tpu.pipeline_mode<synchronous>, transform_indices = @transform_3, window_bounds = array<i64: 3, 3, 128, 128>}, {pipeline_mode = #tpu.pipeline_mode<synchronous>, transform_indices = @transform_4, window_bounds = array<i64: 1, 128>}, {pipeline_mode = #tpu.pipeline_mode<synchronous>, transform_indices = @transform_5, window_bounds = array<i64: 1, 128>}, {pipeline_mode = #tpu.pipeline_mode<synchronous>, transform_indices = @transform_6, window_bounds = array<i64: 1, 1>}, {transform_indices = @transform_7, window_bounds = array<i64: 1, 16, 128>}]} {
    %cst = arith.constant 0.000000e+00 : f32
    %0 = vector.broadcast %cst : f32 to vector<16x128xf32>
    %c0 = arith.constant 0 : index
    %c0_0 = arith.constant 0 : index
    %c0_1 = arith.constant 0 : index
    %c0_2 = arith.constant 0 : index
    %1 = vector.load %arg1[%c0, %c0_0, %c0_1, %c0_2] : memref<1x5x5x512xbf16, #tpu.memory_space<vmem>>, vector<1x4x4x512xbf16>
    %2 = vector.shape_cast %1 : vector<1x4x4x512xbf16> to vector<4x4x512xbf16>
    %3 = vector.shape_cast %2 : vector<4x4x512xbf16> to vector<16x512xbf16>
    %c0_3 = arith.constant 0 : index
    %c0_4 = arith.constant 0 : index
    %c0_5 = arith.constant 0 : index
    %c0_6 = arith.constant 0 : index
    %4 = vector.load %arg2[%c0_3, %c0_4, %c0_5, %c0_6] : memref<2x2x512x128xbf16, #tpu.memory_space<vmem>>, vector<1x1x512x128xbf16>
    %5 = vector.shape_cast %4 : vector<1x1x512x128xbf16> to vector<512x128xbf16>
    %cst_7 = arith.constant dense<0.000000e+00> : vector<16x128xf32>
    %6 = tpu.matmul %3, %5, %cst_7 {dimension_numbers = #tpu.dot_dimension_numbers<[1], [0], [0], [1], [0, 0, 1, 1], [], []>} : vector<16x512xbf16>, vector<512x128xbf16>, vector<16x128xf32> -> vector<16x128xf32>
    %7 = arith.addf %0, %6 : vector<16x128xf32>
    %c0_8 = arith.constant 0 : index
    %c0_9 = arith.constant 0 : index
    %c1 = arith.constant 1 : index
    %c0_10 = arith.constant 0 : index
    %8 = vector.load %arg1[%c0_8, %c0_9, %c1, %c0_10] : memref<1x5x5x512xbf16, #tpu.memory_space<vmem>>, vector<1x4x4x512xbf16>
    %9 = vector.shape_cast %8 : vector<1x4x4x512xbf16> to vector<4x4x512xbf16>
    %10 = vector.shape_cast %9 : vector<4x4x512xbf16> to vector<16x512xbf16>
    %c0_11 = arith.constant 0 : index
    %c1_12 = arith.constant 1 : index
    %c0_13 = arith.constant 0 : index
    %c0_14 = arith.constant 0 : index
    %11 = vector.load %arg2[%c0_11, %c1_12, %c0_13, %c0_14] : memref<2x2x512x128xbf16, #tpu.memory_space<vmem>>, vector<1x1x512x128xbf16>
    %12 = vector.shape_cast %11 : vector<1x1x512x128xbf16> to vector<512x128xbf16>
    %cst_15 = arith.constant dense<0.000000e+00> : vector<16x128xf32>
    %13 = tpu.matmul %10, %12, %cst_15 {dimension_numbers = #tpu.dot_dimension_numbers<[1], [0], [0], [1], [0, 0, 1, 1], [], []>} : vector<16x512xbf16>, vector<512x128xbf16>, vector<16x128xf32> -> vector<16x128xf32>
    %14 = arith.addf %7, %13 : vector<16x128xf32>
    %c0_16 = arith.constant 0 : index
    %c1_17 = arith.constant 1 : index
    %c0_18 = arith.constant 0 : index
    %c0_19 = arith.constant 0 : index
    %15 = vector.load %arg1[%c0_16, %c1_17, %c0_18, %c0_19] : memref<1x5x5x512xbf16, #tpu.memory_space<vmem>>, vector<1x4x4x512xbf16>
    %16 = vector.shape_cast %15 : vector<1x4x4x512xbf16> to vector<4x4x512xbf16>
    %17 = vector.shape_cast %16 : vector<4x4x512xbf16> to vector<16x512xbf16>
    %c1_20 = arith.constant 1 : index
    %c0_21 = arith.constant 0 : index
    %c0_22 = arith.constant 0 : index
    %c0_23 = arith.constant 0 : index
    %18 = vector.load %arg2[%c1_20, %c0_21, %c0_22, %c0_23] : memref<2x2x512x128xbf16, #tpu.memory_space<vmem>>, vector<1x1x512x128xbf16>
    %19 = vector.shape_cast %18 : vector<1x1x512x128xbf16> to vector<512x128xbf16>
    %cst_24 = arith.constant dense<0.000000e+00> : vector<16x128xf32>
    %20 = tpu.matmul %17, %19, %cst_24 {dimension_numbers = #tpu.dot_dimension_numbers<[1], [0], [0], [1], [0, 0, 1, 1], [], []>} : vector<16x512xbf16>, vector<512x128xbf16>, vector<16x128xf32> -> vector<16x128xf32>
    %21 = arith.addf %14, %20 : vector<16x128xf32>
    %c0_25 = arith.constant 0 : index
    %c1_26 = arith.constant 1 : index
    %c1_27 = arith.constant 1 : index
    %c0_28 = arith.constant 0 : index
    %22 = vector.load %arg1[%c0_25, %c1_26, %c1_27, %c0_28] : memref<1x5x5x512xbf16, #tpu.memory_space<vmem>>, vector<1x4x4x512xbf16>
    %23 = vector.shape_cast %22 : vector<1x4x4x512xbf16> to vector<4x4x512xbf16>
    %24 = vector.shape_cast %23 : vector<4x4x512xbf16> to vector<16x512xbf16>
    %c1_29 = arith.constant 1 : index
    %c1_30 = arith.constant 1 : index
    %c0_31 = arith.constant 0 : index
    %c0_32 = arith.constant 0 : index
    %25 = vector.load %arg2[%c1_29, %c1_30, %c0_31, %c0_32] : memref<2x2x512x128xbf16, #tpu.memory_space<vmem>>, vector<1x1x512x128xbf16>
    %26 = vector.shape_cast %25 : vector<1x1x512x128xbf16> to vector<512x128xbf16>
    %cst_33 = arith.constant dense<0.000000e+00> : vector<16x128xf32>
    %27 = tpu.matmul %24, %26, %cst_33 {dimension_numbers = #tpu.dot_dimension_numbers<[1], [0], [0], [1], [0, 0, 1, 1], [], []>} : vector<16x512xbf16>, vector<512x128xbf16>, vector<16x128xf32> -> vector<16x128xf32>
    %28 = arith.addf %21, %27 : vector<16x128xf32>
    %c0_34 = arith.constant 0 : index
    %c0_35 = arith.constant 0 : index
    %29 = vector.load %arg3[%c0_34, %c0_35] : memref<1x128xf32, #tpu.memory_space<vmem>>, vector<1x128xf32>
    %30 = vector.broadcast %29 : vector<1x128xf32> to vector<16x128xf32>
    %31 = arith.addf %28, %30 : vector<16x128xf32>
    %cst_36 = arith.constant 0.000000e+00 : f32
    %32 = vector.broadcast %cst_36 : f32 to vector<16x128xf32>
    %33 = arith.maximumf %31, %32 : vector<16x128xf32>
    %cst_37 = arith.constant 0.000000e+00 : bf16
    %34 = vector.broadcast %cst_37 : bf16 to vector<6x6x128xbf16>
    %c0_38 = arith.constant 0 : index
    %c0_39 = arith.constant 0 : index
    %c0_40 = arith.constant 0 : index
    %35 = vector.load %arg9[%c0_38, %c0_39, %c0_40] : memref<6x6x128xbf16, #tpu.memory_space<vmem>>, vector<6x6x128xbf16>
    tpu.vector_store %arg9[%c0_38, %c0_39, %c0_40], %34 {strides = array<i32>} : memref<6x6x128xbf16, #tpu.memory_space<vmem>>, vector<6x6x128xbf16>,
    %36 = vector.shape_cast %33 : vector<16x128xf32> to vector<4x4x128xf32>
    %37 = arith.truncf %36 : vector<4x4x128xf32> to vector<4x4x128xbf16>
    %c1_41 = arith.constant 1 : index
    %c1_42 = arith.constant 1 : index
    %c0_43 = arith.constant 0 : index
    %38 = vector.load %arg9[%c1_41, %c1_42, %c0_43] : memref<6x6x128xbf16, #tpu.memory_space<vmem>>, vector<4x4x128xbf16>
    tpu.vector_store %arg9[%c1_41, %c1_42, %c0_43], %37 {strides = array<i32>} : memref<6x6x128xbf16, #tpu.memory_space<vmem>>, vector<4x4x128xbf16>,
    %cst_44 = arith.constant 0.000000e+00 : f32
    %39 = vector.broadcast %cst_44 : f32 to vector<16x128xf32>
    %c0_45 = arith.constant 0 : index
    %c0_46 = arith.constant 0 : index
    %c0_47 = arith.constant 0 : index
    %40 = vector.load %arg9[%c0_45, %c0_46, %c0_47] : memref<6x6x128xbf16, #tpu.memory_space<vmem>>, vector<4x4x128xbf16>
    %41 = vector.shape_cast %40 : vector<4x4x128xbf16> to vector<16x128xbf16>
    %c0_48 = arith.constant 0 : index
    %c0_49 = arith.constant 0 : index
    %c0_50 = arith.constant 0 : index
    %c0_51 = arith.constant 0 : index
    %42 = vector.load %arg4[%c0_48, %c0_49, %c0_50, %c0_51] : memref<3x3x128x128xbf16, #tpu.memory_space<vmem>>, vector<1x1x128x128xbf16>
    %43 = vector.shape_cast %42 : vector<1x1x128x128xbf16> to vector<128x128xbf16>
    %cst_52 = arith.constant dense<0.000000e+00> : vector<16x128xf32>
    %44 = tpu.matmul %41, %43, %cst_52 {dimension_numbers = #tpu.dot_dimension_numbers<[1], [0], [0], [1], [0, 0, 1, 1], [], []>} : vector<16x128xbf16>, vector<128x128xbf16>, vector<16x128xf32> -> vector<16x128xf32>
    %45 = arith.addf %39, %44 : vector<16x128xf32>
    %c0_53 = arith.constant 0 : index
    %c1_54 = arith.constant 1 : index
    %c0_55 = arith.constant 0 : index
    %46 = vector.load %arg9[%c0_53, %c1_54, %c0_55] : memref<6x6x128xbf16, #tpu.memory_space<vmem>>, vector<4x4x128xbf16>
    %47 = vector.shape_cast %46 : vector<4x4x128xbf16> to vector<16x128xbf16>
    %c0_56 = arith.constant 0 : index
    %c1_57 = arith.constant 1 : index
    %c0_58 = arith.constant 0 : index
    %c0_59 = arith.constant 0 : index
    %48 = vector.load %arg4[%c0_56, %c1_57, %c0_58, %c0_59] : memref<3x3x128x128xbf16, #tpu.memory_space<vmem>>, vector<1x1x128x128xbf16>
    %49 = vector.shape_cast %48 : vector<1x1x128x128xbf16> to vector<128x128xbf16>
    %cst_60 = arith.constant dense<0.000000e+00> : vector<16x128xf32>
    %50 = tpu.matmul %47, %49, %cst_60 {dimension_numbers = #tpu.dot_dimension_numbers<[1], [0], [0], [1], [0, 0, 1, 1], [], []>} : vector<16x128xbf16>, vector<128x128xbf16>, vector<16x128xf32> -> vector<16x128xf32>
    %51 = arith.addf %45, %50 : vector<16x128xf32>
    %c0_61 = arith.constant 0 : index
    %c2 = arith.constant 2 : index
    %c0_62 = arith.constant 0 : index
    %52 = vector.load %arg9[%c0_61, %c2, %c0_62] : memref<6x6x128xbf16, #tpu.memory_space<vmem>>, vector<4x4x128xbf16>
    %53 = vector.shape_cast %52 : vector<4x4x128xbf16> to vector<16x128xbf16>
    %c0_63 = arith.constant 0 : index
    %c2_64 = arith.constant 2 : index
    %c0_65 = arith.constant 0 : index
    %c0_66 = arith.constant 0 : index
    %54 = vector.load %arg4[%c0_63, %c2_64, %c0_65, %c0_66] : memref<3x3x128x128xbf16, #tpu.memory_space<vmem>>, vector<1x1x128x128xbf16>
    %55 = vector.shape_cast %54 : vector<1x1x128x128xbf16> to vector<128x128xbf16>
    %cst_67 = arith.constant dense<0.000000e+00> : vector<16x128xf32>
    %56 = tpu.matmul %53, %55, %cst_67 {dimension_numbers = #tpu.dot_dimension_numbers<[1], [0], [0], [1], [0, 0, 1, 1], [], []>} : vector<16x128xbf16>, vector<128x128xbf16>, vector<16x128xf32> -> vector<16x128xf32>
    %57 = arith.addf %51, %56 : vector<16x128xf32>
    %c1_68 = arith.constant 1 : index
    %c0_69 = arith.constant 0 : index
    %c0_70 = arith.constant 0 : index
    %58 = vector.load %arg9[%c1_68, %c0_69, %c0_70] : memref<6x6x128xbf16, #tpu.memory_space<vmem>>, vector<4x4x128xbf16>
    %59 = vector.shape_cast %58 : vector<4x4x128xbf16> to vector<16x128xbf16>
    %c1_71 = arith.constant 1 : index
    %c0_72 = arith.constant 0 : index
    %c0_73 = arith.constant 0 : index
    %c0_74 = arith.constant 0 : index
    %60 = vector.load %arg4[%c1_71, %c0_72, %c0_73, %c0_74] : memref<3x3x128x128xbf16, #tpu.memory_space<vmem>>, vector<1x1x128x128xbf16>
    %61 = vector.shape_cast %60 : vector<1x1x128x128xbf16> to vector<128x128xbf16>
    %cst_75 = arith.constant dense<0.000000e+00> : vector<16x128xf32>
    %62 = tpu.matmul %59, %61, %cst_75 {dimension_numbers = #tpu.dot_dimension_numbers<[1], [0], [0], [1], [0, 0, 1, 1], [], []>} : vector<16x128xbf16>, vector<128x128xbf16>, vector<16x128xf32> -> vector<16x128xf32>
    %63 = arith.addf %57, %62 : vector<16x128xf32>
    %c1_76 = arith.constant 1 : index
    %c1_77 = arith.constant 1 : index
    %c0_78 = arith.constant 0 : index
    %64 = vector.load %arg9[%c1_76, %c1_77, %c0_78] : memref<6x6x128xbf16, #tpu.memory_space<vmem>>, vector<4x4x128xbf16>
    %65 = vector.shape_cast %64 : vector<4x4x128xbf16> to vector<16x128xbf16>
    %c1_79 = arith.constant 1 : index
    %c1_80 = arith.constant 1 : index
    %c0_81 = arith.constant 0 : index
    %c0_82 = arith.constant 0 : index
    %66 = vector.load %arg4[%c1_79, %c1_80, %c0_81, %c0_82] : memref<3x3x128x128xbf16, #tpu.memory_space<vmem>>, vector<1x1x128x128xbf16>
    %67 = vector.shape_cast %66 : vector<1x1x128x128xbf16> to vector<128x128xbf16>
    %cst_83 = arith.constant dense<0.000000e+00> : vector<16x128xf32>
    %68 = tpu.matmul %65, %67, %cst_83 {dimension_numbers = #tpu.dot_dimension_numbers<[1], [0], [0], [1], [0, 0, 1, 1], [], []>} : vector<16x128xbf16>, vector<128x128xbf16>, vector<16x128xf32> -> vector<16x128xf32>
    %69 = arith.addf %63, %68 : vector<16x128xf32>
    %c1_84 = arith.constant 1 : index
    %c2_85 = arith.constant 2 : index
    %c0_86 = arith.constant 0 : index
    %70 = vector.load %arg9[%c1_84, %c2_85, %c0_86] : memref<6x6x128xbf16, #tpu.memory_space<vmem>>, vector<4x4x128xbf16>
    %71 = vector.shape_cast %70 : vector<4x4x128xbf16> to vector<16x128xbf16>
    %c1_87 = arith.constant 1 : index
    %c2_88 = arith.constant 2 : index
    %c0_89 = arith.constant 0 : index
    %c0_90 = arith.constant 0 : index
    %72 = vector.load %arg4[%c1_87, %c2_88, %c0_89, %c0_90] : memref<3x3x128x128xbf16, #tpu.memory_space<vmem>>, vector<1x1x128x128xbf16>
    %73 = vector.shape_cast %72 : vector<1x1x128x128xbf16> to vector<128x128xbf16>
    %cst_91 = arith.constant dense<0.000000e+00> : vector<16x128xf32>
    %74 = tpu.matmul %71, %73, %cst_91 {dimension_numbers = #tpu.dot_dimension_numbers<[1], [0], [0], [1], [0, 0, 1, 1], [], []>} : vector<16x128xbf16>, vector<128x128xbf16>, vector<16x128xf32> -> vector<16x128xf32>
    %75 = arith.addf %69, %74 : vector<16x128xf32>
    %c2_92 = arith.constant 2 : index
    %c0_93 = arith.constant 0 : index
    %c0_94 = arith.constant 0 : index
    %76 = vector.load %arg9[%c2_92, %c0_93, %c0_94] : memref<6x6x128xbf16, #tpu.memory_space<vmem>>, vector<4x4x128xbf16>
    %77 = vector.shape_cast %76 : vector<4x4x128xbf16> to vector<16x128xbf16>
    %c2_95 = arith.constant 2 : index
    %c0_96 = arith.constant 0 : index
    %c0_97 = arith.constant 0 : index
    %c0_98 = arith.constant 0 : index
    %78 = vector.load %arg4[%c2_95, %c0_96, %c0_97, %c0_98] : memref<3x3x128x128xbf16, #tpu.memory_space<vmem>>, vector<1x1x128x128xbf16>
    %79 = vector.shape_cast %78 : vector<1x1x128x128xbf16> to vector<128x128xbf16>
    %cst_99 = arith.constant dense<0.000000e+00> : vector<16x128xf32>
    %80 = tpu.matmul %77, %79, %cst_99 {dimension_numbers = #tpu.dot_dimension_numbers<[1], [0], [0], [1], [0, 0, 1, 1], [], []>} : vector<16x128xbf16>, vector<128x128xbf16>, vector<16x128xf32> -> vector<16x128xf32>
    %81 = arith.addf %75, %80 : vector<16x128xf32>
    %c2_100 = arith.constant 2 : index
    %c1_101 = arith.constant 1 : index
    %c0_102 = arith.constant 0 : index
    %82 = vector.load %arg9[%c2_100, %c1_101, %c0_102] : memref<6x6x128xbf16, #tpu.memory_space<vmem>>, vector<4x4x128xbf16>
    %83 = vector.shape_cast %82 : vector<4x4x128xbf16> to vector<16x128xbf16>
    %c2_103 = arith.constant 2 : index
    %c1_104 = arith.constant 1 : index
    %c0_105 = arith.constant 0 : index
    %c0_106 = arith.constant 0 : index
    %84 = vector.load %arg4[%c2_103, %c1_104, %c0_105, %c0_106] : memref<3x3x128x128xbf16, #tpu.memory_space<vmem>>, vector<1x1x128x128xbf16>
    %85 = vector.shape_cast %84 : vector<1x1x128x128xbf16> to vector<128x128xbf16>
    %cst_107 = arith.constant dense<0.000000e+00> : vector<16x128xf32>
    %86 = tpu.matmul %83, %85, %cst_107 {dimension_numbers = #tpu.dot_dimension_numbers<[1], [0], [0], [1], [0, 0, 1, 1], [], []>} : vector<16x128xbf16>, vector<128x128xbf16>, vector<16x128xf32> -> vector<16x128xf32>
    %87 = arith.addf %81, %86 : vector<16x128xf32>
    %c2_108 = arith.constant 2 : index
    %c2_109 = arith.constant 2 : index
    %c0_110 = arith.constant 0 : index
    %88 = vector.load %arg9[%c2_108, %c2_109, %c0_110] : memref<6x6x128xbf16, #tpu.memory_space<vmem>>, vector<4x4x128xbf16>
    %89 = vector.shape_cast %88 : vector<4x4x128xbf16> to vector<16x128xbf16>
    %c2_111 = arith.constant 2 : index
    %c2_112 = arith.constant 2 : index
    %c0_113 = arith.constant 0 : index
    %c0_114 = arith.constant 0 : index
    %90 = vector.load %arg4[%c2_111, %c2_112, %c0_113, %c0_114] : memref<3x3x128x128xbf16, #tpu.memory_space<vmem>>, vector<1x1x128x128xbf16>
    %91 = vector.shape_cast %90 : vector<1x1x128x128xbf16> to vector<128x128xbf16>
    %cst_115 = arith.constant dense<0.000000e+00> : vector<16x128xf32>
    %92 = tpu.matmul %89, %91, %cst_115 {dimension_numbers = #tpu.dot_dimension_numbers<[1], [0], [0], [1], [0, 0, 1, 1], [], []>} : vector<16x128xbf16>, vector<128x128xbf16>, vector<16x128xf32> -> vector<16x128xf32>
    %93 = arith.addf %87, %92 : vector<16x128xf32>
    %c0_116 = arith.constant 0 : index
    %c0_117 = arith.constant 0 : index
    %94 = vector.load %arg5[%c0_116, %c0_117] : memref<1x128xf32, #tpu.memory_space<vmem>>, vector<1x128xf32>
    %95 = vector.broadcast %94 : vector<1x128xf32> to vector<16x128xf32>
    %96 = arith.addf %93, %95 : vector<16x128xf32>
    %97 = arith.addf %96, %33 : vector<16x128xf32>
    %cst_118 = arith.constant 0.000000e+00 : f32
    %98 = vector.broadcast %cst_118 : f32 to vector<16x128xf32>
    %99 = arith.maximumf %97, %98 : vector<16x128xf32>
    %c0_119 = arith.constant 0 : index
    %c0_120 = arith.constant 0 : index
    %100 = vector.load %arg6[%c0_119, %c0_120] : memref<1x128xf32, #tpu.memory_space<vmem>>, vector<1x128xf32>
    %101 = vector.broadcast %100 : vector<1x128xf32> to vector<16x128xf32>
    %102 = arith.mulf %99, %101 : vector<16x128xf32>
    %cst_121 = arith.constant dense<0.000000e+00> : vector<16xf32>
    %103 = vector.multi_reduction <add>, %102, %cst_121 [1] : vector<16x128xf32> to vector<16xf32>
    %104 = vector.shape_cast %103 : vector<16xf32> to vector<16x1xf32>
    %c0_122 = arith.constant 0 : index
    %c0_123 = arith.constant 0 : index
    %105 = vector.load %arg7[%c0_122, %c0_123] : memref<1x1xf32, #tpu.memory_space<vmem>>, vector<1x1xf32>
    %106 = vector.broadcast %105 : vector<1x1xf32> to vector<16x1xf32>
    %107 = arith.addf %104, %106 : vector<16x1xf32>
    %108 = vector.broadcast %107 : vector<16x1xf32> to vector<16x128xf32>
    %109 = arith.addf %99, %108 : vector<16x128xf32>
    %c0_124 = arith.constant 0 : index
    %c0_125 = arith.constant 0 : index
    %c0_126 = arith.constant 0 : index
    %110 = vector.load %arg8[%c0_124, %c0_125, %c0_126] : memref<1x16x128xf32, #tpu.memory_space<vmem>>, vector<1x16x128xf32>
    %111 = vector.shape_cast %110 : vector<1x16x128xf32> to vector<16x128xf32>
    %112 = vector.shape_cast %109 : vector<16x128xf32> to vector<1x16x128xf32>
    tpu.vector_store %arg8[%c0_124, %c0_125, %c0_126], %112 {strides = array<i32>} : memref<1x16x128xf32, #tpu.memory_space<vmem>>, vector<1x16x128xf32>,
    return
  }
  func.func @transform_0(%arg0: i32) -> (i32, i32, i32, i32) {
    %c0_i32 = arith.constant 0 : i32
    %c0_i32_0 = arith.constant 0 : i32
    %c0_i32_1 = arith.constant 0 : i32
    %c0_i32_2 = arith.constant 0 : i32
    return %arg0, %c0_i32, %c0_i32_0, %c0_i32_1 : i32, i32, i32, i32
  }
  func.func @transform_1(%arg0: i32) -> (i32, i32, i32, i32) {
    %c0_i32 = arith.constant 0 : i32
    %c0_i32_0 = arith.constant 0 : i32
    %c0_i32_1 = arith.constant 0 : i32
    %c0_i32_2 = arith.constant 0 : i32
    %c0_i32_3 = arith.constant 0 : i32
    return %c0_i32, %c0_i32_0, %c0_i32_1, %c0_i32_2 : i32, i32, i32, i32
  }
  func.func @transform_2(%arg0: i32) -> (i32, i32) {
    %c0_i32 = arith.constant 0 : i32
    %c0_i32_0 = arith.constant 0 : i32
    %c0_i32_1 = arith.constant 0 : i32
    return %c0_i32, %c0_i32_0 : i32, i32
  }
  func.func @transform_3(%arg0: i32) -> (i32, i32, i32, i32) {
    %c0_i32 = arith.constant 0 : i32
    %c0_i32_0 = arith.constant 0 : i32
    %c0_i32_1 = arith.constant 0 : i32
    %c0_i32_2 = arith.constant 0 : i32
    %c0_i32_3 = arith.constant 0 : i32
    return %c0_i32, %c0_i32_0, %c0_i32_1, %c0_i32_2 : i32, i32, i32, i32
  }
  func.func @transform_4(%arg0: i32) -> (i32, i32) {
    %c0_i32 = arith.constant 0 : i32
    %c0_i32_0 = arith.constant 0 : i32
    %c0_i32_1 = arith.constant 0 : i32
    return %c0_i32, %c0_i32_0 : i32, i32
  }
  func.func @transform_5(%arg0: i32) -> (i32, i32) {
    %c0_i32 = arith.constant 0 : i32
    %c0_i32_0 = arith.constant 0 : i32
    %c0_i32_1 = arith.constant 0 : i32
    return %c0_i32, %c0_i32_0 : i32, i32
  }
  func.func @transform_6(%arg0: i32) -> (i32, i32) {
    %c0_i32 = arith.constant 0 : i32
    %c0_i32_0 = arith.constant 0 : i32
    %c0_i32_1 = arith.constant 0 : i32
    return %c0_i32, %c0_i32_0 : i32, i32
  }
  func.func @transform_7(%arg0: i32) -> (i32, i32, i32) {
    %c0_i32 = arith.constant 0 : i32
    %c0_i32_0 = arith.constant 0 : i32
    %c0_i32_1 = arith.constant 0 : i32
    return %arg0, %c0_i32, %c0_i32_0 : i32, i32, i32
  }
}

</mosaic_0001>

<llo_original>
// kernel: encoder_forward.2
$region0: #{encoder_forward.2}
  #allocation0 [shape = 'u32[]', space=smem, size = 0x4, offset = 0x4, fixed_abs, tag = 'smem constant byte address 0x4 - core index']
  #allocation1 [shape = 'u32[72,128]{1,0:T(1,128)}', space=vmem, size = 0x9000, scoped, tag = 'internal scratch']
  %s0 = inlined_call_operand.vmem [shape: f32[2,9,9,4], index: 0, kind: input, shape index: {}]
  %s1 = inlined_call_operand.vmem [shape: f32[2,2,4,128], index: 1, kind: input, shape index: {}]
  %s2 = inlined_call_operand.vmem [shape: f32[1,128], index: 2, kind: input, shape index: {}]
  %s3 = inlined_call_operand.vmem [shape: bf16[2,10,10,128], index: 3, kind: output, shape index: {}]
  %s4 = sld [smem:[#allocation0]]
  $region45: #{encoder_forward.2} parent=0
    _
  %s6 = ssub.s32 1, %s4
  %s7 = scalar_select 0, %s6, %s4
  loop: start=0, step=1, limit=4
  $region2: #{encoder_forward.2} parent=0 // loop_pre_header
    _
  $region3: #{encoder_forward.2} parent=0 // loop_header
    %s9 = sphi 0, %s13
    %p10 = scmp.ge.s32.totalorder %s9, 4
    %s19 = sphi 0, %s21
    %s22 = sphi 0, %s19
    %s23 = sphi 0, %s22
    %s39 = sphi 0, %s23
    %s43 = sphi 0, %s43
    %s45 = sphi 0, %s43
    %s46 = sphi 0, %s45
    %s60 = sphi 0, %s46
    %s64 = sphi 0, %s64
    %s66 = sphi 0, %s64
    %s67 = sphi 0, %s66
    %s81 = sphi 0, %s67
    %s87 = sphi 0, %s89
    %s90 = sphi 0, %s87
    %s91 = sphi 0, %s90
    %s107 = sphi 0, %s91
  $region4: #{encoder_forward.2} parent=0 // loop_header_branch
    %12 = sbr.rel (%p10) target = $region8
  $region5: #{encoder_forward.2} parent=0 // loop_body
    %s14 = ssub.s32 %s9, 1
    %s15 = ssub.s32 %s9, 2
    %s16 = sadd.s32 %s9, 1
    %s17 = ssub.s32 %s9, %s16
    %p18 = scmp.eq.s32.totalorder %s17, 0
    %s20 = sadd.s32 %s19, 1
    %s21 = scalar_select %p18, %s19, %s20
    %p24 = pneg %p18
    %p25 = scmp.eq.s32.totalorder %s9, 1
    %p26 = por %p24, %p25
    %p27 = scmp.ne.s32.totalorder %s19, %s22
    %p28 = scmp.eq.s32.totalorder %s9, 0
    %p29 = por %p27, %p28
    %p30 = scmp.ne.s32.totalorder %s19, %s22
    %p31 = scmp.eq.s32.totalorder %s14, 1
    %p32 = por %p30, %p31
    %p33 = scmp.ne.s32.totalorder %s22, %s23
    %p34 = scmp.eq.s32.totalorder %s14, 0
    %p35 = por %p33, %p34
    %p36 = scmp.ne.s32.totalorder %s22, %s23
    %p37 = scmp.eq.s32.totalorder %s15, 1
    %p38 = por %p36, %p37
    %p40 = scmp.ne.s32.totalorder %s23, %s39
    %p41 = scmp.eq.s32.totalorder %s15, 0
    %p42 = por %p40, %p41
    %s44 = sadd.s32 %s43, 1
    %p47 = scmp.eq.s32.totalorder %s9, 1
    %p48 = scmp.ne.s32.totalorder %s43, %s45
    %p49 = scmp.eq.s32.totalorder %s9, 0
    %p50 = por %p48, %p49
    %p51 = scmp.ne.s32.totalorder %s43, %s45
    %p52 = scmp.eq.s32.totalorder %s14, 1
    %p53 = por %p51, %p52
    %p54 = scmp.ne.s32.totalorder %s45, %s46
    %p55 = scmp.eq.s32.totalorder %s14, 0
    %p56 = por %p54, %p55
    %p57 = scmp.ne.s32.totalorder %s45, %s46
    %p58 = scmp.eq.s32.totalorder %s15, 1
    %p59 = por %p57, %p58
    %p61 = scmp.ne.s32.totalorder %s46, %s60
    %p62 = scmp.eq.s32.totalorder %s15, 0
    %p63 = por %p61, %p62
    %s65 = sadd.s32 %s64, 1
    %p68 = scmp.eq.s32.totalorder %s9, 1
    %p69 = scmp.ne.s32.totalorder %s64, %s66
    %p70 = scmp.eq.s32.totalorder %s9, 0
    %p71 = por %p69, %p70
    %p72 = scmp.ne.s32.totalorder %s64, %s66
    %p73 = scmp.eq.s32.totalorder %s14, 1
    %p74 = por %p72, %p73
    %p75 = scmp.ne.s32.totalorder %s66, %s67
    %p76 = scmp.eq.s32.totalorder %s14, 0
    %p77 = por %p75, %p76
    %p78 = scmp.ne.s32.totalorder %s66, %s67
    %p79 = scmp.eq.s32.totalorder %s15, 1
    %p80 = por %p78, %p79
    %p82 = scmp.ne.s32.totalorder %s67, %s81
    %p83 = scmp.eq.s32.totalorder %s15, 0
    %p84 = por %p82, %p83
    %s85 = ssub.s32 %s9, %s16
    %p86 = scmp.eq.s32.totalorder %s85, 0
    %s88 = sadd.s32 %s87, 1
    %s89 = scalar_select %p86, %s87, %s88
    %p92 = pneg %p86
    %p93 = scmp.eq.s32.totalorder %s9, 1
    %p94 = por %p92, %p93
    %p95 = scmp.ne.s32.totalorder %s87, %s90
    %p96 = scmp.eq.s32.totalorder %s9, 0
    %p97 = por %p95, %p96
    %p98 = scmp.ne.s32.totalorder %s87, %s90
    %p99 = scmp.eq.s32.totalorder %s14, 1
    %p100 = por %p98, %p99
    %p101 = scmp.ne.s32.totalorder %s90, %s91
    %p102 = scmp.eq.s32.totalorder %s14, 0
    %p103 = por %p101, %p102
    %p104 = scmp.ne.s32.totalorder %s90, %s91
    %p105 = scmp.eq.s32.totalorder %s15, 1
    %p106 = por %p104, %p105
    %p108 = scmp.ne.s32.totalorder %s91, %s107
    %p109 = scmp.eq.s32.totalorder %s15, 0
    %p110 = por %p108, %p109
    %p111 = scmp.le.s32.totalorder 1, %s9
    %p112 = scmp.lt.s32.totalorder %s9, 3
    %p113 = pnand %p111, %p112
    %p114 = pneg %p113
    // Predicated region
    $region9: #{encoder_forward.2} parent=5 // pred_check
      _
    $region10: #{encoder_forward.2} parent=5 // pred_check_branch
      %116 = sbr.rel (%p113) target = $region12
    $region11: #{encoder_forward.2} parent=5 // pred_region
      %s117 = ssub.s32 %s9, 1
      // Predicated region
      $region13: #{encoder_forward.2} parent=11 // pred_check
        %p118 = pneg %p56
      $region14: #{encoder_forward.2} parent=11 // pred_check_branch
        %120 = sbr.rel (%p118) target = $region16
      $region15: #{encoder_forward.2} parent=11 // pred_region
        _
      $region16: #{encoder_forward.2} parent=11 // pred_fallthru
        _
      // Predicated region
      $region17: #{encoder_forward.2} parent=11 // pred_check
        %p121 = pneg %p77
      $region18: #{encoder_forward.2} parent=11 // pred_check_branch
        %123 = sbr.rel (%p121) target = $region20
      $region19: #{encoder_forward.2} parent=11 // pred_region
        _
      $region20: #{encoder_forward.2} parent=11 // pred_fallthru
        _
    $region12: #{encoder_forward.2} parent=5 // pred_fallthru
      _
    %p124 = scmp.lt.s32.totalorder %s9, 2
    // Predicated region
    $region21: #{encoder_forward.2} parent=5 // pred_check
      %p125 = pneg %p124
    $region22: #{encoder_forward.2} parent=5 // pred_check_branch
      %127 = sbr.rel (%p125) target = $region24
    $region23: #{encoder_forward.2} parent=5 // pred_region
      // Predicated region
      $region25: #{encoder_forward.2} parent=23 // pred_check
        %p128 = pneg %p29
      $region26: #{encoder_forward.2} parent=23 // pred_check_branch
        %130 = sbr.rel (%p128) target = $region28
      $region27: #{encoder_forward.2} parent=23 // pred_region
        %p131 = scmp.lt.s32.totalorder %s9, 1
        %s132 = scalar_select %p131, %s9, 1
        %s133 = smul.addr %s132, 18
        %s134 = smul.addr %s133, 8
        %s135 = scalar_lea.vmem %s0, %s134
      $region28: #{encoder_forward.2} parent=23 // pred_fallthru
        _
    $region24: #{encoder_forward.2} parent=5 // pred_fallthru
      _
    %p136 = scmp.le.s32.totalorder 1, %s9
    %p137 = scmp.lt.s32.totalorder %s9, 3
    %p138 = pnand %p136, %p137
    %p139 = pneg %p138
    // Predicated region
    $region29: #{encoder_forward.2} parent=5 // pred_check
      _
    $region30: #{encoder_forward.2} parent=5 // pred_check_branch
      %141 = sbr.rel (%p138) target = $region32
    $region31: #{encoder_forward.2} parent=5 // pred_region
      %s142 = ssub.s32 %s9, 1
      %p143 = scmp.lt.s32.totalorder %s14, 1
      %s144 = scalar_select %p143, %s14, 1
      %s145 = smul.addr %s144, 18
      %s146 = smul.addr %s145, 8
      %s147 = scalar_lea.vmem %s0, %s146
      %p148 = pneg %p35
      %p149 = pneg %p32
      %p150 = pneg %p56
      %p151 = pneg %p53
      %p152 = pneg %p77
      %p153 = pneg %p74
      %p154 = pneg %p103
      %p155 = pneg %p100
      %p156 = scmp.lt.s32.totalorder %s14, 1
      %s157 = scalar_select %p156, %s14, 1
      %s158 = smul.addr %s157, 20
      %s159 = smul.addr %s158, 4
      %s160 = scalar_lea.vmem %s3, %s159
      %p161 = scmp.lt.s32.totalorder %s14, 1
      %s162 = scalar_select %p161, %s14, 1
      %s163 = smul.addr %s162, 18
      %s164 = smul.addr %s163, 8
      %s165 = scalar_lea.vmem %s0, %s164
      %p166 = scmp.lt.s32.totalorder %s14, 1
      %s167 = scalar_select %p166, %s14, 1
      %s168 = smul.addr %s167, 20
      %s169 = smul.addr %s168, 4
      %s170 = scalar_lea.vmem %s3, %s169
      %v172 = vld [vmem:[%s165] sm:$0xff]
      %v173 = vld [vmem:[%s165 + $0x10] sm:$0xff]
      %v174 = vld [vmem:[%s165 + $0x20] sm:$0xff]
      %v175 = vld [vmem:[%s165 + $0x30] sm:$0xff]
      %v176 = vld [vmem:[%s165 + $0x40] sm:$0xff]
      %v177 = vld [vmem:[%s165 + $0x50] sm:$0xff]
      %v178 = vld [vmem:[%s165 + $0x60] sm:$0xff]
      %v179 = vld [vmem:[%s165 + $0x70] sm:$0xff]
      %v180 = vld [vmem:[%s1] sm:$0xf]
      %v181 = vld [vmem:[%s165 + $0x1] sm:$0xff]
      %v182 = vld [vmem:[%s165 + $0x11] sm:$0xff]
      %v183 = vld [vmem:[%s165 + $0x21] sm:$0xff]
      %v184 = vld [vmem:[%s165 + $0x31] sm:$0xff]
      %v185 = vld [vmem:[%s165 + $0x41] sm:$0xff]
      %v186 = vld [vmem:[%s165 + $0x51] sm:$0xff]
      %v187 = vld [vmem:[%s165 + $0x61] sm:$0xff]
      %v188 = vld [vmem:[%s165 + $0x71] sm:$0xff]
      %s189 = scalar_lea.vmem %s1, 4
      %v190 = vld [vmem:[%s189] sm:$0xf]
      %vm191 = vcmask 31744
      %v193 = vsel %vm191, %v181, 0
      %v196 = vsel %vm191, %v182, 0
      %v199 = vsel %vm191, %v183, 0
      %v202 = vsel %vm191, %v184, 0
      %v205 = vsel %vm191, %v185, 0
      %v208 = vsel %vm191, %v186, 0
      %v211 = vsel %vm191, %v187, 0
      %v214 = vsel %vm191, %v188, 0
      %vm216 = vcmask 1043456
      %v218 = vsel %vm216, %v190, 0
      %220 = vmatpush.msra.mxu0 0.0
      %221 = vmatpush.msra.mxu0 0.0
      %222 = vmatpush.msra.mxu0 0.0
      %223 = vmatpush.msra.mxu0 0.0
      %224 = vmatpush.msra.mxu0 0.0
      %225 = vmatpush.msra.mxu0 0.0
      %226 = vmatpush.msra.mxu0 0.0
      %227 = vmatpush.msra.mxu0 0.0
      %228 = vmatpush.msra.mxu0 0.0
      %229 = vmatpush.msra.mxu0 0.0
      %230 = vmatpush.msra.mxu0 0.0
      %231 = vmatpush.msra.mxu0 0.0
      %232 = vmatpush.msra.mxu0 0.0
      %233 = vmatpush.msra.mxu0 0.0
      %234 = vmatpush.msra.mxu0 0.0
      %235 = vmatpush.msra.mxu0 %v218
      %236 = vmatmul.f32.gmra.mxu0 %v193
      %v237 = vpop.f32.mrf.mxu0
      %v238 = vadd.f32 0.0, %v237
      %239 = vmatmul.f32.gmra.mxu0 %v196
      %v240 = vpop.f32.mrf.mxu0
      %v241 = vadd.f32 0.0, %v240
      %242 = vmatmul.f32.gmra.mxu0 %v199
      %v243 = vpop.f32.mrf.mxu0
      %v244 = vadd.f32 0.0, %v243
      %245 = vmatmul.f32.gmra.mxu0 %v202
      %v246 = vpop.f32.mrf.mxu0
      %v247 = vadd.f32 0.0, %v246
      %248 = vmatmul.f32.gmra.mxu0 %v205
      %v249 = vpop.f32.mrf.mxu0
      %v250 = vadd.f32 0.0, %v249
      %251 = vmatmul.f32.gmra.mxu0 %v208
      %v252 = vpop.f32.mrf.mxu0
      %v253 = vadd.f32 0.0, %v252
      %254 = vmatmul.f32.gmra.mxu0 %v211
      %v255 = vpop.f32.mrf.mxu0
      %v256 = vadd.f32 0.0, %v255
      %257 = vmatmul.f32.gmra.mxu0 %v214
      %v258 = vpop.f32.mrf.mxu0
      %v259 = vadd.f32 0.0, %v258
      %260 = vdwg.mxu0
      %v262 = vsel %vm191, %v172, 0
      %v265 = vsel %vm191, %v173, 0
      %v268 = vsel %vm191, %v174, 0
      %v271 = vsel %vm191, %v175, 0
      %v274 = vsel %vm191, %v176, 0
      %v277 = vsel %vm191, %v177, 0
      %v280 = vsel %vm191, %v178, 0
      %v283 = vsel %vm191, %v179, 0
      %v286 = vsel %vm216, %v180, 0
      %288 = vmatpush.msra.mxu0 0.0
      %289 = vmatpush.msra.mxu0 0.0
      %290 = vmatpush.msra.mxu0 0.0
      %291 = vmatpush.msra.mxu0 0.0
      %292 = vmatpush.msra.mxu0 0.0
      %293 = vmatpush.msra.mxu0 0.0
      %294 = vmatpush.msra.mxu0 0.0
      %295 = vmatpush.msra.mxu0 0.0
      %296 = vmatpush.msra.mxu0 0.0
      %297 = vmatpush.msra.mxu0 0.0
      %298 = vmatpush.msra.mxu0 0.0
      %299 = vmatpush.msra.mxu0 0.0
      %300 = vmatpush.msra.mxu0 0.0
      %301 = vmatpush.msra.mxu0 0.0
      %302 = vmatpush.msra.mxu0 0.0
      %303 = vmatpush.msra.mxu0 %v286
      %304 = vmatmul.f32.gmra.mxu0 %v262
      %v305 = vpop.f32.mrf.mxu0
      %v306 = vadd.f32 %v238, %v305
      %307 = vmatmul.f32.gmra.mxu0 %v265
      %v308 = vpop.f32.mrf.mxu0
      %v309 = vadd.f32 %v241, %v308
      %310 = vmatmul.f32.gmra.mxu0 %v268
      %v311 = vpop.f32.mrf.mxu0
      %v312 = vadd.f32 %v244, %v311
      %313 = vmatmul.f32.gmra.mxu0 %v271
      %v314 = vpop.f32.mrf.mxu0
      %v315 = vadd.f32 %v247, %v314
      %316 = vmatmul.f32.gmra.mxu0 %v274
      %v317 = vpop.f32.mrf.mxu0
      %v318 = vadd.f32 %v250, %v317
      %319 = vmatmul.f32.gmra.mxu0 %v277
      %v320 = vpop.f32.mrf.mxu0
      %v321 = vadd.f32 %v253, %v320
      %322 = vmatmul.f32.gmra.mxu0 %v280
      %v323 = vpop.f32.mrf.mxu0
      %v324 = vadd.f32 %v256, %v323
      %325 = vmatmul.f32.gmra.mxu0 %v283
      %v326 = vpop.f32.mrf.mxu0
      %v327 = vadd.f32 %v259, %v326
      %328 = vdwg.mxu0
      %s329 = scalar_lea.vmem %s165, 16
      %v330 = vld [vmem:[%s329] sm:$0xff]
      %v331 = vld [vmem:[%s329 + $0x10] sm:$0xff]
      %v332 = vld [vmem:[%s329 + $0x20] sm:$0xff]
      %v333 = vld [vmem:[%s329 + $0x30] sm:$0xff]
      %v334 = vld [vmem:[%s329 + $0x40] sm:$0xff]
      %v335 = vld [vmem:[%s329 + $0x50] sm:$0xff]
      %v336 = vld [vmem:[%s329 + $0x60] sm:$0xff]
      %v337 = vld [vmem:[%s329 + $0x70] sm:$0xff]
      %s338 = scalar_lea.vmem %s1, 8
      %v339 = vld [vmem:[%s338] sm:$0xf]
      %v341 = vsel %vm191, %v330, 0
      %v344 = vsel %vm191, %v331, 0
      %v347 = vsel %vm191, %v332, 0
      %v350 = vsel %vm191, %v333, 0
      %v353 = vsel %vm191, %v334, 0
      %v356 = vsel %vm191, %v335, 0
      %v359 = vsel %vm191, %v336, 0
      %v362 = vsel %vm191, %v337, 0
      %v365 = vsel %vm216, %v339, 0
      %367 = vmatpush.msra.mxu0 0.0
      %368 = vmatpush.msra.mxu0 0.0
      %369 = vmatpush.msra.mxu0 0.0
      %370 = vmatpush.msra.mxu0 0.0
      %371 = vmatpush.msra.mxu0 0.0
      %372 = vmatpush.msra.mxu0 0.0
      %373 = vmatpush.msra.mxu0 0.0
      %374 = vmatpush.msra.mxu0 0.0
      %375 = vmatpush.msra.mxu0 0.0
      %376 = vmatpush.msra.mxu0 0.0
      %377 = vmatpush.msra.mxu0 0.0
      %378 = vmatpush.msra.mxu0 0.0
      %379 = vmatpush.msra.mxu0 0.0
      %380 = vmatpush.msra.mxu0 0.0
      %381 = vmatpush.msra.mxu0 0.0
      %382 = vmatpush.msra.mxu0 %v365
      %383 = vmatmul.f32.gmra.mxu0 %v341
      %v384 = vpop.f32.mrf.mxu0
      %v385 = vadd.f32 0.0, %v384
      %386 = vmatmul.f32.gmra.mxu0 %v344
      %v387 = vpop.f32.mrf.mxu0
      %v388 = vadd.f32 0.0, %v387
      %389 = vmatmul.f32.gmra.mxu0 %v347
      %v390 = vpop.f32.mrf.mxu0
      %v391 = vadd.f32 0.0, %v390
      %392 = vmatmul.f32.gmra.mxu0 %v350
      %v393 = vpop.f32.mrf.mxu0
      %v394 = vadd.f32 0.0, %v393
      %395 = vmatmul.f32.gmra.mxu0 %v353
      %v396 = vpop.f32.mrf.mxu0
      %v397 = vadd.f32 0.0, %v396
      %398 = vmatmul.f32.gmra.mxu0 %v356
      %v399 = vpop.f32.mrf.mxu0
      %v400 = vadd.f32 0.0, %v399
      %401 = vmatmul.f32.gmra.mxu0 %v359
      %v402 = vpop.f32.mrf.mxu0
      %v403 = vadd.f32 0.0, %v402
      %404 = vmatmul.f32.gmra.mxu0 %v362
      %v405 = vpop.f32.mrf.mxu0
      %v406 = vadd.f32 0.0, %v405
      %407 = vdwg.mxu0
      %v408 = vadd.f32 %v306, %v385
      %v409 = vadd.f32 %v309, %v388
      %v410 = vadd.f32 %v312, %v391
      %v411 = vadd.f32 %v315, %v394
      %v412 = vadd.f32 %v318, %v397
      %v413 = vadd.f32 %v321, %v400
      %v414 = vadd.f32 %v324, %v403
      %v415 = vadd.f32 %v327, %v406
      %v416 = vld [vmem:[%s329 + $0x1] sm:$0xff]
      %v417 = vld [vmem:[%s329 + $0x11] sm:$0xff]
      %v418 = vld [vmem:[%s329 + $0x21] sm:$0xff]
      %v419 = vld [vmem:[%s329 + $0x31] sm:$0xff]
      %v420 = vld [vmem:[%s329 + $0x41] sm:$0xff]
      %v421 = vld [vmem:[%s329 + $0x51] sm:$0xff]
      %v422 = vld [vmem:[%s329 + $0x61] sm:$0xff]
      %v423 = vld [vmem:[%s329 + $0x71] sm:$0xff]
      %s424 = scalar_lea.vmem %s1, 12
      %v425 = vld [vmem:[%s424] sm:$0xf]
      %v427 = vsel %vm191, %v416, 0
      %v430 = vsel %vm191, %v417, 0
      %v433 = vsel %vm191, %v418, 0
      %v436 = vsel %vm191, %v419, 0
      %v439 = vsel %vm191, %v420, 0
      %v442 = vsel %vm191, %v421, 0
      %v445 = vsel %vm191, %v422, 0
      %v448 = vsel %vm191, %v423, 0
      %v451 = vsel %vm216, %v425, 0
      %453 = vmatpush.msra.mxu0 0.0
      %454 = vmatpush.msra.mxu0 0.0
      %455 = vmatpush.msra.mxu0 0.0
      %456 = vmatpush.msra.mxu0 0.0
      %457 = vmatpush.msra.mxu0 0.0
      %458 = vmatpush.msra.mxu0 0.0
      %459 = vmatpush.msra.mxu0 0.0
      %460 = vmatpush.msra.mxu0 0.0
      %461 = vmatpush.msra.mxu0 0.0
      %462 = vmatpush.msra.mxu0 0.0
      %463 = vmatpush.msra.mxu0 0.0
      %464 = vmatpush.msra.mxu0 0.0
      %465 = vmatpush.msra.mxu0 0.0
      %466 = vmatpush.msra.mxu0 0.0
      %467 = vmatpush.msra.mxu0 0.0
      %468 = vmatpush.msra.mxu0 %v451
      %469 = vmatmul.f32.gmra.mxu0 %v427
      %v470 = vpop.f32.mrf.mxu0
      %v471 = vadd.f32 0.0, %v470
      %472 = vmatmul.f32.gmra.mxu0 %v430
      %v473 = vpop.f32.mrf.mxu0
      %v474 = vadd.f32 0.0, %v473
      %475 = vmatmul.f32.gmra.mxu0 %v433
      %v476 = vpop.f32.mrf.mxu0
      %v477 = vadd.f32 0.0, %v476
      %478 = vmatmul.f32.gmra.mxu0 %v436
      %v479 = vpop.f32.mrf.mxu0
      %v480 = vadd.f32 0.0, %v479
      %481 = vmatmul.f32.gmra.mxu0 %v439
      %v482 = vpop.f32.mrf.mxu0
      %v483 = vadd.f32 0.0, %v482
      %484 = vmatmul.f32.gmra.mxu0 %v442
      %v485 = vpop.f32.mrf.mxu0
      %v486 = vadd.f32 0.0, %v485
      %487 = vmatmul.f32.gmra.mxu0 %v445
      %v488 = vpop.f32.mrf.mxu0
      %v489 = vadd.f32 0.0, %v488
      %490 = vmatmul.f32.gmra.mxu0 %v448
      %v491 = vpop.f32.mrf.mxu0
      %v492 = vadd.f32 0.0, %v491
      %493 = vdwg.mxu0
      %v494 = vadd.f32 %v408, %v471
      %v495 = vadd.f32 %v409, %v474
      %v496 = vadd.f32 %v410, %v477
      %v497 = vadd.f32 %v411, %v480
      %v498 = vadd.f32 %v412, %v483
      %v499 = vadd.f32 %v413, %v486
      %v500 = vadd.f32 %v414, %v489
      %v501 = vadd.f32 %v415, %v492
      %v502 = vld [vmem:[%s2] sm:$0x1]
      %v504 = vperm.slane %v502, 0
      %v506 = vadd.f32 %v494, %v504
      %v507 = vadd.f32 %v495, %v504
      %v508 = vadd.f32 %v496, %v504
      %v509 = vadd.f32 %v497, %v504
      %v510 = vadd.f32 %v498, %v504
      %v511 = vadd.f32 %v499, %v504
      %v512 = vadd.f32 %v500, %v504
      %v513 = vadd.f32 %v501, %v504
      %514 = vst [vmem:[%s170] sm:$0xf] 0
      %515 = vst [vmem:[%s170 + $0x4] sm:$0x1] 0
      %516 = vst [vmem:[%s170 + $0x8] sm:$0xf] 0
      %517 = vst [vmem:[%s170 + $0xc] sm:$0x1] 0
      %518 = vst [vmem:[%s170 + $0x10] sm:$0xf] 0
      %519 = vst [vmem:[%s170 + $0x14] sm:$0x1] 0
      %520 = vst [vmem:[%s170 + $0x18] sm:$0xf] 0
      %521 = vst [vmem:[%s170 + $0x1c] sm:$0x1] 0
      %522 = vst [vmem:[%s170 + $0x20] sm:$0xf] 0
      %523 = vst [vmem:[%s170 + $0x24] sm:$0x1] 0
      %524 = vst [vmem:[%s170 + $0x28] sm:$0xf] 0
      %525 = vst [vmem:[%s170 + $0x2c] sm:$0x1] 0
      %526 = vst [vmem:[%s170 + $0x30] sm:$0xf] 0
      %527 = vst [vmem:[%s170 + $0x34] sm:$0x1] 0
      %528 = vst [vmem:[%s170 + $0x38] sm:$0xf] 0
      %529 = vst [vmem:[%s170 + $0x3c] sm:$0x1] 0
      %530 = vst [vmem:[%s170 + $0x40] sm:$0xf] 0
      %531 = vst [vmem:[%s170 + $0x44] sm:$0x1] 0
      %532 = vst [vmem:[%s170 + $0x48] sm:$0xf] 0
      %533 = vst [vmem:[%s170 + $0x4c] sm:$0x1] 0
      %v534 = vpack.c.bf16 %v506, %v506
      %v535 = vpack.c.bf16 %v507, %v507
      %v536 = vpack.c.bf16 %v508, %v508
      %v537 = vpack.c.bf16 %v509, %v509
      %v538 = vpack.c.bf16 %v510, %v510
      %v539 = vpack.c.bf16 %v511, %v511
      %v540 = vpack.c.bf16 %v512, %v512
      %v541 = vpack.c.bf16 %v513, %v513
      %v543 = vshrl.u32 %v534, 16
      %v545 = vrot.slane %v543, 7
      %v546 = vshll.u32 %v534, 16
      %v548 = vor.u32 %v545, %v546
      %v549 = vrot.slane %v545, 4
      %v551 = vshrl.u32 %v535, 16
      %v553 = vrot.slane %v551, 7
      %v554 = vshll.u32 %v535, 16
      %v556 = vor.u32 %v553, %v554
      %v557 = vrot.slane %v553, 4
      %v559 = vshrl.u32 %v536, 16
      %v561 = vrot.slane %v559, 7
      %v562 = vshll.u32 %v536, 16
      %v564 = vor.u32 %v561, %v562
      %v565 = vrot.slane %v561, 4
      %v567 = vshrl.u32 %v537, 16
      %v569 = vrot.slane %v567, 7
      %v570 = vshll.u32 %v537, 16
      %v572 = vor.u32 %v569, %v570
      %v573 = vrot.slane %v569, 4
      %v575 = vshrl.u32 %v538, 16
      %v577 = vrot.slane %v575, 7
      %v578 = vshll.u32 %v538, 16
      %v580 = vor.u32 %v577, %v578
      %v581 = vrot.slane %v577, 4
      %v583 = vshrl.u32 %v539, 16
      %v585 = vrot.slane %v583, 7
      %v586 = vshll.u32 %v539, 16
      %v588 = vor.u32 %v585, %v586
      %v589 = vrot.slane %v585, 4
      %v591 = vshrl.u32 %v540, 16
      %v593 = vrot.slane %v591, 7
      %v594 = vshll.u32 %v540, 16
      %v596 = vor.u32 %v593, %v594
      %v597 = vrot.slane %v593, 4
      %v599 = vshrl.u32 %v541, 16
      %v601 = vrot.slane %v599, 7
      %v602 = vshll.u32 %v541, 16
      %v604 = vor.u32 %v601, %v602
      %v605 = vrot.slane %v601, 4
      %s622 = scalar_lea.vmem %s170, 8
      %vm623 = vcmask 1043456
      %vm624 = vsmask.f32 7938
      %vm625 = vmand %vm623, %vm624
      %v626 = vld [vmem:[%s622] sm:$0xf]
      %v627 = vsel %vm625, %v548, %v626
      %628 = vst [vmem:[%s622] sm:$0xf] %v627
      %vm629 = vcmask 1040384
      %vm630 = vsmask.f32 256
      %vm631 = vmand %vm629, %vm630
      %v632 = vld [vmem:[%s622 + $0x4] sm:$0x1]
      %v633 = vsel %vm631, %v549, %v632
      %634 = vst [vmem:[%s622 + $0x4] sm:$0x1] %v633
      %v635 = vld [vmem:[%s622 + $0x8] sm:$0xf]
      %v636 = vsel %vm625, %v556, %v635
      %637 = vst [vmem:[%s622 + $0x8] sm:$0xf] %v636
      %v638 = vld [vmem:[%s622 + $0xc] sm:$0x1]
      %v639 = vsel %vm631, %v557, %v638
      %640 = vst [vmem:[%s622 + $0xc] sm:$0x1] %v639
      %v641 = vld [vmem:[%s622 + $0x10] sm:$0xf]
      %v642 = vsel %vm625, %v564, %v641
      %643 = vst [vmem:[%s622 + $0x10] sm:$0xf] %v642
      %v644 = vld [vmem:[%s622 + $0x14] sm:$0x1]
      %v645 = vsel %vm631, %v565, %v644
      %646 = vst [vmem:[%s622 + $0x14] sm:$0x1] %v645
      %v647 = vld [vmem:[%s622 + $0x18] sm:$0xf]
      %v648 = vsel %vm625, %v572, %v647
      %649 = vst [vmem:[%s622 + $0x18] sm:$0xf] %v648
      %v650 = vld [vmem:[%s622 + $0x1c] sm:$0x1]
      %v651 = vsel %vm631, %v573, %v650
      %652 = vst [vmem:[%s622 + $0x1c] sm:$0x1] %v651
      %v653 = vld [vmem:[%s622 + $0x20] sm:$0xf]
      %v654 = vsel %vm625, %v580, %v653
      %655 = vst [vmem:[%s622 + $0x20] sm:$0xf] %v654
      %v656 = vld [vmem:[%s622 + $0x24] sm:$0x1]
      %v657 = vsel %vm631, %v581, %v656
      %658 = vst [vmem:[%s622 + $0x24] sm:$0x1] %v657
      %v659 = vld [vmem:[%s622 + $0x28] sm:$0xf]
      %v660 = vsel %vm625, %v588, %v659
      %661 = vst [vmem:[%s622 + $0x28] sm:$0xf] %v660
      %v662 = vld [vmem:[%s622 + $0x2c] sm:$0x1]
      %v663 = vsel %vm631, %v589, %v662
      %664 = vst [vmem:[%s622 + $0x2c] sm:$0x1] %v663
      %v665 = vld [vmem:[%s622 + $0x30] sm:$0xf]
      %v666 = vsel %vm625, %v596, %v665
      %667 = vst [vmem:[%s622 + $0x30] sm:$0xf] %v666
      %v668 = vld [vmem:[%s622 + $0x34] sm:$0x1]
      %v669 = vsel %vm631, %v597, %v668
      %670 = vst [vmem:[%s622 + $0x34] sm:$0x1] %v669
      %v671 = vld [vmem:[%s622 + $0x38] sm:$0xf]
      %v672 = vsel %vm625, %v604, %v671
      %673 = vst [vmem:[%s622 + $0x38] sm:$0xf] %v672
      %v674 = vld [vmem:[%s622 + $0x3c] sm:$0x1]
      %v675 = vsel %vm631, %v605, %v674
      %676 = vst [vmem:[%s622 + $0x3c] sm:$0x1] %v675
      %p677 = scmp.lt.s32.totalorder %s14, 1
      %s678 = scalar_select %p677, %s14, 1
      %s679 = smul.addr %s678, 20
      %s680 = smul.addr %s679, 4
      %s681 = scalar_lea.vmem %s3, %s680
      // Predicated region
      $region33: #{encoder_forward.2} parent=31 // pred_check
        %p682 = pneg %p100
      $region34: #{encoder_forward.2} parent=31 // pred_check_branch
        %684 = sbr.rel (%p682) target = $region36
      $region35: #{encoder_forward.2} parent=31 // pred_region
        _
      $region36: #{encoder_forward.2} parent=31 // pred_fallthru
        _
    $region32: #{encoder_forward.2} parent=5 // pred_fallthru
      _
    %p685 = scmp.le.s32.totalorder 2, %s9
    // Predicated region
    $region37: #{encoder_forward.2} parent=5 // pred_check
      %p686 = pneg %p685
    $region38: #{encoder_forward.2} parent=5 // pred_check_branch
      %688 = sbr.rel (%p686) target = $region40
    $region39: #{encoder_forward.2} parent=5 // pred_region
      %s689 = ssub.s32 %s9, 2
      // Predicated region
      $region41: #{encoder_forward.2} parent=39 // pred_check
        %p690 = pneg %p106
      $region42: #{encoder_forward.2} parent=39 // pred_check_branch
        %692 = sbr.rel (%p690) target = $region44
      $region43: #{encoder_forward.2} parent=39 // pred_region
        %p693 = scmp.lt.s32.totalorder %s15, 1
        %s694 = scalar_select %p693, %s15, 1
        %s695 = smul.addr %s694, 20
        %s696 = smul.addr %s695, 4
        %s697 = scalar_lea.vmem %s3, %s696
      $region44: #{encoder_forward.2} parent=39 // pred_fallthru
        _
    $region40: #{encoder_forward.2} parent=5 // pred_fallthru
      _
  $region6: #{encoder_forward.2} parent=0 // loop_footer
    %s13 = sadd.s32 1, %s9
  $region7: #{encoder_forward.2} parent=0 // loop_footer_branch
    %8 = sbr.rel target = $region3
  $region8: #{encoder_forward.2} parent=0 // loop_exit
    _

// kernel: encoder_forward.3
$region0: #{encoder_forward.3}
  #allocation0 [shape = 'u32[]', space=smem, size = 0x4, offset = 0x4, fixed_abs, tag = 'smem constant byte address 0x4 - core index']
  #allocation1 [shape = 'u32[72,128]{1,0:T(1,128)}', space=vmem, size = 0x9000, scoped, tag = 'internal scratch']
  #allocation2 [shape = 'bf16[6,6,128]{2,1,0:T(8,128)(2,1)}', space=vmem, size = 0x3000, scoped, tag = 'scratch operand']
  #allocation3 [shape = 'f32[1,1]{1,0:T(1,128)S(1)}', space=vmem, size = 0x200, scoped, tag = 'scoped memory for encoder_forward.3']
  %s0 = inlined_call_operand.vmem [shape: bf16[2,5,5,512], index: 0, kind: input, shape index: {}]
  %s1 = inlined_call_operand.vmem [shape: bf16[2,2,512,128], index: 1, kind: input, shape index: {}]
  %s2 = inlined_call_operand.vmem [shape: f32[1,128], index: 2, kind: input, shape index: {}]
  %s3 = inlined_call_operand.vmem [shape: bf16[3,3,128,128], index: 3, kind: input, shape index: {}]
  %s4 = inlined_call_operand.vmem [shape: f32[1,128], index: 4, kind: input, shape index: {}]
  %s5 = inlined_call_operand.vmem [shape: f32[1,128], index: 5, kind: input, shape index: {}]
  %s6 = inlined_call_operand.<no memory space> [shape: f32[1,1], index: 6, kind: input, shape index: {}]
  %s7 = inlined_call_operand.hbm [shape: f32[2,16,128], index: 7, kind: output, shape index: {}]
  %s8 = sld [smem:[#allocation0]]
  $region61: #{encoder_forward.3} parent=0
    _
  %s10 = ssub.s32 1, %s8
  %s11 = scalar_select 0, %s10, %s8
  %v12 = vstv %s6
  %13 = vst [vmem:[#allocation3] sm:$0x1] %v12
  $region1: #{encoder_forward.3} parent=0
    #allocation4 [shape = 'u8[16384]{0}', space=vmem, size = 0x4000, scoped, tag = 'output window, operand 0']
    #allocation5 [shape = 's32[2]{0}', space=sflag, size = 0x8, scoped, tag = 'scoped memory for encoder_forward.3']
    %14 = vsyncpa [#allocation5], 0
    %s15 = scalar_lea.sflag [#allocation5], 1
    %16 = vsyncpa %s15, 0
    loop: start=0, step=1, limit=4
    $region2: #{encoder_forward.3} parent=1 // loop_pre_header
      _
    $region3: #{encoder_forward.3} parent=1 // loop_header
      %s18 = sphi 0, %s22
      %p19 = scmp.ge.s32.totalorder %s18, 4
      %s28 = sphi 0, %s30
      %s31 = sphi 0, %s28
      %s32 = sphi 0, %s31
      %s48 = sphi 0, %s32
      %s52 = sphi 0, %s52
      %s54 = sphi 0, %s52
      %s55 = sphi 0, %s54
      %s69 = sphi 0, %s55
      %s73 = sphi 0, %s73
      %s75 = sphi 0, %s73
      %s76 = sphi 0, %s75
      %s90 = sphi 0, %s76
      %s94 = sphi 0, %s94
      %s96 = sphi 0, %s94
      %s97 = sphi 0, %s96
      %s111 = sphi 0, %s97
      %s115 = sphi 0, %s115
      %s117 = sphi 0, %s115
      %s118 = sphi 0, %s117
      %s132 = sphi 0, %s118
      %s136 = sphi 0, %s136
      %s138 = sphi 0, %s136
      %s139 = sphi 0, %s138
      %s153 = sphi 0, %s139
      %s157 = sphi 0, %s157
      %s159 = sphi 0, %s157
      %s160 = sphi 0, %s159
      %s174 = sphi 0, %s160
      %s180 = sphi 0, %s182
      %s183 = sphi 0, %s180
      %s184 = sphi 0, %s183
      %s200 = sphi 0, %s184
    $region4: #{encoder_forward.3} parent=1 // loop_header_branch
      %21 = sbr.rel (%p19) target = $region8
    $region5: #{encoder_forward.3} parent=1 // loop_body
      %s23 = ssub.s32 %s18, 1
      %s24 = ssub.s32 %s18, 2
      %s25 = sadd.s32 %s18, 1
      %s26 = ssub.s32 %s18, %s25
      %p27 = scmp.eq.s32.totalorder %s26, 0
      %s29 = sadd.s32 %s28, 1
      %s30 = scalar_select %p27, %s28, %s29
      %p33 = pneg %p27
      %p34 = scmp.eq.s32.totalorder %s18, 1
      %p35 = por %p33, %p34
      %p36 = scmp.ne.s32.totalorder %s28, %s31
      %p37 = scmp.eq.s32.totalorder %s18, 0
      %p38 = por %p36, %p37
      %p39 = scmp.ne.s32.totalorder %s28, %s31
      %p40 = scmp.eq.s32.totalorder %s23, 1
      %p41 = por %p39, %p40
      %p42 = scmp.ne.s32.totalorder %s31, %s32
      %p43 = scmp.eq.s32.totalorder %s23, 0
      %p44 = por %p42, %p43
      %p45 = scmp.ne.s32.totalorder %s31, %s32
      %p46 = scmp.eq.s32.totalorder %s24, 1
      %p47 = por %p45, %p46
      %p49 = scmp.ne.s32.totalorder %s32, %s48
      %p50 = scmp.eq.s32.totalorder %s24, 0
      %p51 = por %p49, %p50
      %s53 = sadd.s32 %s52, 1
      %p56 = scmp.eq.s32.totalorder %s18, 1
      %p57 = scmp.ne.s32.totalorder %s52, %s54
      %p58 = scmp.eq.s32.totalorder %s18, 0
      %p59 = por %p57, %p58
      %p60 = scmp.ne.s32.totalorder %s52, %s54
      %p61 = scmp.eq.s32.totalorder %s23, 1
      %p62 = por %p60, %p61
      %p63 = scmp.ne.s32.totalorder %s54, %s55
      %p64 = scmp.eq.s32.totalorder %s23, 0
      %p65 = por %p63, %p64
      %p66 = scmp.ne.s32.totalorder %s54, %s55
      %p67 = scmp.eq.s32.totalorder %s24, 1
      %p68 = por %p66, %p67
      %p70 = scmp.ne.s32.totalorder %s55, %s69
      %p71 = scmp.eq.s32.totalorder %s24, 0
      %p72 = por %p70, %p71
      %s74 = sadd.s32 %s73, 1
      %p77 = scmp.eq.s32.totalorder %s18, 1
      %p78 = scmp.ne.s32.totalorder %s73, %s75
      %p79 = scmp.eq.s32.totalorder %s18, 0
      %p80 = por %p78, %p79
      %p81 = scmp.ne.s32.totalorder %s73, %s75
      %p82 = scmp.eq.s32.totalorder %s23, 1
      %p83 = por %p81, %p82
      %p84 = scmp.ne.s32.totalorder %s75, %s76
      %p85 = scmp.eq.s32.totalorder %s23, 0
      %p86 = por %p84, %p85
      %p87 = scmp.ne.s32.totalorder %s75, %s76
      %p88 = scmp.eq.s32.totalorder %s24, 1
      %p89 = por %p87, %p88
      %p91 = scmp.ne.s32.totalorder %s76, %s90
      %p92 = scmp.eq.s32.totalorder %s24, 0
      %p93 = por %p91, %p92
      %s95 = sadd.s32 %s94, 1
      %p98 = scmp.eq.s32.totalorder %s18, 1
      %p99 = scmp.ne.s32.totalorder %s94, %s96
      %p100 = scmp.eq.s32.totalorder %s18, 0
      %p101 = por %p99, %p100
      %p102 = scmp.ne.s32.totalorder %s94, %s96
      %p103 = scmp.eq.s32.totalorder %s23, 1
      %p104 = por %p102, %p103
      %p105 = scmp.ne.s32.totalorder %s96, %s97
      %p106 = scmp.eq.s32.totalorder %s23, 0
      %p107 = por %p105, %p106
      %p108 = scmp.ne.s32.totalorder %s96, %s97
      %p109 = scmp.eq.s32.totalorder %s24, 1
      %p110 = por %p108, %p109
      %p112 = scmp.ne.s32.totalorder %s97, %s111
      %p113 = scmp.eq.s32.totalorder %s24, 0
      %p114 = por %p112, %p113
      %s116 = sadd.s32 %s115, 1
      %p119 = scmp.eq.s32.totalorder %s18, 1
      %p120 = scmp.ne.s32.totalorder %s115, %s117
      %p121 = scmp.eq.s32.totalorder %s18, 0
      %p122 = por %p120, %p121
      %p123 = scmp.ne.s32.totalorder %s115, %s117
      %p124 = scmp.eq.s32.totalorder %s23, 1
      %p125 = por %p123, %p124
      %p126 = scmp.ne.s32.totalorder %s117, %s118
      %p127 = scmp.eq.s32.totalorder %s23, 0
      %p128 = por %p126, %p127
      %p129 = scmp.ne.s32.totalorder %s117, %s118
      %p130 = scmp.eq.s32.totalorder %s24, 1
      %p131 = por %p129, %p130
      %p133 = scmp.ne.s32.totalorder %s118, %s132
      %p134 = scmp.eq.s32.totalorder %s24, 0
      %p135 = por %p133, %p134
      %s137 = sadd.s32 %s136, 1
      %p140 = scmp.eq.s32.totalorder %s18, 1
      %p141 = scmp.ne.s32.totalorder %s136, %s138
      %p142 = scmp.eq.s32.totalorder %s18, 0
      %p143 = por %p141, %p142
      %p144 = scmp.ne.s32.totalorder %s136, %s138
      %p145 = scmp.eq.s32.totalorder %s23, 1
      %p146 = por %p144, %p145
      %p147 = scmp.ne.s32.totalorder %s138, %s139
      %p148 = scmp.eq.s32.totalorder %s23, 0
      %p149 = por %p147, %p148
      %p150 = scmp.ne.s32.totalorder %s138, %s139
      %p151 = scmp.eq.s32.totalorder %s24, 1
      %p152 = por %p150, %p151
      %p154 = scmp.ne.s32.totalorder %s139, %s153
      %p155 = scmp.eq.s32.totalorder %s24, 0
      %p156 = por %p154, %p155
      %s158 = sadd.s32 %s157, 1
      %p161 = scmp.eq.s32.totalorder %s18, 1
      %p162 = scmp.ne.s32.totalorder %s157, %s159
      %p163 = scmp.eq.s32.totalorder %s18, 0
      %p164 = por %p162, %p163
      %p165 = scmp.ne.s32.totalorder %s157, %s159
      %p166 = scmp.eq.s32.totalorder %s23, 1
      %p167 = por %p165, %p166
      %p168 = scmp.ne.s32.totalorder %s159, %s160
      %p169 = scmp.eq.s32.totalorder %s23, 0
      %p170 = por %p168, %p169
      %p171 = scmp.ne.s32.totalorder %s159, %s160
      %p172 = scmp.eq.s32.totalorder %s24, 1
      %p173 = por %p171, %p172
      %p175 = scmp.ne.s32.totalorder %s160, %s174
      %p176 = scmp.eq.s32.totalorder %s24, 0
      %p177 = por %p175, %p176
      %s178 = ssub.s32 %s18, %s25
      %p179 = scmp.eq.s32.totalorder %s178, 0
      %s181 = sadd.s32 %s180, 1
      %s182 = scalar_select %p179, %s180, %s181
      %p185 = pneg %p179
      %p186 = scmp.eq.s32.totalorder %s18, 1
      %p187 = por %p185, %p186
      %p188 = scmp.ne.s32.totalorder %s180, %s183
      %p189 = scmp.eq.s32.totalorder %s18, 0
      %p190 = por %p188, %p189
      %p191 = scmp.ne.s32.totalorder %s180, %s183
      %p192 = scmp.eq.s32.totalorder %s23, 1
      %p193 = por %p191, %p192
      %p194 = scmp.ne.s32.totalorder %s183, %s184
      %p195 = scmp.eq.s32.totalorder %s23, 0
      %p196 = por %p194, %p195
      %p197 = scmp.ne.s32.totalorder %s183, %s184
      %p198 = scmp.eq.s32.totalorder %s24, 1
      %p199 = por %p197, %p198
      %p201 = scmp.ne.s32.totalorder %s184, %s200
      %p202 = scmp.eq.s32.totalorder %s24, 0
      %p203 = por %p201, %p202
      %p204 = scmp.le.s32.totalorder 1, %s18
      %p205 = scmp.lt.s32.totalorder %s18, 3
      %p206 = pnand %p204, %p205
      %p207 = pneg %p206
      // Predicated region
      $region9: #{encoder_forward.3} parent=5 // pred_check
        _
      $region10: #{encoder_forward.3} parent=5 // pred_check_branch
        %209 = sbr.rel (%p206) target = $region12
      $region11: #{encoder_forward.3} parent=5 // pred_region
        %s210 = ssub.s32 %s18, 1
        // Predicated region
        $region13: #{encoder_forward.3} parent=11 // pred_check
          %p211 = pneg %p65
        $region14: #{encoder_forward.3} parent=11 // pred_check_branch
          %213 = sbr.rel (%p211) target = $region16
        $region15: #{encoder_forward.3} parent=11 // pred_region
          _
        $region16: #{encoder_forward.3} parent=11 // pred_fallthru
          _
        // Predicated region
        $region17: #{encoder_forward.3} parent=11 // pred_check
          %p214 = pneg %p86
        $region18: #{encoder_forward.3} parent=11 // pred_check_branch
          %216 = sbr.rel (%p214) target = $region20
        $region19: #{encoder_forward.3} parent=11 // pred_region
          _
        $region20: #{encoder_forward.3} parent=11 // pred_fallthru
          _
        // Predicated region
        $region21: #{encoder_forward.3} parent=11 // pred_check
          %p217 = pneg %p107
        $region22: #{encoder_forward.3} parent=11 // pred_check_branch
          %219 = sbr.rel (%p217) target = $region24
        $region23: #{encoder_forward.3} parent=11 // pred_region
          _
        $region24: #{encoder_forward.3} parent=11 // pred_fallthru
          _
        // Predicated region
        $region25: #{encoder_forward.3} parent=11 // pred_check
          %p220 = pneg %p128
        $region26: #{encoder_forward.3} parent=11 // pred_check_branch
          %222 = sbr.rel (%p220) target = $region28
        $region27: #{encoder_forward.3} parent=11 // pred_region
          _
        $region28: #{encoder_forward.3} parent=11 // pred_fallthru
          _
        // Predicated region
        $region29: #{encoder_forward.3} parent=11 // pred_check
          %p223 = pneg %p149
        $region30: #{encoder_forward.3} parent=11 // pred_check_branch
          %225 = sbr.rel (%p223) target = $region32
        $region31: #{encoder_forward.3} parent=11 // pred_region
          _
        $region32: #{encoder_forward.3} parent=11 // pred_fallthru
          _
        // Predicated region
        $region33: #{encoder_forward.3} parent=11 // pred_check
          %p226 = pneg %p170
        $region34: #{encoder_forward.3} parent=11 // pred_check_branch
          %228 = sbr.rel (%p226) target = $region36
        $region35: #{encoder_forward.3} parent=11 // pred_region
          _
        $region36: #{encoder_forward.3} parent=11 // pred_fallthru
          _
      $region12: #{encoder_forward.3} parent=5 // pred_fallthru
        _
      %p229 = scmp.lt.s32.totalorder %s18, 2
      // Predicated region
      $region37: #{encoder_forward.3} parent=5 // pred_check
        %p230 = pneg %p229
      $region38: #{encoder_forward.3} parent=5 // pred_check_branch
        %232 = sbr.rel (%p230) target = $region40
      $region39: #{encoder_forward.3} parent=5 // pred_region
        // Predicated region
        $region41: #{encoder_forward.3} parent=39 // pred_check
          %p233 = pneg %p38
        $region42: #{encoder_forward.3} parent=39 // pred_check_branch
          %235 = sbr.rel (%p233) target = $region44
        $region43: #{encoder_forward.3} parent=39 // pred_region
          %p236 = scmp.lt.s32.totalorder %s18, 1
          %s237 = scalar_select %p236, %s18, 1
          %s238 = smul.addr %s237, 20
          %s239 = smul.addr %s238, 4
          %s240 = scalar_lea.vmem %s0, %s239
        $region44: #{encoder_forward.3} parent=39 // pred_fallthru
          _
      $region40: #{encoder_forward.3} parent=5 // pred_fallthru
        _
      %p241 = scmp.le.s32.totalorder 1, %s18
      %p242 = scmp.lt.s32.totalorder %s18, 3
      %p243 = pnand %p241, %p242
      %p244 = pneg %p243
      // Predicated region
      $region45: #{encoder_forward.3} parent=5 // pred_check
        _
      $region46: #{encoder_forward.3} parent=5 // pred_check_branch
        %246 = sbr.rel (%p243) target = $region48
      $region47: #{encoder_forward.3} parent=5 // pred_region
        %s247 = ssub.s32 %s18, 1
        %p248 = scmp.lt.s32.totalorder %s23, 1
        %s249 = scalar_select %p248, %s23, 1
        %s250 = smul.addr %s249, 20
        %s251 = smul.addr %s250, 4
        %s252 = scalar_lea.vmem %s0, %s251
        %p253 = pneg %p44
        %p254 = pneg %p41
        %p255 = pneg %p65
        %p256 = pneg %p62
        %p257 = pneg %p86
        %p258 = pneg %p83
        %p259 = pneg %p107
        %p260 = pneg %p104
        %p261 = pneg %p128
        %p262 = pneg %p125
        %p263 = pneg %p149
        %p264 = pneg %p146
        %p265 = pneg %p170
        %p266 = pneg %p167
        %p267 = pneg %p196
        %p268 = pneg %p193
        %s269 = sand.u32 %s183, 1
        %s270 = scalar_lea.sflag [#allocation5], %s269
        %s271 = sand.u32 %s183, 1
        %s272 = smul.addr %s271, 16
        %s273 = scalar_lea.vmem [#allocation4], %s272
        %p274 = scmp.lt.s32.totalorder %s23, 1
        %s275 = scalar_select %p274, %s23, 1
        %s276 = smul.addr %s275, 20
        %s277 = smul.addr %s276, 4
        %s278 = scalar_lea.vmem %s0, %s277
        %v280 = vld [vmem:[%s278] sm:$0x33]
        %v281 = vld [vmem:[%s278 + $0x8] sm:$0x33]
        %v282 = vld [vmem:[%s278 + $0x10] sm:$0x33]
        %v283 = vld [vmem:[%s278 + $0x18] sm:$0x33]
        %v284 = vld [vmem:[%s278 + $0x20] sm:$0x33]
        %v285 = vld [vmem:[%s278 + $0x28] sm:$0x33]
        %v286 = vld [vmem:[%s278 + $0x30] sm:$0x33]
        %v287 = vld [vmem:[%s278 + $0x38] sm:$0x33]
        %v296 = vrot.slane %v280, 2
        %v297 = vrot.slane %v281, 4
        %v298 = vrot.slane %v281, 6
        %v299 = vrot.slane %v282, 2
        %v300 = vrot.slane %v283, 4
        %v301 = vrot.slane %v283, 6
        %v302 = vrot.slane %v284, 2
        %v303 = vrot.slane %v285, 4
        %v304 = vrot.slane %v285, 6
        %v305 = vrot.slane %v286, 2
        %v306 = vrot.slane %v287, 4
        %v307 = vrot.slane %v287, 6
        %vm308 = vcmask 1041408
        %v311 = vsel %vm308, %v280, %v296
        %vm312 = vcmask 1045508
        %v315 = vsel %vm312, %v297, %v298
        %vm316 = vcmask 1043456
        %v317 = vsel %vm316, %v311, %v315
        %v320 = vsel %vm308, %v282, %v299
        %v323 = vsel %vm312, %v300, %v301
        %v324 = vsel %vm316, %v320, %v323
        %v327 = vsel %vm308, %v284, %v302
        %v330 = vsel %vm312, %v303, %v304
        %v331 = vsel %vm316, %v327, %v330
        %v334 = vsel %vm308, %v286, %v305
        %v337 = vsel %vm312, %v306, %v307
        %v338 = vsel %vm316, %v334, %v337
        %v339 = vld [vmem:[%s1] sm:$0xf]
        %v340 = vld [vmem:[%s1 + $0x4] sm:$0xf]
        %v341 = vld [vmem:[%s1 + $0x8] sm:$0xf]
        %v342 = vld [vmem:[%s1 + $0xc] sm:$0xf]
        %v343 = vld [vmem:[%s1 + $0x10] sm:$0xf]
        %v344 = vld [vmem:[%s1 + $0x14] sm:$0xf]
        %v345 = vld [vmem:[%s1 + $0x18] sm:$0xf]
        %v346 = vld [vmem:[%s1 + $0x1c] sm:$0xf]
        %v347 = vld [vmem:[%s1 + $0x20] sm:$0xf]
        %v348 = vld [vmem:[%s1 + $0x24] sm:$0xf]
        %v349 = vld [vmem:[%s1 + $0x28] sm:$0xf]
        %v350 = vld [vmem:[%s1 + $0x2c] sm:$0xf]
        %v351 = vld [vmem:[%s1 + $0x30] sm:$0xf]
        %v352 = vld [vmem:[%s1 + $0x34] sm:$0xf]
        %v353 = vld [vmem:[%s1 + $0x38] sm:$0xf]
        %v354 = vld [vmem:[%s1 + $0x3c] sm:$0xf]
        %v355 = vld [vmem:[%s1 + $0x40] sm:$0xf]
        %v356 = vld [vmem:[%s1 + $0x44] sm:$0xf]
        %v357 = vld [vmem:[%s1 + $0x48] sm:$0xf]
        %v358 = vld [vmem:[%s1 + $0x4c] sm:$0xf]
        %v359 = vld [vmem:[%s1 + $0x50] sm:$0xf]
        %v360 = vld [vmem:[%s1 + $0x54] sm:$0xf]
        %v361 = vld [vmem:[%s1 + $0x58] sm:$0xf]
        %v362 = vld [vmem:[%s1 + $0x5c] sm:$0xf]
        %v363 = vld [vmem:[%s1 + $0x60] sm:$0xf]
        %v364 = vld [vmem:[%s1 + $0x64] sm:$0xf]
        %v365 = vld [vmem:[%s1 + $0x68] sm:$0xf]
        %v366 = vld [vmem:[%s1 + $0x6c] sm:$0xf]
        %v367 = vld [vmem:[%s1 + $0x70] sm:$0xf]
        %v368 = vld [vmem:[%s1 + $0x74] sm:$0xf]
        %v369 = vld [vmem:[%s1 + $0x78] sm:$0xf]
        %v370 = vld [vmem:[%s1 + $0x7c] sm:$0xf]
        %v371 = vld [vmem:[%s1 + $0x80] sm:$0xf]
        %v372 = vld [vmem:[%s1 + $0x84] sm:$0xf]
        %v373 = vld [vmem:[%s1 + $0x88] sm:$0xf]
        %v374 = vld [vmem:[%s1 + $0x8c] sm:$0xf]
        %v375 = vld [vmem:[%s1 + $0x90] sm:$0xf]
        %v376 = vld [vmem:[%s1 + $0x94] sm:$0xf]
        %v377 = vld [vmem:[%s1 + $0x98] sm:$0xf]
        %v378 = vld [vmem:[%s1 + $0x9c] sm:$0xf]
        %v379 = vld [vmem:[%s1 + $0xa0] sm:$0xf]
        %v380 = vld [vmem:[%s1 + $0xa4] sm:$0xf]
        %v381 = vld [vmem:[%s1 + $0xa8] sm:$0xf]
        %v382 = vld [vmem:[%s1 + $0xac] sm:$0xf]
        %v383 = vld [vmem:[%s1 + $0xb0] sm:$0xf]
        %v384 = vld [vmem:[%s1 + $0xb4] sm:$0xf]
        %v385 = vld [vmem:[%s1 + $0xb8] sm:$0xf]
        %v386 = vld [vmem:[%s1 + $0xbc] sm:$0xf]
        %v387 = vld [vmem:[%s1 + $0xc0] sm:$0xf]
        %v388 = vld [vmem:[%s1 + $0xc4] sm:$0xf]
        %v389 = vld [vmem:[%s1 + $0xc8] sm:$0xf]
        %v390 = vld [vmem:[%s1 + $0xcc] sm:$0xf]
        %v391 = vld [vmem:[%s1 + $0xd0] sm:$0xf]
        %v392 = vld [vmem:[%s1 + $0xd4] sm:$0xf]
        %v393 = vld [vmem:[%s1 + $0xd8] sm:$0xf]
        %v394 = vld [vmem:[%s1 + $0xdc] sm:$0xf]
        %v395 = vld [vmem:[%s1 + $0xe0] sm:$0xf]
        %v396 = vld [vmem:[%s1 + $0xe4] sm:$0xf]
        %v397 = vld [vmem:[%s1 + $0xe8] sm:$0xf]
        %v398 = vld [vmem:[%s1 + $0xec] sm:$0xf]
        %v399 = vld [vmem:[%s1 + $0xf0] sm:$0xf]
        %v400 = vld [vmem:[%s1 + $0xf4] sm:$0xf]
        %v401 = vld [vmem:[%s1 + $0xf8] sm:$0xf]
        %v402 = vld [vmem:[%s1 + $0xfc] sm:$0xf]
        %v403 = vld [vmem:[%s278] sm:$0x77]
        %v404 = vld [vmem:[%s278 + $0x8] sm:$0x77]
        %v405 = vld [vmem:[%s278 + $0x10] sm:$0x77]
        %v406 = vld [vmem:[%s278 + $0x18] sm:$0x77]
        %v407 = vld [vmem:[%s278 + $0x20] sm:$0x77]
        %v408 = vld [vmem:[%s278 + $0x28] sm:$0x77]
        %v409 = vld [vmem:[%s278 + $0x30] sm:$0x77]
        %v410 = vld [vmem:[%s278 + $0x38] sm:$0x77]
        %v419 = vrot.slane %v403, 2
        %v420 = vrot.slane %v404, 4
        %v421 = vrot.slane %v404, 6
        %v422 = vrot.slane %v405, 2
        %v423 = vrot.slane %v406, 4
        %v424 = vrot.slane %v406, 6
        %v425 = vrot.slane %v407, 2
        %v426 = vrot.slane %v408, 4
        %v427 = vrot.slane %v408, 6
        %v428 = vrot.slane %v409, 2
        %v429 = vrot.slane %v410, 4
        %v430 = vrot.slane %v410, 6
        %v433 = vsel %vm308, %v403, %v419
        %v436 = vsel %vm312, %v420, %v421
        %v437 = vsel %vm316, %v433, %v436
        %vm438 = vcmask 1043458
        %v439 = vsel %vm438, %v403, %v419
        %vm440 = vcmask 1045504
        %v441 = vsel %vm440, %v421, %v420
        %vm442 = vcmask 1045506
        %v443 = vsel %vm442, %v439, %v441
        %v445 = vrot.slane %v443, 2
        %v448 = vsel %vm308, %v405, %v422
        %v451 = vsel %vm312, %v423, %v424
        %v452 = vsel %vm316, %v448, %v451
        %v453 = vsel %vm438, %v405, %v422
        %v454 = vsel %vm440, %v424, %v423
        %v455 = vsel %vm442, %v453, %v454
        %v457 = vrot.slane %v455, 2
        %v460 = vsel %vm308, %v407, %v425
        %v463 = vsel %vm312, %v426, %v427
        %v464 = vsel %vm316, %v460, %v463
        %v465 = vsel %vm438, %v407, %v425
        %v466 = vsel %vm440, %v427, %v426
        %v467 = vsel %vm442, %v465, %v466
        %v469 = vrot.slane %v467, 2
        %v472 = vsel %vm308, %v409, %v428
        %v475 = vsel %vm312, %v429, %v430
        %v476 = vsel %vm316, %v472, %v475
        %v477 = vsel %vm438, %v409, %v428
        %v478 = vsel %vm440, %v430, %v429
        %v479 = vsel %vm442, %v477, %v478
        %v481 = vrot.slane %v479, 2
        %vm482 = vsmask.f32 1280
        %vm483 = vsmask.f32 3336
        %vm484 = vmor %vm482, %vm483
        %vm485 = vsmask.f32 5392
        %vm486 = vmor %vm484, %vm485
        %vm487 = vsmask.f32 7448
        %vm488 = vmor %vm486, %vm487
        %v489 = vshrl.u32 %v437, 16
        %v491 = vrot.slane %v489, 6
        %v492 = vshll.u32 %v437, 16
        %v494 = vrot.slane %v492, 7
        %v495 = vor.u32 %v491, %v494
        %v496 = vrot.slane %v495, 2
        %v498 = vshll.u32 %v445, 16
        %v500 = vrot.slane %v498, 7
        %v501 = vsel %vm488, %v496, %v500
        %v502 = vshrl.u32 %v452, 16
        %v504 = vrot.slane %v502, 6
        %v505 = vshll.u32 %v452, 16
        %v507 = vrot.slane %v505, 7
        %v508 = vor.u32 %v504, %v507
        %v509 = vrot.slane %v508, 2
        %v511 = vshll.u32 %v457, 16
        %v513 = vrot.slane %v511, 7
        %v514 = vsel %vm488, %v509, %v513
        %v515 = vshrl.u32 %v464, 16
        %v517 = vrot.slane %v515, 6
        %v518 = vshll.u32 %v464, 16
        %v520 = vrot.slane %v518, 7
        %v521 = vor.u32 %v517, %v520
        %v522 = vrot.slane %v521, 2
        %v524 = vshll.u32 %v469, 16
        %v526 = vrot.slane %v524, 7
        %v527 = vsel %vm488, %v522, %v526
        %v528 = vshrl.u32 %v476, 16
        %v530 = vrot.slane %v528, 6
        %v531 = vshll.u32 %v476, 16
        %v533 = vrot.slane %v531, 7
        %v534 = vor.u32 %v530, %v533
        %v535 = vrot.slane %v534, 2
        %v537 = vshll.u32 %v481, 16
        %v539 = vrot.slane %v537, 7
        %v540 = vsel %vm488, %v535, %v539
        %s541 = scalar_lea.vmem %s1, 256
        %v542 = vld [vmem:[%s541] sm:$0xf]
        %v543 = vld [vmem:[%s541 + $0x4] sm:$0xf]
        %v544 = vld [vmem:[%s541 + $0x8] sm:$0xf]
        %v545 = vld [vmem:[%s541 + $0xc] sm:$0xf]
        %v546 = vld [vmem:[%s541 + $0x10] sm:$0xf]
        %v547 = vld [vmem:[%s541 + $0x14] sm:$0xf]
        %v548 = vld [vmem:[%s541 + $0x18] sm:$0xf]
        %v549 = vld [vmem:[%s541 + $0x1c] sm:$0xf]
        %v550 = vld [vmem:[%s541 + $0x20] sm:$0xf]
        %v551 = vld [vmem:[%s541 + $0x24] sm:$0xf]
        %v552 = vld [vmem:[%s541 + $0x28] sm:$0xf]
        %v553 = vld [vmem:[%s541 + $0x2c] sm:$0xf]
        %v554 = vld [vmem:[%s541 + $0x30] sm:$0xf]
        %v555 = vld [vmem:[%s541 + $0x34] sm:$0xf]
        %v556 = vld [vmem:[%s541 + $0x38] sm:$0xf]
        %v557 = vld [vmem:[%s541 + $0x3c] sm:$0xf]
        %v558 = vld [vmem:[%s541 + $0x40] sm:$0xf]
        %v559 = vld [vmem:[%s541 + $0x44] sm:$0xf]
        %v560 = vld [vmem:[%s541 + $0x48] sm:$0xf]
        %v561 = vld [vmem:[%s541 + $0x4c] sm:$0xf]
        %v562 = vld [vmem:[%s541 + $0x50] sm:$0xf]
        %v563 = vld [vmem:[%s541 + $0x54] sm:$0xf]
        %v564 = vld [vmem:[%s541 + $0x58] sm:$0xf]
        %v565 = vld [vmem:[%s541 + $0x5c] sm:$0xf]
        %v566 = vld [vmem:[%s541 + $0x60] sm:$0xf]
        %v567 = vld [vmem:[%s541 + $0x64] sm:$0xf]
        %v568 = vld [vmem:[%s541 + $0x68] sm:$0xf]
        %v569 = vld [vmem:[%s541 + $0x6c] sm:$0xf]
        %v570 = vld [vmem:[%s541 + $0x70] sm:$0xf]
        %v571 = vld [vmem:[%s541 + $0x74] sm:$0xf]
        %v572 = vld [vmem:[%s541 + $0x78] sm:$0xf]
        %v573 = vld [vmem:[%s541 + $0x7c] sm:$0xf]
        %v574 = vld [vmem:[%s541 + $0x80] sm:$0xf]
        %v575 = vld [vmem:[%s541 + $0x84] sm:$0xf]
        %v576 = vld [vmem:[%s541 + $0x88] sm:$0xf]
        %v577 = vld [vmem:[%s541 + $0x8c] sm:$0xf]
        %v578 = vld [vmem:[%s541 + $0x90] sm:$0xf]
        %v579 = vld [vmem:[%s541 + $0x94] sm:$0xf]
        %v580 = vld [vmem:[%s541 + $0x98] sm:$0xf]
        %v581 = vld [vmem:[%s541 + $0x9c] sm:$0xf]
        %v582 = vld [vmem:[%s541 + $0xa0] sm:$0xf]
        %v583 = vld [vmem:[%s541 + $0xa4] sm:$0xf]
        %v584 = vld [vmem:[%s541 + $0xa8] sm:$0xf]
        %v585 = vld [vmem:[%s541 + $0xac] sm:$0xf]
        %v586 = vld [vmem:[%s541 + $0xb0] sm:$0xf]
        %v587 = vld [vmem:[%s541 + $0xb4] sm:$0xf]
        %v588 = vld [vmem:[%s541 + $0xb8] sm:$0xf]
        %v589 = vld [vmem:[%s541 + $0xbc] sm:$0xf]
        %v590 = vld [vmem:[%s541 + $0xc0] sm:$0xf]
        %v591 = vld [vmem:[%s541 + $0xc4] sm:$0xf]
        %v592 = vld [vmem:[%s541 + $0xc8] sm:$0xf]
        %v593 = vld [vmem:[%s541 + $0xcc] sm:$0xf]
        %v594 = vld [vmem:[%s541 + $0xd0] sm:$0xf]
        %v595 = vld [vmem:[%s541 + $0xd4] sm:$0xf]
        %v596 = vld [vmem:[%s541 + $0xd8] sm:$0xf]
        %v597 = vld [vmem:[%s541 + $0xdc] sm:$0xf]
        %v598 = vld [vmem:[%s541 + $0xe0] sm:$0xf]
        %v599 = vld [vmem:[%s541 + $0xe4] sm:$0xf]
        %v600 = vld [vmem:[%s541 + $0xe8] sm:$0xf]
        %v601 = vld [vmem:[%s541 + $0xec] sm:$0xf]
        %v602 = vld [vmem:[%s541 + $0xf0] sm:$0xf]
        %v603 = vld [vmem:[%s541 + $0xf4] sm:$0xf]
        %v604 = vld [vmem:[%s541 + $0xf8] sm:$0xf]
        %v605 = vld [vmem:[%s541 + $0xfc] sm:$0xf]
        %607 = vst [vmem:[#allocation1] ss:$4 sm:$0xff] %v501
        %s609 = scalar_lea.vmem [#allocation1], 1
        %610 = vst [vmem:[%s609] ss:$4 sm:$0xff] %v514
        %s612 = scalar_lea.vmem [#allocation1], 2
        %613 = vst [vmem:[%s612] ss:$4 sm:$0xff] %v527
        %s615 = scalar_lea.vmem [#allocation1], 3
        %616 = vst [vmem:[%s615] ss:$4 sm:$0xff] %v540
        %v617 = vld.sshfl [vmem:[#allocation1] sm:$0xff pattern:$0x73625140]
        %v618 = vld.sshfl [vmem:[#allocation1 + $0x8] sm:$0xff pattern:$0x73625140]
        %v619 = vld.sshfl [vmem:[#allocation1 + $0x10] sm:$0xff pattern:$0x73625140]
        %v620 = vld.sshfl [vmem:[#allocation1 + $0x18] sm:$0xff pattern:$0x73625140]
        %v689 = vunpack.c.l.b16 %v542
        %v690 = vunpack.c.l.b16 %v543
        %v691 = vunpack.c.l.b16 %v544
        %v692 = vunpack.c.l.b16 %v545
        %v693 = vunpack.c.l.b16 %v546
        %v694 = vunpack.c.l.b16 %v547
        %v695 = vunpack.c.l.b16 %v548
        %v696 = vunpack.c.l.b16 %v549
        %v697 = vunpack.c.l.b16 %v550
        %v698 = vunpack.c.l.b16 %v551
        %v699 = vunpack.c.l.b16 %v552
        %v700 = vunpack.c.l.b16 %v553
        %v701 = vunpack.c.l.b16 %v554
        %v702 = vunpack.c.l.b16 %v555
        %v703 = vunpack.c.l.b16 %v556
        %v704 = vunpack.c.l.b16 %v557
        %v705 = vunpack.c.l.b16 %v558
        %v706 = vunpack.c.l.b16 %v559
        %v707 = vunpack.c.l.b16 %v560
        %v708 = vunpack.c.l.b16 %v561
        %v709 = vunpack.c.l.b16 %v562
        %v710 = vunpack.c.l.b16 %v563
        %v711 = vunpack.c.l.b16 %v564
        %v712 = vunpack.c.l.b16 %v565
        %v713 = vunpack.c.l.b16 %v566
        %v714 = vunpack.c.l.b16 %v567
        %v715 = vunpack.c.l.b16 %v568
        %v716 = vunpack.c.l.b16 %v569
        %v717 = vunpack.c.l.b16 %v570
        %v718 = vunpack.c.l.b16 %v571
        %v719 = vunpack.c.l.b16 %v572
        %v720 = vunpack.c.l.b16 %v573
        %v721 = vunpack.c.l.b16 %v574
        %v722 = vunpack.c.l.b16 %v575
        %v723 = vunpack.c.l.b16 %v576
        %v724 = vunpack.c.l.b16 %v577
        %v725 = vunpack.c.l.b16 %v578
        %v726 = vunpack.c.l.b16 %v579
        %v727 = vunpack.c.l.b16 %v580
        %v728 = vunpack.c.l.b16 %v581
        %v729 = vunpack.c.l.b16 %v582
        %v730 = vunpack.c.l.b16 %v583
        %v731 = vunpack.c.l.b16 %v584
        %v732 = vunpack.c.l.b16 %v585
        %v733 = vunpack.c.l.b16 %v586
        %v734 = vunpack.c.l.b16 %v587
        %v735 = vunpack.c.l.b16 %v588
        %v736 = vunpack.c.l.b16 %v589
        %v737 = vunpack.c.l.b16 %v590
        %v738 = vunpack.c.l.b16 %v591
        %v739 = vunpack.c.l.b16 %v592
        %v740 = vunpack.c.l.b16 %v593
        %v741 = vunpack.c.l.b16 %v594
        %v742 = vunpack.c.l.b16 %v595
        %v743 = vunpack.c.l.b16 %v596
        %v744 = vunpack.c.l.b16 %v597
        %v745 = vunpack.c.l.b16 %v598
        %v746 = vunpack.c.l.b16 %v599
        %v747 = vunpack.c.l.b16 %v600
        %v748 = vunpack.c.l.b16 %v601
        %v749 = vunpack.c.l.b16 %v602
        %v750 = vunpack.c.l.b16 %v603
        %v751 = vunpack.c.l.b16 %v604
        %v752 = vunpack.c.l.b16 %v605
        %v753 = vpack.c.b16 %v690, %v689
        %v754 = vpack.c.b16 %v692, %v691
        %v755 = vpack.c.b16 %v694, %v693
        %v756 = vpack.c.b16 %v696, %v695
        %v757 = vpack.c.b16 %v698, %v697
        %v758 = vpack.c.b16 %v700, %v699
        %v759 = vpack.c.b16 %v702, %v701
        %v760 = vpack.c.b16 %v704, %v703
        %v761 = vpack.c.b16 %v706, %v705
        %v762 = vpack.c.b16 %v708, %v707
        %v763 = vpack.c.b16 %v710, %v709
        %v764 = vpack.c.b16 %v712, %v711
        %v765 = vpack.c.b16 %v714, %v713
        %v766 = vpack.c.b16 %v716, %v715
        %v767 = vpack.c.b16 %v718, %v717
        %v768 = vpack.c.b16 %v720, %v719
        %v769 = vpack.c.b16 %v722, %v721
        %v770 = vpack.c.b16 %v724, %v723
        %v771 = vpack.c.b16 %v726, %v725
        %v772 = vpack.c.b16 %v728, %v727
        %v773 = vpack.c.b16 %v730, %v729
        %v774 = vpack.c.b16 %v732, %v731
        %v775 = vpack.c.b16 %v734, %v733
        %v776 = vpack.c.b16 %v736, %v735
        %v777 = vpack.c.b16 %v738, %v737
        %v778 = vpack.c.b16 %v740, %v739
        %v779 = vpack.c.b16 %v742, %v741
        %v780 = vpack.c.b16 %v744, %v743
        %v781 = vpack.c.b16 %v746, %v745
        %v782 = vpack.c.b16 %v748, %v747
        %v783 = vpack.c.b16 %v750, %v749
        %v784 = vpack.c.b16 %v752, %v751
        %817 = vmatpush.bf16.msra.mxu0 %v760
        %818 = vmatpush.bf16.msra.mxu0 %v759
        %819 = vmatpush.bf16.msra.mxu0 %v758
        %820 = vmatpush.bf16.msra.mxu0 %v757
        %821 = vmatpush.bf16.msra.mxu0 %v756
        %822 = vmatpush.bf16.msra.mxu0 %v755
        %823 = vmatpush.bf16.msra.mxu0 %v754
        %824 = vmatpush.bf16.msra.mxu0 %v753
        %825 = vmatmul.bf16.gmra.mxu0 %v617
        %v826 = vpop.f32.mrf.mxu0
        %v827 = vadd.f32 0.0, %v826
        %v828 = vpop.f32.mrf.mxu0
        %v829 = vadd.f32 0.0, %v828
        %830 = vdwg.mxu0
        %831 = vmatpush.bf16.msra.mxu0 %v768
        %832 = vmatpush.bf16.msra.mxu0 %v767
        %833 = vmatpush.bf16.msra.mxu0 %v766
        %834 = vmatpush.bf16.msra.mxu0 %v765
        %835 = vmatpush.bf16.msra.mxu0 %v764
        %836 = vmatpush.bf16.msra.mxu0 %v763
        %837 = vmatpush.bf16.msra.mxu0 %v762
        %838 = vmatpush.bf16.msra.mxu0 %v761
        %839 = vmatmul.bf16.gmra.mxu0 %v618
        %v840 = vpop.f32.mrf.mxu0
        %v841 = vadd.f32 %v827, %v840
        %v842 = vpop.f32.mrf.mxu0
        %v843 = vadd.f32 %v829, %v842
        %844 = vdwg.mxu0
        %845 = vmatpush.bf16.msra.mxu0 %v776
        %846 = vmatpush.bf16.msra.mxu0 %v775
        %847 = vmatpush.bf16.msra.mxu0 %v774
        %848 = vmatpush.bf16.msra.mxu0 %v773
        %849 = vmatpush.bf16.msra.mxu0 %v772
        %850 = vmatpush.bf16.msra.mxu0 %v771
        %851 = vmatpush.bf16.msra.mxu0 %v770
        %852 = vmatpush.bf16.msra.mxu0 %v769
        %853 = vmatmul.bf16.gmra.mxu0 %v619
        %v854 = vpop.f32.mrf.mxu0
        %v855 = vadd.f32 %v841, %v854
        %v856 = vpop.f32.mrf.mxu0
        %v857 = vadd.f32 %v843, %v856
        %858 = vdwg.mxu0
        %859 = vmatpush.bf16.msra.mxu0 %v784
        %860 = vmatpush.bf16.msra.mxu0 %v783
        %861 = vmatpush.bf16.msra.mxu0 %v782
        %862 = vmatpush.bf16.msra.mxu0 %v781
        %863 = vmatpush.bf16.msra.mxu0 %v780
        %864 = vmatpush.bf16.msra.mxu0 %v779
        %865 = vmatpush.bf16.msra.mxu0 %v778
        %866 = vmatpush.bf16.msra.mxu0 %v777
        %867 = vmatmul.bf16.gmra.mxu0 %v620
        %v868 = vpop.f32.mrf.mxu0
        %v869 = vadd.f32 %v855, %v868
        %v870 = vpop.f32.mrf.mxu0
        %v871 = vadd.f32 %v857, %v870
        %872 = vdwg.mxu0
        %873 = vst [vmem:[#allocation1] ss:$4 sm:$0xff] %v317
        %s874 = scalar_lea.vmem [#allocation1], 1
        %875 = vst [vmem:[%s874] ss:$4 sm:$0xff] %v324
        %s876 = scalar_lea.vmem [#allocation1], 2
        %877 = vst [vmem:[%s876] ss:$4 sm:$0xff] %v331
        %s878 = scalar_lea.vmem [#allocation1], 3
        %879 = vst [vmem:[%s878] ss:$4 sm:$0xff] %v338
        %v880 = vld.sshfl [vmem:[#allocation1] sm:$0xff pattern:$0x73625140]
        %v881 = vld.sshfl [vmem:[#allocation1 + $0x8] sm:$0xff pattern:$0x73625140]
        %v882 = vld.sshfl [vmem:[#allocation1 + $0x10] sm:$0xff pattern:$0x73625140]
        %v883 = vld.sshfl [vmem:[#allocation1 + $0x18] sm:$0xff pattern:$0x73625140]
        %v952 = vunpack.c.l.b16 %v339
        %v953 = vunpack.c.l.b16 %v340
        %v954 = vunpack.c.l.b16 %v341
        %v955 = vunpack.c.l.b16 %v342
        %v956 = vunpack.c.l.b16 %v343
        %v957 = vunpack.c.l.b16 %v344
        %v958 = vunpack.c.l.b16 %v345
        %v959 = vunpack.c.l.b16 %v346
        %v960 = vunpack.c.l.b16 %v347
        %v961 = vunpack.c.l.b16 %v348
        %v962 = vunpack.c.l.b16 %v349
        %v963 = vunpack.c.l.b16 %v350
        %v964 = vunpack.c.l.b16 %v351
        %v965 = vunpack.c.l.b16 %v352
        %v966 = vunpack.c.l.b16 %v353
        %v967 = vunpack.c.l.b16 %v354
        %v968 = vunpack.c.l.b16 %v355
        %v969 = vunpack.c.l.b16 %v356
        %v970 = vunpack.c.l.b16 %v357
        %v971 = vunpack.c.l.b16 %v358
        %v972 = vunpack.c.l.b16 %v359
        %v973 = vunpack.c.l.b16 %v360
        %v974 = vunpack.c.l.b16 %v361
        %v975 = vunpack.c.l.b16 %v362
        %v976 = vunpack.c.l.b16 %v363
        %v977 = vunpack.c.l.b16 %v364
        %v978 = vunpack.c.l.b16 %v365
        %v979 = vunpack.c.l.b16 %v366
        %v980 = vunpack.c.l.b16 %v367
        %v981 = vunpack.c.l.b16 %v368
        %v982 = vunpack.c.l.b16 %v369
        %v983 = vunpack.c.l.b16 %v370
        %v984 = vunpack.c.l.b16 %v371
        %v985 = vunpack.c.l.b16 %v372
        %v986 = vunpack.c.l.b16 %v373
        %v987 = vunpack.c.l.b16 %v374
        %v988 = vunpack.c.l.b16 %v375
        %v989 = vunpack.c.l.b16 %v376
        %v990 = vunpack.c.l.b16 %v377
        %v991 = vunpack.c.l.b16 %v378
        %v992 = vunpack.c.l.b16 %v379
        %v993 = vunpack.c.l.b16 %v380
        %v994 = vunpack.c.l.b16 %v381
        %v995 = vunpack.c.l.b16 %v382
        %v996 = vunpack.c.l.b16 %v383
        %v997 = vunpack.c.l.b16 %v384
        %v998 = vunpack.c.l.b16 %v385
        %v999 = vunpack.c.l.b16 %v386
        %v1000 = vunpack.c.l.b16 %v387
        %v1001 = vunpack.c.l.b16 %v388
        %v1002 = vunpack.c.l.b16 %v389
        %v1003 = vunpack.c.l.b16 %v390
        %v1004 = vunpack.c.l.b16 %v391
        %v1005 = vunpack.c.l.b16 %v392
        %v1006 = vunpack.c.l.b16 %v393
        %v1007 = vunpack.c.l.b16 %v394
        %v1008 = vunpack.c.l.b16 %v395
        %v1009 = vunpack.c.l.b16 %v396
        %v1010 = vunpack.c.l.b16 %v397
        %v1011 = vunpack.c.l.b16 %v398
        %v1012 = vunpack.c.l.b16 %v399
        %v1013 = vunpack.c.l.b16 %v400
        %v1014 = vunpack.c.l.b16 %v401
        %v1015 = vunpack.c.l.b16 %v402
        %v1016 = vpack.c.b16 %v953, %v952
        %v1017 = vpack.c.b16 %v955, %v954
        %v1018 = vpack.c.b16 %v957, %v956
        %v1019 = vpack.c.b16 %v959, %v958
        %v1020 = vpack.c.b16 %v961, %v960
        %v1021 = vpack.c.b16 %v963, %v962
        %v1022 = vpack.c.b16 %v965, %v964
        %v1023 = vpack.c.b16 %v967, %v966
        %v1024 = vpack.c.b16 %v969, %v968
        %v1025 = vpack.c.b16 %v971, %v970
        %v1026 = vpack.c.b16 %v973, %v972
        %v1027 = vpack.c.b16 %v975, %v974
        %v1028 = vpack.c.b16 %v977, %v976
        %v1029 = vpack.c.b16 %v979, %v978
        %v1030 = vpack.c.b16 %v981, %v980
        %v1031 = vpack.c.b16 %v983, %v982
        %v1032 = vpack.c.b16 %v985, %v984
        %v1033 = vpack.c.b16 %v987, %v986
        %v1034 = vpack.c.b16 %v989, %v988
        %v1035 = vpack.c.b16 %v991, %v990
        %v1036 = vpack.c.b16 %v993, %v992
        %v1037 = vpack.c.b16 %v995, %v994
        %v1038 = vpack.c.b16 %v997, %v996
        %v1039 = vpack.c.b16 %v999, %v998
        %v1040 = vpack.c.b16 %v1001, %v1000
        %v1041 = vpack.c.b16 %v1003, %v1002
        %v1042 = vpack.c.b16 %v1005, %v1004
        %v1043 = vpack.c.b16 %v1007, %v1006
        %v1044 = vpack.c.b16 %v1009, %v1008
        %v1045 = vpack.c.b16 %v1011, %v1010
        %v1046 = vpack.c.b16 %v1013, %v1012
        %v1047 = vpack.c.b16 %v1015, %v1014
        %1080 = vmatpush.bf16.msra.mxu0 %v1023
        %1081 = vmatpush.bf16.msra.mxu0 %v1022
        %1082 = vmatpush.bf16.msra.mxu0 %v1021
        %1083 = vmatpush.bf16.msra.mxu0 %v1020
        %1084 = vmatpush.bf16.msra.mxu0 %v1019
        %1085 = vmatpush.bf16.msra.mxu0 %v1018
        %1086 = vmatpush.bf16.msra.mxu0 %v1017
        %1087 = vmatpush.bf16.msra.mxu0 %v1016
        %1088 = vmatmul.bf16.gmra.mxu0 %v880
        %v1089 = vpop.f32.mrf.mxu0
        %v1090 = vadd.f32 %v869, %v1089
        %v1091 = vpop.f32.mrf.mxu0
        %v1092 = vadd.f32 %v871, %v1091
        %1093 = vdwg.mxu0
        %1094 = vmatpush.bf16.msra.mxu0 %v1031
        %1095 = vmatpush.bf16.msra.mxu0 %v1030
        %1096 = vmatpush.bf16.msra.mxu0 %v1029
        %1097 = vmatpush.bf16.msra.mxu0 %v1028
        %1098 = vmatpush.bf16.msra.mxu0 %v1027
        %1099 = vmatpush.bf16.msra.mxu0 %v1026
        %1100 = vmatpush.bf16.msra.mxu0 %v1025
        %1101 = vmatpush.bf16.msra.mxu0 %v1024
        %1102 = vmatmul.bf16.gmra.mxu0 %v881
        %v1103 = vpop.f32.mrf.mxu0
        %v1104 = vadd.f32 %v1090, %v1103
        %v1105 = vpop.f32.mrf.mxu0
        %v1106 = vadd.f32 %v1092, %v1105
        %1107 = vdwg.mxu0
        %1108 = vmatpush.bf16.msra.mxu0 %v1039
        %1109 = vmatpush.bf16.msra.mxu0 %v1038
        %1110 = vmatpush.bf16.msra.mxu0 %v1037
        %1111 = vmatpush.bf16.msra.mxu0 %v1036
        %1112 = vmatpush.bf16.msra.mxu0 %v1035
        %1113 = vmatpush.bf16.msra.mxu0 %v1034
        %1114 = vmatpush.bf16.msra.mxu0 %v1033
        %1115 = vmatpush.bf16.msra.mxu0 %v1032
        %1116 = vmatmul.bf16.gmra.mxu0 %v882
        %v1117 = vpop.f32.mrf.mxu0
        %v1118 = vadd.f32 %v1104, %v1117
        %v1119 = vpop.f32.mrf.mxu0
        %v1120 = vadd.f32 %v1106, %v1119
        %1121 = vdwg.mxu0
        %1122 = vmatpush.bf16.msra.mxu0 %v1047
        %1123 = vmatpush.bf16.msra.mxu0 %v1046
        %1124 = vmatpush.bf16.msra.mxu0 %v1045
        %1125 = vmatpush.bf16.msra.mxu0 %v1044
        %1126 = vmatpush.bf16.msra.mxu0 %v1043
        %1127 = vmatpush.bf16.msra.mxu0 %v1042
        %1128 = vmatpush.bf16.msra.mxu0 %v1041
        %1129 = vmatpush.bf16.msra.mxu0 %v1040
        %1130 = vmatmul.bf16.gmra.mxu0 %v883
        %v1131 = vpop.f32.mrf.mxu0
        %v1132 = vadd.f32 %v1118, %v1131
        %v1133 = vpop.f32.mrf.mxu0
        %v1134 = vadd.f32 %v1120, %v1133
        %1135 = vdwg.mxu0
        %s1136 = scalar_lea.vmem %s278, 16
        %v1137 = vld [vmem:[%s1136] sm:$0x33]
        %v1138 = vld [vmem:[%s1136 + $0x8] sm:$0x33]
        %v1139 = vld [vmem:[%s1136 + $0x10] sm:$0x33]
        %v1140 = vld [vmem:[%s1136 + $0x18] sm:$0x33]
        %v1141 = vld [vmem:[%s1136 + $0x20] sm:$0x33]
        %v1142 = vld [vmem:[%s1136 + $0x28] sm:$0x33]
        %v1143 = vld [vmem:[%s1136 + $0x30] sm:$0x33]
        %v1144 = vld [vmem:[%s1136 + $0x38] sm:$0x33]
        %v1153 = vrot.slane %v1137, 2
        %v1154 = vrot.slane %v1138, 4
        %v1155 = vrot.slane %v1138, 6
        %v1156 = vrot.slane %v1139, 2
        %v1157 = vrot.slane %v1140, 4
        %v1158 = vrot.slane %v1140, 6
        %v1159 = vrot.slane %v1141, 2
        %v1160 = vrot.slane %v1142, 4
        %v1161 = vrot.slane %v1142, 6
        %v1162 = vrot.slane %v1143, 2
        %v1163 = vrot.slane %v1144, 4
        %v1164 = vrot.slane %v1144, 6
        %v1167 = vsel %vm308, %v1137, %v1153
        %v1170 = vsel %vm312, %v1154, %v1155
        %v1171 = vsel %vm316, %v1167, %v1170
        %v1174 = vsel %vm308, %v1139, %v1156
        %v1177 = vsel %vm312, %v1157, %v1158
        %v1178 = vsel %vm316, %v1174, %v1177
        %v1181 = vsel %vm308, %v1141, %v1159
        %v1184 = vsel %vm312, %v1160, %v1161
        %v1185 = vsel %vm316, %v1181, %v1184
        %v1188 = vsel %vm308, %v1143, %v1162
        %v1191 = vsel %vm312, %v1163, %v1164
        %v1192 = vsel %vm316, %v1188, %v1191
        %s1193 = scalar_lea.vmem %s1, 512
        %v1194 = vld [vmem:[%s1193] sm:$0xf]
        %v1195 = vld [vmem:[%s1193 + $0x4] sm:$0xf]
        %v1196 = vld [vmem:[%s1193 + $0x8] sm:$0xf]
        %v1197 = vld [vmem:[%s1193 + $0xc] sm:$0xf]
        %v1198 = vld [vmem:[%s1193 + $0x10] sm:$0xf]
        %v1199 = vld [vmem:[%s1193 + $0x14] sm:$0xf]
        %v1200 = vld [vmem:[%s1193 + $0x18] sm:$0xf]
        %v1201 = vld [vmem:[%s1193 + $0x1c] sm:$0xf]
        %v1202 = vld [vmem:[%s1193 + $0x20] sm:$0xf]
        %v1203 = vld [vmem:[%s1193 + $0x24] sm:$0xf]
        %v1204 = vld [vmem:[%s1193 + $0x28] sm:$0xf]
        %v1205 = vld [vmem:[%s1193 + $0x2c] sm:$0xf]
        %v1206 = vld [vmem:[%s1193 + $0x30] sm:$0xf]
        %v1207 = vld [vmem:[%s1193 + $0x34] sm:$0xf]
        %v1208 = vld [vmem:[%s1193 + $0x38] sm:$0xf]
        %v1209 = vld [vmem:[%s1193 + $0x3c] sm:$0xf]
        %v1210 = vld [vmem:[%s1193 + $0x40] sm:$0xf]
        %v1211 = vld [vmem:[%s1193 + $0x44] sm:$0xf]
        %v1212 = vld [vmem:[%s1193 + $0x48] sm:$0xf]
        %v1213 = vld [vmem:[%s1193 + $0x4c] sm:$0xf]
        %v1214 = vld [vmem:[%s1193 + $0x50] sm:$0xf]
        %v1215 = vld [vmem:[%s1193 + $0x54] sm:$0xf]
        %v1216 = vld [vmem:[%s1193 + $0x58] sm:$0xf]
        %v1217 = vld [vmem:[%s1193 + $0x5c] sm:$0xf]
        %v1218 = vld [vmem:[%s1193 + $0x60] sm:$0xf]
        %v1219 = vld [vmem:[%s1193 + $0x64] sm:$0xf]
        %v1220 = vld [vmem:[%s1193 + $0x68] sm:$0xf]
        %v1221 = vld [vmem:[%s1193 + $0x6c] sm:$0xf]
        %v1222 = vld [vmem:[%s1193 + $0x70] sm:$0xf]
        %v1223 = vld [vmem:[%s1193 + $0x74] sm:$0xf]
        %v1224 = vld [vmem:[%s1193 + $0x78] sm:$0xf]
        %v1225 = vld [vmem:[%s1193 + $0x7c] sm:$0xf]
        %v1226 = vld [vmem:[%s1193 + $0x80] sm:$0xf]
        %v1227 = vld [vmem:[%s1193 + $0x84] sm:$0xf]
        %v1228 = vld [vmem:[%s1193 + $0x88] sm:$0xf]
        %v1229 = vld [vmem:[%s1193 + $0x8c] sm:$0xf]
        %v1230 = vld [vmem:[%s1193 + $0x90] sm:$0xf]
        %v1231 = vld [vmem:[%s1193 + $0x94] sm:$0xf]
        %v1232 = vld [vmem:[%s1193 + $0x98] sm:$0xf]
        %v1233 = vld [vmem:[%s1193 + $0x9c] sm:$0xf]
        %v1234 = vld [vmem:[%s1193 + $0xa0] sm:$0xf]
        %v1235 = vld [vmem:[%s1193 + $0xa4] sm:$0xf]
        %v1236 = vld [vmem:[%s1193 + $0xa8] sm:$0xf]
        %v1237 = vld [vmem:[%s1193 + $0xac] sm:$0xf]
        %v1238 = vld [vmem:[%s1193 + $0xb0] sm:$0xf]
        %v1239 = vld [vmem:[%s1193 + $0xb4] sm:$0xf]
        %v1240 = vld [vmem:[%s1193 + $0xb8] sm:$0xf]
        %v1241 = vld [vmem:[%s1193 + $0xbc] sm:$0xf]
        %v1242 = vld [vmem:[%s1193 + $0xc0] sm:$0xf]
        %v1243 = vld [vmem:[%s1193 + $0xc4] sm:$0xf]
        %v1244 = vld [vmem:[%s1193 + $0xc8] sm:$0xf]
        %v1245 = vld [vmem:[%s1193 + $0xcc] sm:$0xf]
        %v1246 = vld [vmem:[%s1193 + $0xd0] sm:$0xf]
        %v1247 = vld [vmem:[%s1193 + $0xd4] sm:$0xf]
        %v1248 = vld [vmem:[%s1193 + $0xd8] sm:$0xf]
        %v1249 = vld [vmem:[%s1193 + $0xdc] sm:$0xf]
        %v1250 = vld [vmem:[%s1193 + $0xe0] sm:$0xf]
        %v1251 = vld [vmem:[%s1193 + $0xe4] sm:$0xf]
        %v1252 = vld [vmem:[%s1193 + $0xe8] sm:$0xf]
        %v1253 = vld [vmem:[%s1193 + $0xec] sm:$0xf]
        %v1254 = vld [vmem:[%s1193 + $0xf0] sm:$0xf]
        %v1255 = vld [vmem:[%s1193 + $0xf4] sm:$0xf]
        %v1256 = vld [vmem:[%s1193 + $0xf8] sm:$0xf]
        %v1257 = vld [vmem:[%s1193 + $0xfc] sm:$0xf]
        %1258 = vst [vmem:[#allocation1] ss:$4 sm:$0xff] %v1171
        %s1259 = scalar_lea.vmem [#allocation1], 1
        %1260 = vst [vmem:[%s1259] ss:$4 sm:$0xff] %v1178
        %s1261 = scalar_lea.vmem [#allocation1], 2
        %1262 = vst [vmem:[%s1261] ss:$4 sm:$0xff] %v1185
        %s1263 = scalar_lea.vmem [#allocation1], 3
        %1264 = vst [vmem:[%s1263] ss:$4 sm:$0xff] %v1192
        %v1265 = vld.sshfl [vmem:[#allocation1] sm:$0xff pattern:$0x73625140]
        %v1266 = vld.sshfl [vmem:[#allocation1 + $0x8] sm:$0xff pattern:$0x73625140]
        %v1267 = vld.sshfl [vmem:[#allocation1 + $0x10] sm:$0xff pattern:$0x73625140]
        %v1268 = vld.sshfl [vmem:[#allocation1 + $0x18] sm:$0xff pattern:$0x73625140]
        %v1337 = vunpack.c.l.b16 %v1194
        %v1338 = vunpack.c.l.b16 %v1195
        %v1339 = vunpack.c.l.b16 %v1196
        %v1340 = vunpack.c.l.b16 %v1197
        %v1341 = vunpack.c.l.b16 %v1198
        %v1342 = vunpack.c.l.b16 %v1199
        %v1343 = vunpack.c.l.b16 %v1200
        %v1344 = vunpack.c.l.b16 %v1201
        %v1345 = vunpack.c.l.b16 %v1202
        %v1346 = vunpack.c.l.b16 %v1203
        %v1347 = vunpack.c.l.b16 %v1204
        %v1348 = vunpack.c.l.b16 %v1205
        %v1349 = vunpack.c.l.b16 %v1206
        %v1350 = vunpack.c.l.b16 %v1207
        %v1351 = vunpack.c.l.b16 %v1208
        %v1352 = vunpack.c.l.b16 %v1209
        %v1353 = vunpack.c.l.b16 %v1210
        %v1354 = vunpack.c.l.b16 %v1211
        %v1355 = vunpack.c.l.b16 %v1212
        %v1356 = vunpack.c.l.b16 %v1213
        %v1357 = vunpack.c.l.b16 %v1214
        %v1358 = vunpack.c.l.b16 %v1215
        %v1359 = vunpack.c.l.b16 %v1216
        %v1360 = vunpack.c.l.b16 %v1217
        %v1361 = vunpack.c.l.b16 %v1218
        %v1362 = vunpack.c.l.b16 %v1219
        %v1363 = vunpack.c.l.b16 %v1220
        %v1364 = vunpack.c.l.b16 %v1221
        %v1365 = vunpack.c.l.b16 %v1222
        %v1366 = vunpack.c.l.b16 %v1223
        %v1367 = vunpack.c.l.b16 %v1224
        %v1368 = vunpack.c.l.b16 %v1225
        %v1369 = vunpack.c.l.b16 %v1226
        %v1370 = vunpack.c.l.b16 %v1227
        %v1371 = vunpack.c.l.b16 %v1228
        %v1372 = vunpack.c.l.b16 %v1229
        %v1373 = vunpack.c.l.b16 %v1230
        %v1374 = vunpack.c.l.b16 %v1231
        %v1375 = vunpack.c.l.b16 %v1232
        %v1376 = vunpack.c.l.b16 %v1233
        %v1377 = vunpack.c.l.b16 %v1234
        %v1378 = vunpack.c.l.b16 %v1235
        %v1379 = vunpack.c.l.b16 %v1236
        %v1380 = vunpack.c.l.b16 %v1237
        %v1381 = vunpack.c.l.b16 %v1238
        %v1382 = vunpack.c.l.b16 %v1239
        %v1383 = vunpack.c.l.b16 %v1240
        %v1384 = vunpack.c.l.b16 %v1241
        %v1385 = vunpack.c.l.b16 %v1242
        %v1386 = vunpack.c.l.b16 %v1243
        %v1387 = vunpack.c.l.b16 %v1244
        %v1388 = vunpack.c.l.b16 %v1245
        %v1389 = vunpack.c.l.b16 %v1246
        %v1390 = vunpack.c.l.b16 %v1247
        %v1391 = vunpack.c.l.b16 %v1248
        %v1392 = vunpack.c.l.b16 %v1249
        %v1393 = vunpack.c.l.b16 %v1250
        %v1394 = vunpack.c.l.b16 %v1251
        %v1395 = vunpack.c.l.b16 %v1252
        %v1396 = vunpack.c.l.b16 %v1253
        %v1397 = vunpack.c.l.b16 %v1254
        %v1398 = vunpack.c.l.b16 %v1255
        %v1399 = vunpack.c.l.b16 %v1256
        %v1400 = vunpack.c.l.b16 %v1257
        %v1401 = vpack.c.b16 %v1338, %v1337
        %v1402 = vpack.c.b16 %v1340, %v1339
        %v1403 = vpack.c.b16 %v1342, %v1341
        %v1404 = vpack.c.b16 %v1344, %v1343
        %v1405 = vpack.c.b16 %v1346, %v1345
        %v1406 = vpack.c.b16 %v1348, %v1347
        %v1407 = vpack.c.b16 %v1350, %v1349
        %v1408 = vpack.c.b16 %v1352, %v1351
        %v1409 = vpack.c.b16 %v1354, %v1353
        %v1410 = vpack.c.b16 %v1356, %v1355
        %v1411 = vpack.c.b16 %v1358, %v1357
        %v1412 = vpack.c.b16 %v1360, %v1359
        %v1413 = vpack.c.b16 %v1362, %v1361
        %v1414 = vpack.c.b16 %v1364, %v1363
        %v1415 = vpack.c.b16 %v1366, %v1365
        %v1416 = vpack.c.b16 %v1368, %v1367
        %v1417 = vpack.c.b16 %v1370, %v1369
        %v1418 = vpack.c.b16 %v1372, %v1371
        %v1419 = vpack.c.b16 %v1374, %v1373
        %v1420 = vpack.c.b16 %v1376, %v1375
        %v1421 = vpack.c.b16 %v1378, %v1377
        %v1422 = vpack.c.b16 %v1380, %v1379
        %v1423 = vpack.c.b16 %v1382, %v1381
        %v1424 = vpack.c.b16 %v1384, %v1383
        %v1425 = vpack.c.b16 %v1386, %v1385
        %v1426 = vpack.c.b16 %v1388, %v1387
        %v1427 = vpack.c.b16 %v1390, %v1389
        %v1428 = vpack.c.b16 %v1392, %v1391
        %v1429 = vpack.c.b16 %v1394, %v1393
        %v1430 = vpack.c.b16 %v1396, %v1395
        %v1431 = vpack.c.b16 %v1398, %v1397
        %v1432 = vpack.c.b16 %v1400, %v1399
        %1465 = vmatpush.bf16.msra.mxu0 %v1408
        %1466 = vmatpush.bf16.msra.mxu0 %v1407
        %1467 = vmatpush.bf16.msra.mxu0 %v1406
        %1468 = vmatpush.bf16.msra.mxu0 %v1405
        %1469 = vmatpush.bf16.msra.mxu0 %v1404
        %1470 = vmatpush.bf16.msra.mxu0 %v1403
        %1471 = vmatpush.bf16.msra.mxu0 %v1402
        %1472 = vmatpush.bf16.msra.mxu0 %v1401
        %1473 = vmatmul.bf16.gmra.mxu0 %v1265
        %v1474 = vpop.f32.mrf.mxu0
        %v1475 = vadd.f32 0.0, %v1474
        %v1476 = vpop.f32.mrf.mxu0
        %v1477 = vadd.f32 0.0, %v1476
        %1478 = vdwg.mxu0
        %1479 = vmatpush.bf16.msra.mxu0 %v1416
        %1480 = vmatpush.bf16.msra.mxu0 %v1415
        %1481 = vmatpush.bf16.msra.mxu0 %v1414
        %1482 = vmatpush.bf16.msra.mxu0 %v1413
        %1483 = vmatpush.bf16.msra.mxu0 %v1412
        %1484 = vmatpush.bf16.msra.mxu0 %v1411
        %1485 = vmatpush.bf16.msra.mxu0 %v1410
        %1486 = vmatpush.bf16.msra.mxu0 %v1409
        %1487 = vmatmul.bf16.gmra.mxu0 %v1266
        %v1488 = vpop.f32.mrf.mxu0
        %v1489 = vadd.f32 %v1475, %v1488
        %v1490 = vpop.f32.mrf.mxu0
        %v1491 = vadd.f32 %v1477, %v1490
        %1492 = vdwg.mxu0
        %1493 = vmatpush.bf16.msra.mxu0 %v1424
        %1494 = vmatpush.bf16.msra.mxu0 %v1423
        %1495 = vmatpush.bf16.msra.mxu0 %v1422
        %1496 = vmatpush.bf16.msra.mxu0 %v1421
        %1497 = vmatpush.bf16.msra.mxu0 %v1420
        %1498 = vmatpush.bf16.msra.mxu0 %v1419
        %1499 = vmatpush.bf16.msra.mxu0 %v1418
        %1500 = vmatpush.bf16.msra.mxu0 %v1417
        %1501 = vmatmul.bf16.gmra.mxu0 %v1267
        %v1502 = vpop.f32.mrf.mxu0
        %v1503 = vadd.f32 %v1489, %v1502
        %v1504 = vpop.f32.mrf.mxu0
        %v1505 = vadd.f32 %v1491, %v1504
        %1506 = vdwg.mxu0
        %1507 = vmatpush.bf16.msra.mxu0 %v1432
        %1508 = vmatpush.bf16.msra.mxu0 %v1431
        %1509 = vmatpush.bf16.msra.mxu0 %v1430
        %1510 = vmatpush.bf16.msra.mxu0 %v1429
        %1511 = vmatpush.bf16.msra.mxu0 %v1428
        %1512 = vmatpush.bf16.msra.mxu0 %v1427
        %1513 = vmatpush.bf16.msra.mxu0 %v1426
        %1514 = vmatpush.bf16.msra.mxu0 %v1425
        %1515 = vmatmul.bf16.gmra.mxu0 %v1268
        %v1516 = vpop.f32.mrf.mxu0
        %v1517 = vadd.f32 %v1503, %v1516
        %v1518 = vpop.f32.mrf.mxu0
        %v1519 = vadd.f32 %v1505, %v1518
        %1520 = vdwg.mxu0
        %v1521 = vadd.f32 %v1132, %v1517
        %v1522 = vadd.f32 %v1134, %v1519
        %v1523 = vld [vmem:[%s1136] sm:$0x77]
        %v1524 = vld [vmem:[%s1136 + $0x8] sm:$0x77]
        %v1525 = vld [vmem:[%s1136 + $0x10] sm:$0x77]
        %v1526 = vld [vmem:[%s1136 + $0x18] sm:$0x77]
        %v1527 = vld [vmem:[%s1136 + $0x20] sm:$0x77]
        %v1528 = vld [vmem:[%s1136 + $0x28] sm:$0x77]
        %v1529 = vld [vmem:[%s1136 + $0x30] sm:$0x77]
        %v1530 = vld [vmem:[%s1136 + $0x38] sm:$0x77]
        %v1539 = vrot.slane %v1523, 2
        %v1540 = vrot.slane %v1524, 4
        %v1541 = vrot.slane %v1524, 6
        %v1542 = vrot.slane %v1525, 2
        %v1543 = vrot.slane %v1526, 4
        %v1544 = vrot.slane %v1526, 6
        %v1545 = vrot.slane %v1527, 2
        %v1546 = vrot.slane %v1528, 4
        %v1547 = vrot.slane %v1528, 6
        %v1548 = vrot.slane %v1529, 2
        %v1549 = vrot.slane %v1530, 4
        %v1550 = vrot.slane %v1530, 6
        %v1553 = vsel %vm308, %v1523, %v1539
        %v1556 = vsel %vm312, %v1540, %v1541
        %v1557 = vsel %vm316, %v1553, %v1556
        %v1558 = vsel %vm438, %v1523, %v1539
        %v1559 = vsel %vm440, %v1541, %v1540
        %v1560 = vsel %vm442, %v1558, %v1559
        %v1562 = vrot.slane %v1560, 2
        %v1565 = vsel %vm308, %v1525, %v1542
        %v1568 = vsel %vm312, %v1543, %v1544
        %v1569 = vsel %vm316, %v1565, %v1568
        %v1570 = vsel %vm438, %v1525, %v1542
        %v1571 = vsel %vm440, %v1544, %v1543
        %v1572 = vsel %vm442, %v1570, %v1571
        %v1574 = vrot.slane %v1572, 2
        %v1577 = vsel %vm308, %v1527, %v1545
        %v1580 = vsel %vm312, %v1546, %v1547
        %v1581 = vsel %vm316, %v1577, %v1580
        %v1582 = vsel %vm438, %v1527, %v1545
        %v1583 = vsel %vm440, %v1547, %v1546
        %v1584 = vsel %vm442, %v1582, %v1583
        %v1586 = vrot.slane %v1584, 2
        %v1589 = vsel %vm308, %v1529, %v1548
        %v1592 = vsel %vm312, %v1549, %v1550
        %v1593 = vsel %vm316, %v1589, %v1592
        %v1594 = vsel %vm438, %v1529, %v1548
        %v1595 = vsel %vm440, %v1550, %v1549
        %v1596 = vsel %vm442, %v1594, %v1595
        %v1598 = vrot.slane %v1596, 2
        %v1599 = vshrl.u32 %v1557, 16
        %v1601 = vrot.slane %v1599, 6
        %v1602 = vshll.u32 %v1557, 16
        %v1604 = vrot.slane %v1602, 7
        %v1605 = vor.u32 %v1601, %v1604
        %v1606 = vrot.slane %v1605, 2
        %v1608 = vshll.u32 %v1562, 16
        %v1610 = vrot.slane %v1608, 7
        %v1611 = vsel %vm488, %v1606, %v1610
        %v1612 = vshrl.u32 %v1569, 16
        %v1614 = vrot.slane %v1612, 6
        %v1615 = vshll.u32 %v1569, 16
        %v1617 = vrot.slane %v1615, 7
        %v1618 = vor.u32 %v1614, %v1617
        %v1619 = vrot.slane %v1618, 2
        %v1621 = vshll.u32 %v1574, 16
        %v1623 = vrot.slane %v1621, 7
        %v1624 = vsel %vm488, %v1619, %v1623
        %v1625 = vshrl.u32 %v1581, 16
        %v1627 = vrot.slane %v1625, 6
        %v1628 = vshll.u32 %v1581, 16
        %v1630 = vrot.slane %v1628, 7
        %v1631 = vor.u32 %v1627, %v1630
        %v1632 = vrot.slane %v1631, 2
        %v1634 = vshll.u32 %v1586, 16
        %v1636 = vrot.slane %v1634, 7
        %v1637 = vsel %vm488, %v1632, %v1636
        %v1638 = vshrl.u32 %v1593, 16
        %v1640 = vrot.slane %v1638, 6
        %v1641 = vshll.u32 %v1593, 16
        %v1643 = vrot.slane %v1641, 7
        %v1644 = vor.u32 %v1640, %v1643
        %v1645 = vrot.slane %v1644, 2
        %v1647 = vshll.u32 %v1598, 16
        %v1649 = vrot.slane %v1647, 7
        %v1650 = vsel %vm488, %v1645, %v1649
        %s1651 = scalar_lea.vmem %s1, 768
        %v1652 = vld [vmem:[%s1651] sm:$0xf]
        %v1653 = vld [vmem:[%s1651 + $0x4] sm:$0xf]
        %v1654 = vld [vmem:[%s1651 + $0x8] sm:$0xf]
        %v1655 = vld [vmem:[%s1651 + $0xc] sm:$0xf]
        %v1656 = vld [vmem:[%s1651 + $0x10] sm:$0xf]
        %v1657 = vld [vmem:[%s1651 + $0x14] sm:$0xf]
        %v1658 = vld [vmem:[%s1651 + $0x18] sm:$0xf]
        %v1659 = vld [vmem:[%s1651 + $0x1c] sm:$0xf]
        %v1660 = vld [vmem:[%s1651 + $0x20] sm:$0xf]
        %v1661 = vld [vmem:[%s1651 + $0x24] sm:$0xf]
        %v1662 = vld [vmem:[%s1651 + $0x28] sm:$0xf]
        %v1663 = vld [vmem:[%s1651 + $0x2c] sm:$0xf]
        %v1664 = vld [vmem:[%s1651 + $0x30] sm:$0xf]
        %v1665 = vld [vmem:[%s1651 + $0x34] sm:$0xf]
        %v1666 = vld [vmem:[%s1651 + $0x38] sm:$0xf]
        %v1667 = vld [vmem:[%s1651 + $0x3c] sm:$0xf]
        %v1668 = vld [vmem:[%s1651 + $0x40] sm:$0xf]
        %v1669 = vld [vmem:[%s1651 + $0x44] sm:$0xf]
        %v1670 = vld [vmem:[%s1651 + $0x48] sm:$0xf]
        %v1671 = vld [vmem:[%s1651 + $0x4c] sm:$0xf]
        %v1672 = vld [vmem:[%s1651 + $0x50] sm:$0xf]
        %v1673 = vld [vmem:[%s1651 + $0x54] sm:$0xf]
        %v1674 = vld [vmem:[%s1651 + $0x58] sm:$0xf]
        %v1675 = vld [vmem:[%s1651 + $0x5c] sm:$0xf]
        %v1676 = vld [vmem:[%s1651 + $0x60] sm:$0xf]
        %v1677 = vld [vmem:[%s1651 + $0x64] sm:$0xf]
        %v1678 = vld [vmem:[%s1651 + $0x68] sm:$0xf]
        %v1679 = vld [vmem:[%s1651 + $0x6c] sm:$0xf]
        %v1680 = vld [vmem:[%s1651 + $0x70] sm:$0xf]
        %v1681 = vld [vmem:[%s1651 + $0x74] sm:$0xf]
        %v1682 = vld [vmem:[%s1651 + $0x78] sm:$0xf]
        %v1683 = vld [vmem:[%s1651 + $0x7c] sm:$0xf]
        %v1684 = vld [vmem:[%s1651 + $0x80] sm:$0xf]
        %v1685 = vld [vmem:[%s1651 + $0x84] sm:$0xf]
        %v1686 = vld [vmem:[%s1651 + $0x88] sm:$0xf]
        %v1687 = vld [vmem:[%s1651 + $0x8c] sm:$0xf]
        %v1688 = vld [vmem:[%s1651 + $0x90] sm:$0xf]
        %v1689 = vld [vmem:[%s1651 + $0x94] sm:$0xf]
        %v1690 = vld [vmem:[%s1651 + $0x98] sm:$0xf]
        %v1691 = vld [vmem:[%s1651 + $0x9c] sm:$0xf]
        %v1692 = vld [vmem:[%s1651 + $0xa0] sm:$0xf]
        %v1693 = vld [vmem:[%s1651 + $0xa4] sm:$0xf]
        %v1694 = vld [vmem:[%s1651 + $0xa8] sm:$0xf]
        %v1695 = vld [vmem:[%s1651 + $0xac] sm:$0xf]
        %v1696 = vld [vmem:[%s1651 + $0xb0] sm:$0xf]
        %v1697 = vld [vmem:[%s1651 + $0xb4] sm:$0xf]
        %v1698 = vld [vmem:[%s1651 + $0xb8] sm:$0xf]
        %v1699 = vld [vmem:[%s1651 + $0xbc] sm:$0xf]
        %v1700 = vld [vmem:[%s1651 + $0xc0] sm:$0xf]
        %v1701 = vld [vmem:[%s1651 + $0xc4] sm:$0xf]
        %v1702 = vld [vmem:[%s1651 + $0xc8] sm:$0xf]
        %v1703 = vld [vmem:[%s1651 + $0xcc] sm:$0xf]
        %v1704 = vld [vmem:[%s1651 + $0xd0] sm:$0xf]
        %v1705 = vld [vmem:[%s1651 + $0xd4] sm:$0xf]
        %v1706 = vld [vmem:[%s1651 + $0xd8] sm:$0xf]
        %v1707 = vld [vmem:[%s1651 + $0xdc] sm:$0xf]
        %v1708 = vld [vmem:[%s1651 + $0xe0] sm:$0xf]
        %v1709 = vld [vmem:[%s1651 + $0xe4] sm:$0xf]
        %v1710 = vld [vmem:[%s1651 + $0xe8] sm:$0xf]
        %v1711 = vld [vmem:[%s1651 + $0xec] sm:$0xf]
        %v1712 = vld [vmem:[%s1651 + $0xf0] sm:$0xf]
        %v1713 = vld [vmem:[%s1651 + $0xf4] sm:$0xf]
        %v1714 = vld [vmem:[%s1651 + $0xf8] sm:$0xf]
        %v1715 = vld [vmem:[%s1651 + $0xfc] sm:$0xf]
        %1717 = vst [vmem:[#allocation1] ss:$4 sm:$0xff] %v1611
        %s1719 = scalar_lea.vmem [#allocation1], 1
        %1720 = vst [vmem:[%s1719] ss:$4 sm:$0xff] %v1624
        %s1722 = scalar_lea.vmem [#allocation1], 2
        %1723 = vst [vmem:[%s1722] ss:$4 sm:$0xff] %v1637
        %s1725 = scalar_lea.vmem [#allocation1], 3
        %1726 = vst [vmem:[%s1725] ss:$4 sm:$0xff] %v1650
        %v1727 = vld.sshfl [vmem:[#allocation1] sm:$0xff pattern:$0x73625140]
        %v1728 = vld.sshfl [vmem:[#allocation1 + $0x8] sm:$0xff pattern:$0x73625140]
        %v1729 = vld.sshfl [vmem:[#allocation1 + $0x10] sm:$0xff pattern:$0x73625140]
        %v1730 = vld.sshfl [vmem:[#allocation1 + $0x18] sm:$0xff pattern:$0x73625140]
        %v1799 = vunpack.c.l.b16 %v1652
        %v1800 = vunpack.c.l.b16 %v1653
        %v1801 = vunpack.c.l.b16 %v1654
        %v1802 = vunpack.c.l.b16 %v1655
        %v1803 = vunpack.c.l.b16 %v1656
        %v1804 = vunpack.c.l.b16 %v1657
        %v1805 = vunpack.c.l.b16 %v1658
        %v1806 = vunpack.c.l.b16 %v1659
        %v1807 = vunpack.c.l.b16 %v1660
        %v1808 = vunpack.c.l.b16 %v1661
        %v1809 = vunpack.c.l.b16 %v1662
        %v1810 = vunpack.c.l.b16 %v1663
        %v1811 = vunpack.c.l.b16 %v1664
        %v1812 = vunpack.c.l.b16 %v1665
        %v1813 = vunpack.c.l.b16 %v1666
        %v1814 = vunpack.c.l.b16 %v1667
        %v1815 = vunpack.c.l.b16 %v1668
        %v1816 = vunpack.c.l.b16 %v1669
        %v1817 = vunpack.c.l.b16 %v1670
        %v1818 = vunpack.c.l.b16 %v1671
        %v1819 = vunpack.c.l.b16 %v1672
        %v1820 = vunpack.c.l.b16 %v1673
        %v1821 = vunpack.c.l.b16 %v1674
        %v1822 = vunpack.c.l.b16 %v1675
        %v1823 = vunpack.c.l.b16 %v1676
        %v1824 = vunpack.c.l.b16 %v1677
        %v1825 = vunpack.c.l.b16 %v1678
        %v1826 = vunpack.c.l.b16 %v1679
        %v1827 = vunpack.c.l.b16 %v1680
        %v1828 = vunpack.c.l.b16 %v1681
        %v1829 = vunpack.c.l.b16 %v1682
        %v1830 = vunpack.c.l.b16 %v1683
        %v1831 = vunpack.c.l.b16 %v1684
        %v1832 = vunpack.c.l.b16 %v1685
        %v1833 = vunpack.c.l.b16 %v1686
        %v1834 = vunpack.c.l.b16 %v1687
        %v1835 = vunpack.c.l.b16 %v1688
        %v1836 = vunpack.c.l.b16 %v1689
        %v1837 = vunpack.c.l.b16 %v1690
        %v1838 = vunpack.c.l.b16 %v1691
        %v1839 = vunpack.c.l.b16 %v1692
        %v1840 = vunpack.c.l.b16 %v1693
        %v1841 = vunpack.c.l.b16 %v1694
        %v1842 = vunpack.c.l.b16 %v1695
        %v1843 = vunpack.c.l.b16 %v1696
        %v1844 = vunpack.c.l.b16 %v1697
        %v1845 = vunpack.c.l.b16 %v1698
        %v1846 = vunpack.c.l.b16 %v1699
        %v1847 = vunpack.c.l.b16 %v1700
        %v1848 = vunpack.c.l.b16 %v1701
        %v1849 = vunpack.c.l.b16 %v1702
        %v1850 = vunpack.c.l.b16 %v1703
        %v1851 = vunpack.c.l.b16 %v1704
        %v1852 = vunpack.c.l.b16 %v1705
        %v1853 = vunpack.c.l.b16 %v1706
        %v1854 = vunpack.c.l.b16 %v1707
        %v1855 = vunpack.c.l.b16 %v1708
        %v1856 = vunpack.c.l.b16 %v1709
        %v1857 = vunpack.c.l.b16 %v1710
        %v1858 = vunpack.c.l.b16 %v1711
        %v1859 = vunpack.c.l.b16 %v1712
        %v1860 = vunpack.c.l.b16 %v1713
        %v1861 = vunpack.c.l.b16 %v1714
        %v1862 = vunpack.c.l.b16 %v1715
        %v1863 = vpack.c.b16 %v1800, %v1799
        %v1864 = vpack.c.b16 %v1802, %v1801
        %v1865 = vpack.c.b16 %v1804, %v1803
        %v1866 = vpack.c.b16 %v1806, %v1805
        %v1867 = vpack.c.b16 %v1808, %v1807
        %v1868 = vpack.c.b16 %v1810, %v1809
        %v1869 = vpack.c.b16 %v1812, %v1811
        %v1870 = vpack.c.b16 %v1814, %v1813
        %v1871 = vpack.c.b16 %v1816, %v1815
        %v1872 = vpack.c.b16 %v1818, %v1817
        %v1873 = vpack.c.b16 %v1820, %v1819
        %v1874 = vpack.c.b16 %v1822, %v1821
        %v1875 = vpack.c.b16 %v1824, %v1823
        %v1876 = vpack.c.b16 %v1826, %v1825
        %v1877 = vpack.c.b16 %v1828, %v1827
        %v1878 = vpack.c.b16 %v1830, %v1829
        %v1879 = vpack.c.b16 %v1832, %v1831
        %v1880 = vpack.c.b16 %v1834, %v1833
        %v1881 = vpack.c.b16 %v1836, %v1835
        %v1882 = vpack.c.b16 %v1838, %v1837
        %v1883 = vpack.c.b16 %v1840, %v1839
        %v1884 = vpack.c.b16 %v1842, %v1841
        %v1885 = vpack.c.b16 %v1844, %v1843
        %v1886 = vpack.c.b16 %v1846, %v1845
        %v1887 = vpack.c.b16 %v1848, %v1847
        %v1888 = vpack.c.b16 %v1850, %v1849
        %v1889 = vpack.c.b16 %v1852, %v1851
        %v1890 = vpack.c.b16 %v1854, %v1853
        %v1891 = vpack.c.b16 %v1856, %v1855
        %v1892 = vpack.c.b16 %v1858, %v1857
        %v1893 = vpack.c.b16 %v1860, %v1859
        %v1894 = vpack.c.b16 %v1862, %v1861
        %1927 = vmatpush.bf16.msra.mxu0 %v1870
        %1928 = vmatpush.bf16.msra.mxu0 %v1869
        %1929 = vmatpush.bf16.msra.mxu0 %v1868
        %1930 = vmatpush.bf16.msra.mxu0 %v1867
        %1931 = vmatpush.bf16.msra.mxu0 %v1866
        %1932 = vmatpush.bf16.msra.mxu0 %v1865
        %1933 = vmatpush.bf16.msra.mxu0 %v1864
        %1934 = vmatpush.bf16.msra.mxu0 %v1863
        %1935 = vmatmul.bf16.gmra.mxu0 %v1727
        %v1936 = vpop.f32.mrf.mxu0
        %v1937 = vadd.f32 0.0, %v1936
        %v1938 = vpop.f32.mrf.mxu0
        %v1939 = vadd.f32 0.0, %v1938
        %1940 = vdwg.mxu0
        %1941 = vmatpush.bf16.msra.mxu0 %v1878
        %1942 = vmatpush.bf16.msra.mxu0 %v1877
        %1943 = vmatpush.bf16.msra.mxu0 %v1876
        %1944 = vmatpush.bf16.msra.mxu0 %v1875
        %1945 = vmatpush.bf16.msra.mxu0 %v1874
        %1946 = vmatpush.bf16.msra.mxu0 %v1873
        %1947 = vmatpush.bf16.msra.mxu0 %v1872
        %1948 = vmatpush.bf16.msra.mxu0 %v1871
        %1949 = vmatmul.bf16.gmra.mxu0 %v1728
        %v1950 = vpop.f32.mrf.mxu0
        %v1951 = vadd.f32 %v1937, %v1950
        %v1952 = vpop.f32.mrf.mxu0
        %v1953 = vadd.f32 %v1939, %v1952
        %1954 = vdwg.mxu0
        %1955 = vmatpush.bf16.msra.mxu0 %v1886
        %1956 = vmatpush.bf16.msra.mxu0 %v1885
        %1957 = vmatpush.bf16.msra.mxu0 %v1884
        %1958 = vmatpush.bf16.msra.mxu0 %v1883
        %1959 = vmatpush.bf16.msra.mxu0 %v1882
        %1960 = vmatpush.bf16.msra.mxu0 %v1881
        %1961 = vmatpush.bf16.msra.mxu0 %v1880
        %1962 = vmatpush.bf16.msra.mxu0 %v1879
        %1963 = vmatmul.bf16.gmra.mxu0 %v1729
        %v1964 = vpop.f32.mrf.mxu0
        %v1965 = vadd.f32 %v1951, %v1964
        %v1966 = vpop.f32.mrf.mxu0
        %v1967 = vadd.f32 %v1953, %v1966
        %1968 = vdwg.mxu0
        %1969 = vmatpush.bf16.msra.mxu0 %v1894
        %1970 = vmatpush.bf16.msra.mxu0 %v1893
        %1971 = vmatpush.bf16.msra.mxu0 %v1892
        %1972 = vmatpush.bf16.msra.mxu0 %v1891
        %1973 = vmatpush.bf16.msra.mxu0 %v1890
        %1974 = vmatpush.bf16.msra.mxu0 %v1889
        %1975 = vmatpush.bf16.msra.mxu0 %v1888
        %1976 = vmatpush.bf16.msra.mxu0 %v1887
        %1977 = vmatmul.bf16.gmra.mxu0 %v1730
        %v1978 = vpop.f32.mrf.mxu0
        %v1979 = vadd.f32 %v1965, %v1978
        %v1980 = vpop.f32.mrf.mxu0
        %v1981 = vadd.f32 %v1967, %v1980
        %1982 = vdwg.mxu0
        %v1983 = vadd.f32 %v1521, %v1979
        %v1984 = vadd.f32 %v1522, %v1981
        %v1985 = vld [vmem:[%s2] sm:$0x1]
        %v1987 = vperm.slane %v1985, 0
        %v1989 = vadd.f32 %v1983, %v1987
        %v1990 = vadd.f32 %v1984, %v1987
        %v1991 = vmax.f32 %v1989, 0.0
        %v1992 = vmax.f32 %v1990, 0.0
        %1993 = vst [vmem:[#allocation2] sm:$0x7] 0
        %1994 = vst [vmem:[#allocation2 + $0x4] sm:$0x7] 0
        %1995 = vst [vmem:[#allocation2 + $0x8] sm:$0x7] 0
        %1996 = vst [vmem:[#allocation2 + $0xc] sm:$0x7] 0
        %1997 = vst [vmem:[#allocation2 + $0x10] sm:$0x7] 0
        %1998 = vst [vmem:[#allocation2 + $0x14] sm:$0x7] 0
        %v2001 = vrot.slane %v1991, 4
        %v2002 = vrot.slane %v1992, 4
        %v2005 = vpack.c.bf16 %v1991, %v1991
        %v2006 = vpack.c.bf16 %v2001, %v2001
        %v2007 = vpack.c.bf16 %v1992, %v1992
        %v2008 = vpack.c.bf16 %v2002, %v2002
        %v2010 = vshrl.u32 %v2005, 16
        %v2012 = vrot.slane %v2010, 7
        %v2013 = vshll.u32 %v2005, 16
        %v2015 = vor.u32 %v2012, %v2013
        %v2017 = vshrl.u32 %v2006, 16
        %v2019 = vrot.slane %v2017, 7
        %v2020 = vshll.u32 %v2006, 16
        %v2022 = vor.u32 %v2019, %v2020
        %v2024 = vshrl.u32 %v2007, 16
        %v2026 = vrot.slane %v2024, 7
        %v2027 = vshll.u32 %v2007, 16
        %v2029 = vor.u32 %v2026, %v2027
        %v2031 = vshrl.u32 %v2008, 16
        %v2033 = vrot.slane %v2031, 7
        %v2034 = vshll.u32 %v2008, 16
        %v2036 = vor.u32 %v2033, %v2034
        %s2041 = scalar_lea.vmem [#allocation2], 4
        %vm2042 = vcmask 1042432
        %vm2043 = vsmask.f32 2306
        %vm2044 = vmand %vm2042, %vm2043
        %v2045 = vld [vmem:[%s2041] sm:$0x7]
        %v2046 = vsel %vm2044, %v2015, %v2045
        %2047 = vst [vmem:[%s2041] sm:$0x7] %v2046
        %v2048 = vld [vmem:[%s2041 + $0x4] sm:$0x7]
        %v2049 = vsel %vm2044, %v2022, %v2048
        %2050 = vst [vmem:[%s2041 + $0x4] sm:$0x7] %v2049
        %v2051 = vld [vmem:[%s2041 + $0x8] sm:$0x7]
        %v2052 = vsel %vm2044, %v2029, %v2051
        %2053 = vst [vmem:[%s2041 + $0x8] sm:$0x7] %v2052
        %v2054 = vld [vmem:[%s2041 + $0xc] sm:$0x7]
        %v2055 = vsel %vm2044, %v2036, %v2054
        %2056 = vst [vmem:[%s2041 + $0xc] sm:$0x7] %v2055
        %v2057 = vld [vmem:[#allocation2] sm:$0x3]
        %v2058 = vld [vmem:[#allocation2 + $0x4] sm:$0x3]
        %v2059 = vld [vmem:[#allocation2 + $0x8] sm:$0x3]
        %v2060 = vld [vmem:[#allocation2 + $0xc] sm:$0x3]
        %v2061 = vld [vmem:[%s3] sm:$0xf]
        %v2062 = vld [vmem:[%s3 + $0x4] sm:$0xf]
        %v2063 = vld [vmem:[%s3 + $0x8] sm:$0xf]
        %v2064 = vld [vmem:[%s3 + $0xc] sm:$0xf]
        %v2065 = vld [vmem:[%s3 + $0x10] sm:$0xf]
        %v2066 = vld [vmem:[%s3 + $0x14] sm:$0xf]
        %v2067 = vld [vmem:[%s3 + $0x18] sm:$0xf]
        %v2068 = vld [vmem:[%s3 + $0x1c] sm:$0xf]
        %v2069 = vld [vmem:[%s3 + $0x20] sm:$0xf]
        %v2070 = vld [vmem:[%s3 + $0x24] sm:$0xf]
        %v2071 = vld [vmem:[%s3 + $0x28] sm:$0xf]
        %v2072 = vld [vmem:[%s3 + $0x2c] sm:$0xf]
        %v2073 = vld [vmem:[%s3 + $0x30] sm:$0xf]
        %v2074 = vld [vmem:[%s3 + $0x34] sm:$0xf]
        %v2075 = vld [vmem:[%s3 + $0x38] sm:$0xf]
        %v2076 = vld [vmem:[%s3 + $0x3c] sm:$0xf]
        %v2077 = vld [vmem:[#allocation2] sm:$0x7]
        %v2078 = vld [vmem:[#allocation2 + $0x4] sm:$0x7]
        %v2079 = vld [vmem:[#allocation2 + $0x8] sm:$0x7]
        %v2080 = vld [vmem:[#allocation2 + $0xc] sm:$0x7]
        %v2085 = vrot.slane %v2077, 2
        %v2086 = vrot.slane %v2078, 2
        %v2087 = vrot.slane %v2079, 2
        %v2088 = vrot.slane %v2080, 2
        %v2091 = vsel %vm308, %v2077, %v2085
        %v2092 = vsel %vm438, %v2077, %v2085
        %v2094 = vrot.slane %v2092, 2
        %v2097 = vsel %vm308, %v2078, %v2086
        %v2098 = vsel %vm438, %v2078, %v2086
        %v2100 = vrot.slane %v2098, 2
        %v2103 = vsel %vm308, %v2079, %v2087
        %v2104 = vsel %vm438, %v2079, %v2087
        %v2106 = vrot.slane %v2104, 2
        %v2109 = vsel %vm308, %v2080, %v2088
        %v2110 = vsel %vm438, %v2080, %v2088
        %v2112 = vrot.slane %v2110, 2
        %v2113 = vshrl.u32 %v2091, 16
        %v2115 = vrot.slane %v2113, 6
        %v2116 = vshll.u32 %v2091, 16
        %v2118 = vrot.slane %v2116, 7
        %v2119 = vor.u32 %v2115, %v2118
        %v2120 = vrot.slane %v2119, 2
        %v2122 = vshll.u32 %v2094, 16
        %v2124 = vrot.slane %v2122, 7
        %v2125 = vsel %vm488, %v2120, %v2124
        %v2126 = vshrl.u32 %v2097, 16
        %v2128 = vrot.slane %v2126, 6
        %v2129 = vshll.u32 %v2097, 16
        %v2131 = vrot.slane %v2129, 7
        %v2132 = vor.u32 %v2128, %v2131
        %v2133 = vrot.slane %v2132, 2
        %v2135 = vshll.u32 %v2100, 16
        %v2137 = vrot.slane %v2135, 7
        %v2138 = vsel %vm488, %v2133, %v2137
        %v2139 = vshrl.u32 %v2103, 16
        %v2141 = vrot.slane %v2139, 6
        %v2142 = vshll.u32 %v2103, 16
        %v2144 = vrot.slane %v2142, 7
        %v2145 = vor.u32 %v2141, %v2144
        %v2146 = vrot.slane %v2145, 2
        %v2148 = vshll.u32 %v2106, 16
        %v2150 = vrot.slane %v2148, 7
        %v2151 = vsel %vm488, %v2146, %v2150
        %v2152 = vshrl.u32 %v2109, 16
        %v2154 = vrot.slane %v2152, 6
        %v2155 = vshll.u32 %v2109, 16
        %v2157 = vrot.slane %v2155, 7
        %v2158 = vor.u32 %v2154, %v2157
        %v2159 = vrot.slane %v2158, 2
        %v2161 = vshll.u32 %v2112, 16
        %v2163 = vrot.slane %v2161, 7
        %v2164 = vsel %vm488, %v2159, %v2163
        %s2165 = scalar_lea.vmem %s3, 64
        %v2166 = vld [vmem:[%s2165] sm:$0xf]
        %v2167 = vld [vmem:[%s2165 + $0x4] sm:$0xf]
        %v2168 = vld [vmem:[%s2165 + $0x8] sm:$0xf]
        %v2169 = vld [vmem:[%s2165 + $0xc] sm:$0xf]
        %v2170 = vld [vmem:[%s2165 + $0x10] sm:$0xf]
        %v2171 = vld [vmem:[%s2165 + $0x14] sm:$0xf]
        %v2172 = vld [vmem:[%s2165 + $0x18] sm:$0xf]
        %v2173 = vld [vmem:[%s2165 + $0x1c] sm:$0xf]
        %v2174 = vld [vmem:[%s2165 + $0x20] sm:$0xf]
        %v2175 = vld [vmem:[%s2165 + $0x24] sm:$0xf]
        %v2176 = vld [vmem:[%s2165 + $0x28] sm:$0xf]
        %v2177 = vld [vmem:[%s2165 + $0x2c] sm:$0xf]
        %v2178 = vld [vmem:[%s2165 + $0x30] sm:$0xf]
        %v2179 = vld [vmem:[%s2165 + $0x34] sm:$0xf]
        %v2180 = vld [vmem:[%s2165 + $0x38] sm:$0xf]
        %v2181 = vld [vmem:[%s2165 + $0x3c] sm:$0xf]
        %2183 = vst [vmem:[#allocation1] ss:$4 sm:$0xff] %v2125
        %s2185 = scalar_lea.vmem [#allocation1], 1
        %2186 = vst [vmem:[%s2185] ss:$4 sm:$0xff] %v2138
        %s2188 = scalar_lea.vmem [#allocation1], 2
        %2189 = vst [vmem:[%s2188] ss:$4 sm:$0xff] %v2151
        %s2191 = scalar_lea.vmem [#allocation1], 3
        %2192 = vst [vmem:[%s2191] ss:$4 sm:$0xff] %v2164
        %v2193 = vld.sshfl [vmem:[#allocation1] sm:$0xff pattern:$0x73625140]
        %v2211 = vunpack.c.l.b16 %v2166
        %v2212 = vunpack.c.l.b16 %v2167
        %v2213 = vunpack.c.l.b16 %v2168
        %v2214 = vunpack.c.l.b16 %v2169
        %v2215 = vunpack.c.l.b16 %v2170
        %v2216 = vunpack.c.l.b16 %v2171
        %v2217 = vunpack.c.l.b16 %v2172
        %v2218 = vunpack.c.l.b16 %v2173
        %v2219 = vunpack.c.l.b16 %v2174
        %v2220 = vunpack.c.l.b16 %v2175
        %v2221 = vunpack.c.l.b16 %v2176
        %v2222 = vunpack.c.l.b16 %v2177
        %v2223 = vunpack.c.l.b16 %v2178
        %v2224 = vunpack.c.l.b16 %v2179
        %v2225 = vunpack.c.l.b16 %v2180
        %v2226 = vunpack.c.l.b16 %v2181
        %v2227 = vpack.c.b16 %v2212, %v2211
        %v2228 = vpack.c.b16 %v2214, %v2213
        %v2229 = vpack.c.b16 %v2216, %v2215
        %v2230 = vpack.c.b16 %v2218, %v2217
        %v2231 = vpack.c.b16 %v2220, %v2219
        %v2232 = vpack.c.b16 %v2222, %v2221
        %v2233 = vpack.c.b16 %v2224, %v2223
        %v2234 = vpack.c.b16 %v2226, %v2225
        %2243 = vmatpush.bf16.msra.mxu0 %v2234
        %2244 = vmatpush.bf16.msra.mxu0 %v2233
        %2245 = vmatpush.bf16.msra.mxu0 %v2232
        %2246 = vmatpush.bf16.msra.mxu0 %v2231
        %2247 = vmatpush.bf16.msra.mxu0 %v2230
        %2248 = vmatpush.bf16.msra.mxu0 %v2229
        %2249 = vmatpush.bf16.msra.mxu0 %v2228
        %2250 = vmatpush.bf16.msra.mxu0 %v2227
        %2251 = vmatmul.bf16.gmra.mxu0 %v2193
        %v2252 = vpop.f32.mrf.mxu0
        %v2253 = vadd.f32 0.0, %v2252
        %v2254 = vpop.f32.mrf.mxu0
        %v2255 = vadd.f32 0.0, %v2254
        %2256 = vdwg.mxu0
        %2258 = vst [vmem:[#allocation1] ss:$4 sm:$0xff] %v2057
        %s2260 = scalar_lea.vmem [#allocation1], 1
        %2261 = vst [vmem:[%s2260] ss:$4 sm:$0xff] %v2058
        %s2263 = scalar_lea.vmem [#allocation1], 2
        %2264 = vst [vmem:[%s2263] ss:$4 sm:$0xff] %v2059
        %s2266 = scalar_lea.vmem [#allocation1], 3
        %2267 = vst [vmem:[%s2266] ss:$4 sm:$0xff] %v2060
        %v2268 = vld.sshfl [vmem:[#allocation1] sm:$0xff pattern:$0x73625140]
        %v2286 = vunpack.c.l.b16 %v2061
        %v2287 = vunpack.c.l.b16 %v2062
        %v2288 = vunpack.c.l.b16 %v2063
        %v2289 = vunpack.c.l.b16 %v2064
        %v2290 = vunpack.c.l.b16 %v2065
        %v2291 = vunpack.c.l.b16 %v2066
        %v2292 = vunpack.c.l.b16 %v2067
        %v2293 = vunpack.c.l.b16 %v2068
        %v2294 = vunpack.c.l.b16 %v2069
        %v2295 = vunpack.c.l.b16 %v2070
        %v2296 = vunpack.c.l.b16 %v2071
        %v2297 = vunpack.c.l.b16 %v2072
        %v2298 = vunpack.c.l.b16 %v2073
        %v2299 = vunpack.c.l.b16 %v2074
        %v2300 = vunpack.c.l.b16 %v2075
        %v2301 = vunpack.c.l.b16 %v2076
        %v2302 = vpack.c.b16 %v2287, %v2286
        %v2303 = vpack.c.b16 %v2289, %v2288
        %v2304 = vpack.c.b16 %v2291, %v2290
        %v2305 = vpack.c.b16 %v2293, %v2292
        %v2306 = vpack.c.b16 %v2295, %v2294
        %v2307 = vpack.c.b16 %v2297, %v2296
        %v2308 = vpack.c.b16 %v2299, %v2298
        %v2309 = vpack.c.b16 %v2301, %v2300
        %2318 = vmatpush.bf16.msra.mxu0 %v2309
        %2319 = vmatpush.bf16.msra.mxu0 %v2308
        %2320 = vmatpush.bf16.msra.mxu0 %v2307
        %2321 = vmatpush.bf16.msra.mxu0 %v2306
        %2322 = vmatpush.bf16.msra.mxu0 %v2305
        %2323 = vmatpush.bf16.msra.mxu0 %v2304
        %2324 = vmatpush.bf16.msra.mxu0 %v2303
        %2325 = vmatpush.bf16.msra.mxu0 %v2302
        %2326 = vmatmul.bf16.gmra.mxu0 %v2268
        %v2327 = vpop.f32.mrf.mxu0
        %v2328 = vadd.f32 %v2253, %v2327
        %v2329 = vpop.f32.mrf.mxu0
        %v2330 = vadd.f32 %v2255, %v2329
        %2331 = vdwg.mxu0
        %v2332 = vld [vmem:[#allocation2] sm:$0x6]
        %v2333 = vld [vmem:[#allocation2 + $0x4] sm:$0x6]
        %v2334 = vld [vmem:[#allocation2 + $0x8] sm:$0x6]
        %v2335 = vld [vmem:[#allocation2 + $0xc] sm:$0x6]
        %v2340 = vrot.slane %v2332, 2
        %v2341 = vrot.slane %v2333, 2
        %v2342 = vrot.slane %v2334, 2
        %v2343 = vrot.slane %v2335, 2
        %v2346 = vsel %vm308, %v2332, %v2340
        %v2348 = vsel %vm438, %v2332, %v2340
        %v2350 = vrot.slane %v2348, 2
        %v2353 = vsel %vm308, %v2333, %v2341
        %v2355 = vsel %vm438, %v2333, %v2341
        %v2357 = vrot.slane %v2355, 2
        %v2360 = vsel %vm308, %v2334, %v2342
        %v2362 = vsel %vm438, %v2334, %v2342
        %v2364 = vrot.slane %v2362, 2
        %v2367 = vsel %vm308, %v2335, %v2343
        %v2369 = vsel %vm438, %v2335, %v2343
        %v2371 = vrot.slane %v2369, 2
        %vm2372 = vcmask 1040384
        %vm2373 = vcmask 1042434
        %vm2374 = vmor %vm2372, %vm2373
        %vm2375 = vcmask 1044484
        %vm2376 = vmor %vm2374, %vm2375
        %vm2377 = vcmask 1046534
        %vm2378 = vmor %vm2376, %vm2377
        %v2379 = vrot.slane %v2346, 7
        %v2380 = vrot.slane %v2379, 2
        %v2381 = vrot.slane %v2350, 7
        %v2382 = vsel %vm2378, %v2380, %v2381
        %v2383 = vrot.slane %v2353, 7
        %v2384 = vrot.slane %v2383, 2
        %v2385 = vrot.slane %v2357, 7
        %v2386 = vsel %vm2378, %v2384, %v2385
        %v2387 = vrot.slane %v2360, 7
        %v2388 = vrot.slane %v2387, 2
        %v2389 = vrot.slane %v2364, 7
        %v2390 = vsel %vm2378, %v2388, %v2389
        %v2391 = vrot.slane %v2367, 7
        %v2392 = vrot.slane %v2391, 2
        %v2393 = vrot.slane %v2371, 7
        %v2394 = vsel %vm2378, %v2392, %v2393
        %s2395 = scalar_lea.vmem %s3, 128
        %v2396 = vld [vmem:[%s2395] sm:$0xf]
        %v2397 = vld [vmem:[%s2395 + $0x4] sm:$0xf]
        %v2398 = vld [vmem:[%s2395 + $0x8] sm:$0xf]
        %v2399 = vld [vmem:[%s2395 + $0xc] sm:$0xf]
        %v2400 = vld [vmem:[%s2395 + $0x10] sm:$0xf]
        %v2401 = vld [vmem:[%s2395 + $0x14] sm:$0xf]
        %v2402 = vld [vmem:[%s2395 + $0x18] sm:$0xf]
        %v2403 = vld [vmem:[%s2395 + $0x1c] sm:$0xf]
        %v2404 = vld [vmem:[%s2395 + $0x20] sm:$0xf]
        %v2405 = vld [vmem:[%s2395 + $0x24] sm:$0xf]
        %v2406 = vld [vmem:[%s2395 + $0x28] sm:$0xf]
        %v2407 = vld [vmem:[%s2395 + $0x2c] sm:$0xf]
        %v2408 = vld [vmem:[%s2395 + $0x30] sm:$0xf]
        %v2409 = vld [vmem:[%s2395 + $0x34] sm:$0xf]
        %v2410 = vld [vmem:[%s2395 + $0x38] sm:$0xf]
        %v2411 = vld [vmem:[%s2395 + $0x3c] sm:$0xf]
        %2413 = vst [vmem:[#allocation1] ss:$4 sm:$0xff] %v2382
        %s2415 = scalar_lea.vmem [#allocation1], 1
        %2416 = vst [vmem:[%s2415] ss:$4 sm:$0xff] %v2386
        %s2418 = scalar_lea.vmem [#allocation1], 2
        %2419 = vst [vmem:[%s2418] ss:$4 sm:$0xff] %v2390
        %s2421 = scalar_lea.vmem [#allocation1], 3
        %2422 = vst [vmem:[%s2421] ss:$4 sm:$0xff] %v2394
        %v2423 = vld.sshfl [vmem:[#allocation1] sm:$0xff pattern:$0x73625140]
        %v2441 = vunpack.c.l.b16 %v2396
        %v2442 = vunpack.c.l.b16 %v2397
        %v2443 = vunpack.c.l.b16 %v2398
        %v2444 = vunpack.c.l.b16 %v2399
        %v2445 = vunpack.c.l.b16 %v2400
        %v2446 = vunpack.c.l.b16 %v2401
        %v2447 = vunpack.c.l.b16 %v2402
        %v2448 = vunpack.c.l.b16 %v2403
        %v2449 = vunpack.c.l.b16 %v2404
        %v2450 = vunpack.c.l.b16 %v2405
        %v2451 = vunpack.c.l.b16 %v2406
        %v2452 = vunpack.c.l.b16 %v2407
        %v2453 = vunpack.c.l.b16 %v2408
        %v2454 = vunpack.c.l.b16 %v2409
        %v2455 = vunpack.c.l.b16 %v2410
        %v2456 = vunpack.c.l.b16 %v2411
        %v2457 = vpack.c.b16 %v2442, %v2441
        %v2458 = vpack.c.b16 %v2444, %v2443
        %v2459 = vpack.c.b16 %v2446, %v2445
        %v2460 = vpack.c.b16 %v2448, %v2447
        %v2461 = vpack.c.b16 %v2450, %v2449
        %v2462 = vpack.c.b16 %v2452, %v2451
        %v2463 = vpack.c.b16 %v2454, %v2453
        %v2464 = vpack.c.b16 %v2456, %v2455
        %2473 = vmatpush.bf16.msra.mxu0 %v2464
        %2474 = vmatpush.bf16.msra.mxu0 %v2463
        %2475 = vmatpush.bf16.msra.mxu0 %v2462
        %2476 = vmatpush.bf16.msra.mxu0 %v2461
        %2477 = vmatpush.bf16.msra.mxu0 %v2460
        %2478 = vmatpush.bf16.msra.mxu0 %v2459
        %2479 = vmatpush.bf16.msra.mxu0 %v2458
        %2480 = vmatpush.bf16.msra.mxu0 %v2457
        %2481 = vmatmul.bf16.gmra.mxu0 %v2423
        %v2482 = vpop.f32.mrf.mxu0
        %v2483 = vadd.f32 0.0, %v2482
        %v2484 = vpop.f32.mrf.mxu0
        %v2485 = vadd.f32 0.0, %v2484
        %2486 = vdwg.mxu0
        %v2487 = vadd.f32 %v2328, %v2483
        %v2488 = vadd.f32 %v2330, %v2485
        %v2489 = vld [vmem:[%s2041] sm:$0x3]
        %v2490 = vld [vmem:[%s2041 + $0x4] sm:$0x3]
        %v2491 = vld [vmem:[%s2041 + $0x8] sm:$0x3]
        %v2492 = vld [vmem:[%s2041 + $0xc] sm:$0x3]
        %s2493 = scalar_lea.vmem %s3, 192
        %v2494 = vld [vmem:[%s2493] sm:$0xf]
        %v2495 = vld [vmem:[%s2493 + $0x4] sm:$0xf]
        %v2496 = vld [vmem:[%s2493 + $0x8] sm:$0xf]
        %v2497 = vld [vmem:[%s2493 + $0xc] sm:$0xf]
        %v2498 = vld [vmem:[%s2493 + $0x10] sm:$0xf]
        %v2499 = vld [vmem:[%s2493 + $0x14] sm:$0xf]
        %v2500 = vld [vmem:[%s2493 + $0x18] sm:$0xf]
        %v2501 = vld [vmem:[%s2493 + $0x1c] sm:$0xf]
        %v2502 = vld [vmem:[%s2493 + $0x20] sm:$0xf]
        %v2503 = vld [vmem:[%s2493 + $0x24] sm:$0xf]
        %v2504 = vld [vmem:[%s2493 + $0x28] sm:$0xf]
        %v2505 = vld [vmem:[%s2493 + $0x2c] sm:$0xf]
        %v2506 = vld [vmem:[%s2493 + $0x30] sm:$0xf]
        %v2507 = vld [vmem:[%s2493 + $0x34] sm:$0xf]
        %v2508 = vld [vmem:[%s2493 + $0x38] sm:$0xf]
        %v2509 = vld [vmem:[%s2493 + $0x3c] sm:$0xf]
        %2511 = vst [vmem:[#allocation1] ss:$4 sm:$0xff] %v2489
        %s2513 = scalar_lea.vmem [#allocation1], 1
        %2514 = vst [vmem:[%s2513] ss:$4 sm:$0xff] %v2490
        %s2516 = scalar_lea.vmem [#allocation1], 2
        %2517 = vst [vmem:[%s2516] ss:$4 sm:$0xff] %v2491
        %s2519 = scalar_lea.vmem [#allocation1], 3
        %2520 = vst [vmem:[%s2519] ss:$4 sm:$0xff] %v2492
        %v2521 = vld.sshfl [vmem:[#allocation1] sm:$0xff pattern:$0x73625140]
        %v2539 = vunpack.c.l.b16 %v2494
        %v2540 = vunpack.c.l.b16 %v2495
        %v2541 = vunpack.c.l.b16 %v2496
        %v2542 = vunpack.c.l.b16 %v2497
        %v2543 = vunpack.c.l.b16 %v2498
        %v2544 = vunpack.c.l.b16 %v2499
        %v2545 = vunpack.c.l.b16 %v2500
        %v2546 = vunpack.c.l.b16 %v2501
        %v2547 = vunpack.c.l.b16 %v2502
        %v2548 = vunpack.c.l.b16 %v2503
        %v2549 = vunpack.c.l.b16 %v2504
        %v2550 = vunpack.c.l.b16 %v2505
        %v2551 = vunpack.c.l.b16 %v2506
        %v2552 = vunpack.c.l.b16 %v2507
        %v2553 = vunpack.c.l.b16 %v2508
        %v2554 = vunpack.c.l.b16 %v2509
        %v2555 = vpack.c.b16 %v2540, %v2539
        %v2556 = vpack.c.b16 %v2542, %v2541
        %v2557 = vpack.c.b16 %v2544, %v2543
        %v2558 = vpack.c.b16 %v2546, %v2545
        %v2559 = vpack.c.b16 %v2548, %v2547
        %v2560 = vpack.c.b16 %v2550, %v2549
        %v2561 = vpack.c.b16 %v2552, %v2551
        %v2562 = vpack.c.b16 %v2554, %v2553
        %2571 = vmatpush.bf16.msra.mxu0 %v2562
        %2572 = vmatpush.bf16.msra.mxu0 %v2561
        %2573 = vmatpush.bf16.msra.mxu0 %v2560
        %2574 = vmatpush.bf16.msra.mxu0 %v2559
        %2575 = vmatpush.bf16.msra.mxu0 %v2558
        %2576 = vmatpush.bf16.msra.mxu0 %v2557
        %2577 = vmatpush.bf16.msra.mxu0 %v2556
        %2578 = vmatpush.bf16.msra.mxu0 %v2555
        %2579 = vmatmul.bf16.gmra.mxu0 %v2521
        %v2580 = vpop.f32.mrf.mxu0
        %v2581 = vadd.f32 0.0, %v2580
        %v2582 = vpop.f32.mrf.mxu0
        %v2583 = vadd.f32 0.0, %v2582
        %2584 = vdwg.mxu0
        %v2585 = vadd.f32 %v2487, %v2581
        %v2586 = vadd.f32 %v2488, %v2583
        %v2587 = vld [vmem:[%s2041] sm:$0x7]
        %v2588 = vld [vmem:[%s2041 + $0x4] sm:$0x7]
        %v2589 = vld [vmem:[%s2041 + $0x8] sm:$0x7]
        %v2590 = vld [vmem:[%s2041 + $0xc] sm:$0x7]
        %v2595 = vrot.slane %v2587, 2
        %v2596 = vrot.slane %v2588, 2
        %v2597 = vrot.slane %v2589, 2
        %v2598 = vrot.slane %v2590, 2
        %v2601 = vsel %vm308, %v2587, %v2595
        %v2602 = vsel %vm438, %v2587, %v2595
        %v2604 = vrot.slane %v2602, 2
        %v2607 = vsel %vm308, %v2588, %v2596
        %v2608 = vsel %vm438, %v2588, %v2596
        %v2610 = vrot.slane %v2608, 2
        %v2613 = vsel %vm308, %v2589, %v2597
        %v2614 = vsel %vm438, %v2589, %v2597
        %v2616 = vrot.slane %v2614, 2
        %v2619 = vsel %vm308, %v2590, %v2598
        %v2620 = vsel %vm438, %v2590, %v2598
        %v2622 = vrot.slane %v2620, 2
        %v2623 = vshrl.u32 %v2601, 16
        %v2625 = vrot.slane %v2623, 6
        %v2626 = vshll.u32 %v2601, 16
        %v2628 = vrot.slane %v2626, 7
        %v2629 = vor.u32 %v2625, %v2628
        %v2630 = vrot.slane %v2629, 2
        %v2632 = vshll.u32 %v2604, 16
        %v2634 = vrot.slane %v2632, 7
        %v2635 = vsel %vm488, %v2630, %v2634
        %v2636 = vshrl.u32 %v2607, 16
        %v2638 = vrot.slane %v2636, 6
        %v2639 = vshll.u32 %v2607, 16
        %v2641 = vrot.slane %v2639, 7
        %v2642 = vor.u32 %v2638, %v2641
        %v2643 = vrot.slane %v2642, 2
        %v2645 = vshll.u32 %v2610, 16
        %v2647 = vrot.slane %v2645, 7
        %v2648 = vsel %vm488, %v2643, %v2647
        %v2649 = vshrl.u32 %v2613, 16
        %v2651 = vrot.slane %v2649, 6
        %v2652 = vshll.u32 %v2613, 16
        %v2654 = vrot.slane %v2652, 7
        %v2655 = vor.u32 %v2651, %v2654
        %v2656 = vrot.slane %v2655, 2
        %v2658 = vshll.u32 %v2616, 16
        %v2660 = vrot.slane %v2658, 7
        %v2661 = vsel %vm488, %v2656, %v2660
        %v2662 = vshrl.u32 %v2619, 16
        %v2664 = vrot.slane %v2662, 6
        %v2665 = vshll.u32 %v2619, 16
        %v2667 = vrot.slane %v2665, 7
        %v2668 = vor.u32 %v2664, %v2667
        %v2669 = vrot.slane %v2668, 2
        %v2671 = vshll.u32 %v2622, 16
        %v2673 = vrot.slane %v2671, 7
        %v2674 = vsel %vm488, %v2669, %v2673
        %s2675 = scalar_lea.vmem %s3, 256
        %v2676 = vld [vmem:[%s2675] sm:$0xf]
        %v2677 = vld [vmem:[%s2675 + $0x4] sm:$0xf]
        %v2678 = vld [vmem:[%s2675 + $0x8] sm:$0xf]
        %v2679 = vld [vmem:[%s2675 + $0xc] sm:$0xf]
        %v2680 = vld [vmem:[%s2675 + $0x10] sm:$0xf]
        %v2681 = vld [vmem:[%s2675 + $0x14] sm:$0xf]
        %v2682 = vld [vmem:[%s2675 + $0x18] sm:$0xf]
        %v2683 = vld [vmem:[%s2675 + $0x1c] sm:$0xf]
        %v2684 = vld [vmem:[%s2675 + $0x20] sm:$0xf]
        %v2685 = vld [vmem:[%s2675 + $0x24] sm:$0xf]
        %v2686 = vld [vmem:[%s2675 + $0x28] sm:$0xf]
        %v2687 = vld [vmem:[%s2675 + $0x2c] sm:$0xf]
        %v2688 = vld [vmem:[%s2675 + $0x30] sm:$0xf]
        %v2689 = vld [vmem:[%s2675 + $0x34] sm:$0xf]
        %v2690 = vld [vmem:[%s2675 + $0x38] sm:$0xf]
        %v2691 = vld [vmem:[%s2675 + $0x3c] sm:$0xf]
        %2693 = vst [vmem:[#allocation1] ss:$4 sm:$0xff] %v2635
        %s2695 = scalar_lea.vmem [#allocation1], 1
        %2696 = vst [vmem:[%s2695] ss:$4 sm:$0xff] %v2648
        %s2698 = scalar_lea.vmem [#allocation1], 2
        %2699 = vst [vmem:[%s2698] ss:$4 sm:$0xff] %v2661
        %s2701 = scalar_lea.vmem [#allocation1], 3
        %2702 = vst [vmem:[%s2701] ss:$4 sm:$0xff] %v2674
        %v2703 = vld.sshfl [vmem:[#allocation1] sm:$0xff pattern:$0x73625140]
        %v2721 = vunpack.c.l.b16 %v2676
        %v2722 = vunpack.c.l.b16 %v2677
        %v2723 = vunpack.c.l.b16 %v2678
        %v2724 = vunpack.c.l.b16 %v2679
        %v2725 = vunpack.c.l.b16 %v2680
        %v2726 = vunpack.c.l.b16 %v2681
        %v2727 = vunpack.c.l.b16 %v2682
        %v2728 = vunpack.c.l.b16 %v2683
        %v2729 = vunpack.c.l.b16 %v2684
        %v2730 = vunpack.c.l.b16 %v2685
        %v2731 = vunpack.c.l.b16 %v2686
        %v2732 = vunpack.c.l.b16 %v2687
        %v2733 = vunpack.c.l.b16 %v2688
        %v2734 = vunpack.c.l.b16 %v2689
        %v2735 = vunpack.c.l.b16 %v2690
        %v2736 = vunpack.c.l.b16 %v2691
        %v2737 = vpack.c.b16 %v2722, %v2721
        %v2738 = vpack.c.b16 %v2724, %v2723
        %v2739 = vpack.c.b16 %v2726, %v2725
        %v2740 = vpack.c.b16 %v2728, %v2727
        %v2741 = vpack.c.b16 %v2730, %v2729
        %v2742 = vpack.c.b16 %v2732, %v2731
        %v2743 = vpack.c.b16 %v2734, %v2733
        %v2744 = vpack.c.b16 %v2736, %v2735
        %2753 = vmatpush.bf16.msra.mxu0 %v2744
        %2754 = vmatpush.bf16.msra.mxu0 %v2743
        %2755 = vmatpush.bf16.msra.mxu0 %v2742
        %2756 = vmatpush.bf16.msra.mxu0 %v2741
        %2757 = vmatpush.bf16.msra.mxu0 %v2740
        %2758 = vmatpush.bf16.msra.mxu0 %v2739
        %2759 = vmatpush.bf16.msra.mxu0 %v2738
        %2760 = vmatpush.bf16.msra.mxu0 %v2737
        %2761 = vmatmul.bf16.gmra.mxu0 %v2703
        %v2762 = vpop.f32.mrf.mxu0
        %v2763 = vadd.f32 0.0, %v2762
        %v2764 = vpop.f32.mrf.mxu0
        %v2765 = vadd.f32 0.0, %v2764
        %2766 = vdwg.mxu0
        %v2767 = vadd.f32 %v2585, %v2763
        %v2768 = vadd.f32 %v2586, %v2765
        %v2769 = vld [vmem:[%s2041] sm:$0x6]
        %v2770 = vld [vmem:[%s2041 + $0x4] sm:$0x6]
        %v2771 = vld [vmem:[%s2041 + $0x8] sm:$0x6]
        %v2772 = vld [vmem:[%s2041 + $0xc] sm:$0x6]
        %v2777 = vrot.slane %v2769, 2
        %v2778 = vrot.slane %v2770, 2
        %v2779 = vrot.slane %v2771, 2
        %v2780 = vrot.slane %v2772, 2
        %v2783 = vsel %vm308, %v2769, %v2777
        %v2785 = vsel %vm438, %v2769, %v2777
        %v2787 = vrot.slane %v2785, 2
        %v2790 = vsel %vm308, %v2770, %v2778
        %v2792 = vsel %vm438, %v2770, %v2778
        %v2794 = vrot.slane %v2792, 2
        %v2797 = vsel %vm308, %v2771, %v2779
        %v2799 = vsel %vm438, %v2771, %v2779
        %v2801 = vrot.slane %v2799, 2
        %v2804 = vsel %vm308, %v2772, %v2780
        %v2806 = vsel %vm438, %v2772, %v2780
        %v2808 = vrot.slane %v2806, 2
        %v2809 = vrot.slane %v2783, 7
        %v2810 = vrot.slane %v2809, 2
        %v2811 = vrot.slane %v2787, 7
        %v2812 = vsel %vm2378, %v2810, %v2811
        %v2813 = vrot.slane %v2790, 7
        %v2814 = vrot.slane %v2813, 2
        %v2815 = vrot.slane %v2794, 7
        %v2816 = vsel %vm2378, %v2814, %v2815
        %v2817 = vrot.slane %v2797, 7
        %v2818 = vrot.slane %v2817, 2
        %v2819 = vrot.slane %v2801, 7
        %v2820 = vsel %vm2378, %v2818, %v2819
        %v2821 = vrot.slane %v2804, 7
        %v2822 = vrot.slane %v2821, 2
        %v2823 = vrot.slane %v2808, 7
        %v2824 = vsel %vm2378, %v2822, %v2823
        %s2825 = scalar_lea.vmem %s3, 320
        %v2826 = vld [vmem:[%s2825] sm:$0xf]
        %v2827 = vld [vmem:[%s2825 + $0x4] sm:$0xf]
        %v2828 = vld [vmem:[%s2825 + $0x8] sm:$0xf]
        %v2829 = vld [vmem:[%s2825 + $0xc] sm:$0xf]
        %v2830 = vld [vmem:[%s2825 + $0x10] sm:$0xf]
        %v2831 = vld [vmem:[%s2825 + $0x14] sm:$0xf]
        %v2832 = vld [vmem:[%s2825 + $0x18] sm:$0xf]
        %v2833 = vld [vmem:[%s2825 + $0x1c] sm:$0xf]
        %v2834 = vld [vmem:[%s2825 + $0x20] sm:$0xf]
        %v2835 = vld [vmem:[%s2825 + $0x24] sm:$0xf]
        %v2836 = vld [vmem:[%s2825 + $0x28] sm:$0xf]
        %v2837 = vld [vmem:[%s2825 + $0x2c] sm:$0xf]
        %v2838 = vld [vmem:[%s2825 + $0x30] sm:$0xf]
        %v2839 = vld [vmem:[%s2825 + $0x34] sm:$0xf]
        %v2840 = vld [vmem:[%s2825 + $0x38] sm:$0xf]
        %v2841 = vld [vmem:[%s2825 + $0x3c] sm:$0xf]
        %2843 = vst [vmem:[#allocation1] ss:$4 sm:$0xff] %v2812
        %s2845 = scalar_lea.vmem [#allocation1], 1
        %2846 = vst [vmem:[%s2845] ss:$4 sm:$0xff] %v2816
        %s2848 = scalar_lea.vmem [#allocation1], 2
        %2849 = vst [vmem:[%s2848] ss:$4 sm:$0xff] %v2820
        %s2851 = scalar_lea.vmem [#allocation1], 3
        %2852 = vst [vmem:[%s2851] ss:$4 sm:$0xff] %v2824
        %v2853 = vld.sshfl [vmem:[#allocation1] sm:$0xff pattern:$0x73625140]
        %v2871 = vunpack.c.l.b16 %v2826
        %v2872 = vunpack.c.l.b16 %v2827
        %v2873 = vunpack.c.l.b16 %v2828
        %v2874 = vunpack.c.l.b16 %v2829
        %v2875 = vunpack.c.l.b16 %v2830
        %v2876 = vunpack.c.l.b16 %v2831
        %v2877 = vunpack.c.l.b16 %v2832
        %v2878 = vunpack.c.l.b16 %v2833
        %v2879 = vunpack.c.l.b16 %v2834
        %v2880 = vunpack.c.l.b16 %v2835
        %v2881 = vunpack.c.l.b16 %v2836
        %v2882 = vunpack.c.l.b16 %v2837
        %v2883 = vunpack.c.l.b16 %v2838
        %v2884 = vunpack.c.l.b16 %v2839
        %v2885 = vunpack.c.l.b16 %v2840
        %v2886 = vunpack.c.l.b16 %v2841
        %v2887 = vpack.c.b16 %v2872, %v2871
        %v2888 = vpack.c.b16 %v2874, %v2873
        %v2889 = vpack.c.b16 %v2876, %v2875
        %v2890 = vpack.c.b16 %v2878, %v2877
        %v2891 = vpack.c.b16 %v2880, %v2879
        %v2892 = vpack.c.b16 %v2882, %v2881
        %v2893 = vpack.c.b16 %v2884, %v2883
        %v2894 = vpack.c.b16 %v2886, %v2885
        %2903 = vmatpush.bf16.msra.mxu0 %v2894
        %2904 = vmatpush.bf16.msra.mxu0 %v2893
        %2905 = vmatpush.bf16.msra.mxu0 %v2892
        %2906 = vmatpush.bf16.msra.mxu0 %v2891
        %2907 = vmatpush.bf16.msra.mxu0 %v2890
        %2908 = vmatpush.bf16.msra.mxu0 %v2889
        %2909 = vmatpush.bf16.msra.mxu0 %v2888
        %2910 = vmatpush.bf16.msra.mxu0 %v2887
        %2911 = vmatmul.bf16.gmra.mxu0 %v2853
        %v2912 = vpop.f32.mrf.mxu0
        %v2913 = vadd.f32 0.0, %v2912
        %v2914 = vpop.f32.mrf.mxu0
        %v2915 = vadd.f32 0.0, %v2914
        %2916 = vdwg.mxu0
        %v2917 = vadd.f32 %v2767, %v2913
        %v2918 = vadd.f32 %v2768, %v2915
        %s2919 = scalar_lea.vmem [#allocation2], 8
        %v2920 = vld [vmem:[%s2919] sm:$0x3]
        %v2921 = vld [vmem:[%s2919 + $0x4] sm:$0x3]
        %v2922 = vld [vmem:[%s2919 + $0x8] sm:$0x3]
        %v2923 = vld [vmem:[%s2919 + $0xc] sm:$0x3]
        %s2924 = scalar_lea.vmem %s3, 384
        %v2925 = vld [vmem:[%s2924] sm:$0xf]
        %v2926 = vld [vmem:[%s2924 + $0x4] sm:$0xf]
        %v2927 = vld [vmem:[%s2924 + $0x8] sm:$0xf]
        %v2928 = vld [vmem:[%s2924 + $0xc] sm:$0xf]
        %v2929 = vld [vmem:[%s2924 + $0x10] sm:$0xf]
        %v2930 = vld [vmem:[%s2924 + $0x14] sm:$0xf]
        %v2931 = vld [vmem:[%s2924 + $0x18] sm:$0xf]
        %v2932 = vld [vmem:[%s2924 + $0x1c] sm:$0xf]
        %v2933 = vld [vmem:[%s2924 + $0x20] sm:$0xf]
        %v2934 = vld [vmem:[%s2924 + $0x24] sm:$0xf]
        %v2935 = vld [vmem:[%s2924 + $0x28] sm:$0xf]
        %v2936 = vld [vmem:[%s2924 + $0x2c] sm:$0xf]
        %v2937 = vld [vmem:[%s2924 + $0x30] sm:$0xf]
        %v2938 = vld [vmem:[%s2924 + $0x34] sm:$0xf]
        %v2939 = vld [vmem:[%s2924 + $0x38] sm:$0xf]
        %v2940 = vld [vmem:[%s2924 + $0x3c] sm:$0xf]
        %2942 = vst [vmem:[#allocation1] ss:$4 sm:$0xff] %v2920
        %s2944 = scalar_lea.vmem [#allocation1], 1
        %2945 = vst [vmem:[%s2944] ss:$4 sm:$0xff] %v2921
        %s2947 = scalar_lea.vmem [#allocation1], 2
        %2948 = vst [vmem:[%s2947] ss:$4 sm:$0xff] %v2922
        %s2950 = scalar_lea.vmem [#allocation1], 3
        %2951 = vst [vmem:[%s2950] ss:$4 sm:$0xff] %v2923
        %v2952 = vld.sshfl [vmem:[#allocation1] sm:$0xff pattern:$0x73625140]
        %v2970 = vunpack.c.l.b16 %v2925
        %v2971 = vunpack.c.l.b16 %v2926
        %v2972 = vunpack.c.l.b16 %v2927
        %v2973 = vunpack.c.l.b16 %v2928
        %v2974 = vunpack.c.l.b16 %v2929
        %v2975 = vunpack.c.l.b16 %v2930
        %v2976 = vunpack.c.l.b16 %v2931
        %v2977 = vunpack.c.l.b16 %v2932
        %v2978 = vunpack.c.l.b16 %v2933
        %v2979 = vunpack.c.l.b16 %v2934
        %v2980 = vunpack.c.l.b16 %v2935
        %v2981 = vunpack.c.l.b16 %v2936
        %v2982 = vunpack.c.l.b16 %v2937
        %v2983 = vunpack.c.l.b16 %v2938
        %v2984 = vunpack.c.l.b16 %v2939
        %v2985 = vunpack.c.l.b16 %v2940
        %v2986 = vpack.c.b16 %v2971, %v2970
        %v2987 = vpack.c.b16 %v2973, %v2972
        %v2988 = vpack.c.b16 %v2975, %v2974
        %v2989 = vpack.c.b16 %v2977, %v2976
        %v2990 = vpack.c.b16 %v2979, %v2978
        %v2991 = vpack.c.b16 %v2981, %v2980
        %v2992 = vpack.c.b16 %v2983, %v2982
        %v2993 = vpack.c.b16 %v2985, %v2984
        %3002 = vmatpush.bf16.msra.mxu0 %v2993
        %3003 = vmatpush.bf16.msra.mxu0 %v2992
        %3004 = vmatpush.bf16.msra.mxu0 %v2991
        %3005 = vmatpush.bf16.msra.mxu0 %v2990
        %3006 = vmatpush.bf16.msra.mxu0 %v2989
        %3007 = vmatpush.bf16.msra.mxu0 %v2988
        %3008 = vmatpush.bf16.msra.mxu0 %v2987
        %3009 = vmatpush.bf16.msra.mxu0 %v2986
        %3010 = vmatmul.bf16.gmra.mxu0 %v2952
        %v3011 = vpop.f32.mrf.mxu0
        %v3012 = vadd.f32 0.0, %v3011
        %v3013 = vpop.f32.mrf.mxu0
        %v3014 = vadd.f32 0.0, %v3013
        %3015 = vdwg.mxu0
        %v3016 = vadd.f32 %v2917, %v3012
        %v3017 = vadd.f32 %v2918, %v3014
        %v3018 = vld [vmem:[%s2919] sm:$0x7]
        %v3019 = vld [vmem:[%s2919 + $0x4] sm:$0x7]
        %v3020 = vld [vmem:[%s2919 + $0x8] sm:$0x7]
        %v3021 = vld [vmem:[%s2919 + $0xc] sm:$0x7]
        %v3026 = vrot.slane %v3018, 2
        %v3027 = vrot.slane %v3019, 2
        %v3028 = vrot.slane %v3020, 2
        %v3029 = vrot.slane %v3021, 2
        %v3032 = vsel %vm308, %v3018, %v3026
        %v3033 = vsel %vm438, %v3018, %v3026
        %v3035 = vrot.slane %v3033, 2
        %v3038 = vsel %vm308, %v3019, %v3027
        %v3039 = vsel %vm438, %v3019, %v3027
        %v3041 = vrot.slane %v3039, 2
        %v3044 = vsel %vm308, %v3020, %v3028
        %v3045 = vsel %vm438, %v3020, %v3028
        %v3047 = vrot.slane %v3045, 2
        %v3050 = vsel %vm308, %v3021, %v3029
        %v3051 = vsel %vm438, %v3021, %v3029
        %v3053 = vrot.slane %v3051, 2
        %v3054 = vshrl.u32 %v3032, 16
        %v3056 = vrot.slane %v3054, 6
        %v3057 = vshll.u32 %v3032, 16
        %v3059 = vrot.slane %v3057, 7
        %v3060 = vor.u32 %v3056, %v3059
        %v3061 = vrot.slane %v3060, 2
        %v3063 = vshll.u32 %v3035, 16
        %v3065 = vrot.slane %v3063, 7
        %v3066 = vsel %vm488, %v3061, %v3065
        %v3067 = vshrl.u32 %v3038, 16
        %v3069 = vrot.slane %v3067, 6
        %v3070 = vshll.u32 %v3038, 16
        %v3072 = vrot.slane %v3070, 7
        %v3073 = vor.u32 %v3069, %v3072
        %v3074 = vrot.slane %v3073, 2
        %v3076 = vshll.u32 %v3041, 16
        %v3078 = vrot.slane %v3076, 7
        %v3079 = vsel %vm488, %v3074, %v3078
        %v3080 = vshrl.u32 %v3044, 16
        %v3082 = vrot.slane %v3080, 6
        %v3083 = vshll.u32 %v3044, 16
        %v3085 = vrot.slane %v3083, 7
        %v3086 = vor.u32 %v3082, %v3085
        %v3087 = vrot.slane %v3086, 2
        %v3089 = vshll.u32 %v3047, 16
        %v3091 = vrot.slane %v3089, 7
        %v3092 = vsel %vm488, %v3087, %v3091
        %v3093 = vshrl.u32 %v3050, 16
        %v3095 = vrot.slane %v3093, 6
        %v3096 = vshll.u32 %v3050, 16
        %v3098 = vrot.slane %v3096, 7
        %v3099 = vor.u32 %v3095, %v3098
        %v3100 = vrot.slane %v3099, 2
        %v3102 = vshll.u32 %v3053, 16
        %v3104 = vrot.slane %v3102, 7
        %v3105 = vsel %vm488, %v3100, %v3104
        %s3106 = scalar_lea.vmem %s3, 448
        %v3107 = vld [vmem:[%s3106] sm:$0xf]
        %v3108 = vld [vmem:[%s3106 + $0x4] sm:$0xf]
        %v3109 = vld [vmem:[%s3106 + $0x8] sm:$0xf]
        %v3110 = vld [vmem:[%s3106 + $0xc] sm:$0xf]
        %v3111 = vld [vmem:[%s3106 + $0x10] sm:$0xf]
        %v3112 = vld [vmem:[%s3106 + $0x14] sm:$0xf]
        %v3113 = vld [vmem:[%s3106 + $0x18] sm:$0xf]
        %v3114 = vld [vmem:[%s3106 + $0x1c] sm:$0xf]
        %v3115 = vld [vmem:[%s3106 + $0x20] sm:$0xf]
        %v3116 = vld [vmem:[%s3106 + $0x24] sm:$0xf]
        %v3117 = vld [vmem:[%s3106 + $0x28] sm:$0xf]
        %v3118 = vld [vmem:[%s3106 + $0x2c] sm:$0xf]
        %v3119 = vld [vmem:[%s3106 + $0x30] sm:$0xf]
        %v3120 = vld [vmem:[%s3106 + $0x34] sm:$0xf]
        %v3121 = vld [vmem:[%s3106 + $0x38] sm:$0xf]
        %v3122 = vld [vmem:[%s3106 + $0x3c] sm:$0xf]
        %3124 = vst [vmem:[#allocation1] ss:$4 sm:$0xff] %v3066
        %s3126 = scalar_lea.vmem [#allocation1], 1
        %3127 = vst [vmem:[%s3126] ss:$4 sm:$0xff] %v3079
        %s3129 = scalar_lea.vmem [#allocation1], 2
        %3130 = vst [vmem:[%s3129] ss:$4 sm:$0xff] %v3092
        %s3132 = scalar_lea.vmem [#allocation1], 3
        %3133 = vst [vmem:[%s3132] ss:$4 sm:$0xff] %v3105
        %v3134 = vld.sshfl [vmem:[#allocation1] sm:$0xff pattern:$0x73625140]
        %v3152 = vunpack.c.l.b16 %v3107
        %v3153 = vunpack.c.l.b16 %v3108
        %v3154 = vunpack.c.l.b16 %v3109
        %v3155 = vunpack.c.l.b16 %v3110
        %v3156 = vunpack.c.l.b16 %v3111
        %v3157 = vunpack.c.l.b16 %v3112
        %v3158 = vunpack.c.l.b16 %v3113
        %v3159 = vunpack.c.l.b16 %v3114
        %v3160 = vunpack.c.l.b16 %v3115
        %v3161 = vunpack.c.l.b16 %v3116
        %v3162 = vunpack.c.l.b16 %v3117
        %v3163 = vunpack.c.l.b16 %v3118
        %v3164 = vunpack.c.l.b16 %v3119
        %v3165 = vunpack.c.l.b16 %v3120
        %v3166 = vunpack.c.l.b16 %v3121
        %v3167 = vunpack.c.l.b16 %v3122
        %v3168 = vpack.c.b16 %v3153, %v3152
        %v3169 = vpack.c.b16 %v3155, %v3154
        %v3170 = vpack.c.b16 %v3157, %v3156
        %v3171 = vpack.c.b16 %v3159, %v3158
        %v3172 = vpack.c.b16 %v3161, %v3160
        %v3173 = vpack.c.b16 %v3163, %v3162
        %v3174 = vpack.c.b16 %v3165, %v3164
        %v3175 = vpack.c.b16 %v3167, %v3166
        %3184 = vmatpush.bf16.msra.mxu0 %v3175
        %3185 = vmatpush.bf16.msra.mxu0 %v3174
        %3186 = vmatpush.bf16.msra.mxu0 %v3173
        %3187 = vmatpush.bf16.msra.mxu0 %v3172
        %3188 = vmatpush.bf16.msra.mxu0 %v3171
        %3189 = vmatpush.bf16.msra.mxu0 %v3170
        %3190 = vmatpush.bf16.msra.mxu0 %v3169
        %3191 = vmatpush.bf16.msra.mxu0 %v3168
        %3192 = vmatmul.bf16.gmra.mxu0 %v3134
        %v3193 = vpop.f32.mrf.mxu0
        %v3194 = vadd.f32 0.0, %v3193
        %v3195 = vpop.f32.mrf.mxu0
        %v3196 = vadd.f32 0.0, %v3195
        %3197 = vdwg.mxu0
        %v3198 = vadd.f32 %v3016, %v3194
        %v3199 = vadd.f32 %v3017, %v3196
        %v3200 = vld [vmem:[%s2919] sm:$0x6]
        %v3201 = vld [vmem:[%s2919 + $0x4] sm:$0x6]
        %v3202 = vld [vmem:[%s2919 + $0x8] sm:$0x6]
        %v3203 = vld [vmem:[%s2919 + $0xc] sm:$0x6]
        %v3208 = vrot.slane %v3200, 2
        %v3209 = vrot.slane %v3201, 2
        %v3210 = vrot.slane %v3202, 2
        %v3211 = vrot.slane %v3203, 2
        %v3214 = vsel %vm308, %v3200, %v3208
        %v3216 = vsel %vm438, %v3200, %v3208
        %v3218 = vrot.slane %v3216, 2
        %v3221 = vsel %vm308, %v3201, %v3209
        %v3223 = vsel %vm438, %v3201, %v3209
        %v3225 = vrot.slane %v3223, 2
        %v3228 = vsel %vm308, %v3202, %v3210
        %v3230 = vsel %vm438, %v3202, %v3210
        %v3232 = vrot.slane %v3230, 2
        %v3235 = vsel %vm308, %v3203, %v3211
        %v3237 = vsel %vm438, %v3203, %v3211
        %v3239 = vrot.slane %v3237, 2
        %v3240 = vrot.slane %v3214, 7
        %v3241 = vrot.slane %v3240, 2
        %v3242 = vrot.slane %v3218, 7
        %v3243 = vsel %vm2378, %v3241, %v3242
        %v3244 = vrot.slane %v3221, 7
        %v3245 = vrot.slane %v3244, 2
        %v3246 = vrot.slane %v3225, 7
        %v3247 = vsel %vm2378, %v3245, %v3246
        %v3248 = vrot.slane %v3228, 7
        %v3249 = vrot.slane %v3248, 2
        %v3250 = vrot.slane %v3232, 7
        %v3251 = vsel %vm2378, %v3249, %v3250
        %v3252 = vrot.slane %v3235, 7
        %v3253 = vrot.slane %v3252, 2
        %v3254 = vrot.slane %v3239, 7
        %v3255 = vsel %vm2378, %v3253, %v3254
        %s3256 = scalar_lea.vmem %s3, 512
        %v3257 = vld [vmem:[%s3256] sm:$0xf]
        %v3258 = vld [vmem:[%s3256 + $0x4] sm:$0xf]
        %v3259 = vld [vmem:[%s3256 + $0x8] sm:$0xf]
        %v3260 = vld [vmem:[%s3256 + $0xc] sm:$0xf]
        %v3261 = vld [vmem:[%s3256 + $0x10] sm:$0xf]
        %v3262 = vld [vmem:[%s3256 + $0x14] sm:$0xf]
        %v3263 = vld [vmem:[%s3256 + $0x18] sm:$0xf]
        %v3264 = vld [vmem:[%s3256 + $0x1c] sm:$0xf]
        %v3265 = vld [vmem:[%s3256 + $0x20] sm:$0xf]
        %v3266 = vld [vmem:[%s3256 + $0x24] sm:$0xf]
        %v3267 = vld [vmem:[%s3256 + $0x28] sm:$0xf]
        %v3268 = vld [vmem:[%s3256 + $0x2c] sm:$0xf]
        %v3269 = vld [vmem:[%s3256 + $0x30] sm:$0xf]
        %v3270 = vld [vmem:[%s3256 + $0x34] sm:$0xf]
        %v3271 = vld [vmem:[%s3256 + $0x38] sm:$0xf]
        %v3272 = vld [vmem:[%s3256 + $0x3c] sm:$0xf]
        %3274 = vst [vmem:[#allocation1] ss:$4 sm:$0xff] %v3243
        %s3276 = scalar_lea.vmem [#allocation1], 1
        %3277 = vst [vmem:[%s3276] ss:$4 sm:$0xff] %v3247
        %s3279 = scalar_lea.vmem [#allocation1], 2
        %3280 = vst [vmem:[%s3279] ss:$4 sm:$0xff] %v3251
        %s3282 = scalar_lea.vmem [#allocation1], 3
        %3283 = vst [vmem:[%s3282] ss:$4 sm:$0xff] %v3255
        %v3284 = vld.sshfl [vmem:[#allocation1] sm:$0xff pattern:$0x73625140]
        %v3302 = vunpack.c.l.b16 %v3257
        %v3303 = vunpack.c.l.b16 %v3258
        %v3304 = vunpack.c.l.b16 %v3259
        %v3305 = vunpack.c.l.b16 %v3260
        %v3306 = vunpack.c.l.b16 %v3261
        %v3307 = vunpack.c.l.b16 %v3262
        %v3308 = vunpack.c.l.b16 %v3263
        %v3309 = vunpack.c.l.b16 %v3264
        %v3310 = vunpack.c.l.b16 %v3265
        %v3311 = vunpack.c.l.b16 %v3266
        %v3312 = vunpack.c.l.b16 %v3267
        %v3313 = vunpack.c.l.b16 %v3268
        %v3314 = vunpack.c.l.b16 %v3269
        %v3315 = vunpack.c.l.b16 %v3270
        %v3316 = vunpack.c.l.b16 %v3271
        %v3317 = vunpack.c.l.b16 %v3272
        %v3318 = vpack.c.b16 %v3303, %v3302
        %v3319 = vpack.c.b16 %v3305, %v3304
        %v3320 = vpack.c.b16 %v3307, %v3306
        %v3321 = vpack.c.b16 %v3309, %v3308
        %v3322 = vpack.c.b16 %v3311, %v3310
        %v3323 = vpack.c.b16 %v3313, %v3312
        %v3324 = vpack.c.b16 %v3315, %v3314
        %v3325 = vpack.c.b16 %v3317, %v3316
        %3334 = vmatpush.bf16.msra.mxu0 %v3325
        %3335 = vmatpush.bf16.msra.mxu0 %v3324
        %3336 = vmatpush.bf16.msra.mxu0 %v3323
        %3337 = vmatpush.bf16.msra.mxu0 %v3322
        %3338 = vmatpush.bf16.msra.mxu0 %v3321
        %3339 = vmatpush.bf16.msra.mxu0 %v3320
        %3340 = vmatpush.bf16.msra.mxu0 %v3319
        %3341 = vmatpush.bf16.msra.mxu0 %v3318
        %3342 = vmatmul.bf16.gmra.mxu0 %v3284
        %v3343 = vpop.f32.mrf.mxu0
        %v3344 = vadd.f32 0.0, %v3343
        %v3345 = vpop.f32.mrf.mxu0
        %v3346 = vadd.f32 0.0, %v3345
        %3347 = vdwg.mxu0
        %v3348 = vadd.f32 %v3198, %v3344
        %v3349 = vadd.f32 %v3199, %v3346
        %v3350 = vld [vmem:[%s4] sm:$0x1]
        %v3352 = vperm.slane %v3350, 0
        %v3354 = vadd.f32 %v3348, %v3352
        %v3355 = vadd.f32 %v3349, %v3352
        %v3356 = vadd.f32 %v3354, %v1991
        %v3357 = vadd.f32 %v3355, %v1992
        %v3358 = vmax.f32 %v3356, 0.0
        %v3359 = vmax.f32 %v3357, 0.0
        %v3360 = vld [vmem:[%s5] sm:$0x1]
        %v3362 = vperm.slane %v3360, 0
        %v3364 = vmul.f32 %v3358, %v3362
        %v3365 = vmul.f32 %v3359, %v3362
        %3366 = vadd.xlane.f32.xlu0 %v3364
        %v3367 = vpop.xlane.xlu0 %3366
        %3368 = vadd.xlane.f32.xlu0 %v3365
        %v3369 = vpop.xlane.xlu0 %3368
        %v3370 = vld [vmem:[#allocation3] sm:$0x1]
        %v3372 = vperm.slane %v3370, 0
        %v3374 = vadd.f32 %v3367, %v3372
        %v3375 = vadd.f32 %v3369, %v3372
        %3377 = vset.pattern.permute.xlu0 0
        %3378 = vperm.xlu0 %3377, %v3374
        %v3379 = vpop.permute.xlu0 %3378
        %3382 = vset.pattern.permute.xlu0 0
        %3383 = vperm.xlu0 %3382, %v3375
        %v3384 = vpop.permute.xlu0 %3383
        %v3386 = vadd.f32 %v3358, %v3379
        %v3387 = vadd.f32 %v3359, %v3384
        %3388 = vst [vmem:[%s273] sm:$0xff] %v3386
        %3389 = vst [vmem:[%s273 + $0x8] sm:$0xff] %v3387
        %s3390 = sand.u32 %s183, 1
        %s3391 = scalar_lea.sflag [#allocation5], %s3390
        %s3392 = sand.u32 %s183, 1
        %s3393 = smul.addr %s3392, 16
        %s3394 = scalar_lea.vmem [#allocation4], %s3393
        // Predicated region
        $region49: #{encoder_forward.3} parent=47 // pred_check
          %p3395 = pneg %p193
        $region50: #{encoder_forward.3} parent=47 // pred_check_branch
          %3397 = sbr.rel (%p3395) target = $region52
        $region51: #{encoder_forward.3} parent=47 // pred_region
          %3399 = vsyncadd %s3391, 0
          %s3400 = smul.addr %s23, 2
          %s3401 = smul.addr %s3400, 8
          %s3402 = scalar_lea.hbm %s7, %s3401
          %s3403 = sshll.u32 %s3394, 4
          %s3404 = int_to_ptr.vmem [resolvable:$true] %s3403
          %s3405 = sshll.u32 %s3402, 4
          %s3406 = int_to_ptr.hbm [resolvable:$true] %s3405
          %3411 = dma.vmem_to_hbm [thread:$0]  %s3404, 256, %s3406, %s3391, 128, 128, 8
        $region52: #{encoder_forward.3} parent=47 // pred_fallthru
          _
      $region48: #{encoder_forward.3} parent=5 // pred_fallthru
        _
      %p3412 = scmp.le.s32.totalorder 2, %s18
      // Predicated region
      $region53: #{encoder_forward.3} parent=5 // pred_check
        %p3413 = pneg %p3412
      $region54: #{encoder_forward.3} parent=5 // pred_check_branch
        %3415 = sbr.rel (%p3413) target = $region56
      $region55: #{encoder_forward.3} parent=5 // pred_region
        %s3416 = ssub.s32 %s18, 2
        // Predicated region
        $region57: #{encoder_forward.3} parent=55 // pred_check
          %p3417 = pneg %p199
        $region58: #{encoder_forward.3} parent=55 // pred_check_branch
          %3419 = sbr.rel (%p3417) target = $region60
        $region59: #{encoder_forward.3} parent=55 // pred_region
          %s3420 = sand.u32 %s184, 1
          %s3421 = scalar_lea.sflag [#allocation5], %s3420
          %s3422 = sand.u32 %s184, 1
          %s3423 = smul.addr %s3422, 16
          %s3424 = scalar_lea.vmem [#allocation4], %s3423
          %3426 = dma.done %s3421, 256
        $region60: #{encoder_forward.3} parent=55 // pred_fallthru
          _
      $region56: #{encoder_forward.3} parent=5 // pred_fallthru
        _
    $region6: #{encoder_forward.3} parent=1 // loop_footer
      %s22 = sadd.s32 1, %s18
    $region7: #{encoder_forward.3} parent=1 // loop_footer_branch
      %17 = sbr.rel target = $region3
    $region8: #{encoder_forward.3} parent=1 // loop_exit
      _
    %3427 = vsyncpa [#allocation5], 1
    %s3428 = scalar_lea.sflag [#allocation5], 1
    %3429 = vsyncpa %s3428, 1

</llo_original>
